<compile_context>
chip_gen: v6e
topology: v6e:2x2x1
jax: 0.10.0
libtpu: 0.0.40
codegen_flags: <defaults>
</compile_context>

<pallas_src>
import numpy as np

import jax
import jax.numpy as jnp
from jax.experimental import pallas as pl
from jax.experimental.pallas import tpu as pltpu

# ---------------- configuration (small, consistent with the module) ----------
B = 2            # batch
C_IN = 3         # RGB input
IMG = 16         # img_size = (16, 16)
PATCH = 4        # patch_size
GRID = IMG // PATCH          # 4
P = GRID * GRID              # 16 patches
N = P + 1                    # + 1 cls prefix token
D = 32                       # embed_dim
HEADS = 4
HD = D // HEADS              # 8
HID = 4 * D                  # MLP hidden (mlp_ratio = 4)
DEPTH = 2                    # transformer blocks
K = C_IN * PATCH * PATCH     # 48 (im2col columns)
EPS = 1e-6                   # timm ViT LayerNorm eps
NVEC = 9                     # packed per-block (1, D) vectors

# packed per-block vector rows (each one (1, D) row of blk_vecs)
_LN1_W, _LN1_B, _Q_B, _K_B, _V_B, _PROJ_B, _LN2_W, _LN2_B, _FC2_B = range(NVEC)
# packed misc vector rows (each one (1, D) row of misc)
_PATCH_B, _CLS, _NORM_W, _NORM_B = range(4)


def _gelu(x):
    # TODO(synk): PyTorch nn.GELU defaults to the exact erf form; using the tanh
    # approximation here (erf has no guaranteed Mosaic lowering).
    return jax.nn.gelu(x, approximate=True)


def _layernorm(x, w, b):
    mu = jnp.mean(x, axis=-1, keepdims=True)
    xc = x - mu
    var = jnp.mean(xc * xc, axis=-1, keepdims=True)
    return xc * jax.lax.rsqrt(var + EPS) * w + b


def _full_spec(shape):
    nd = len(shape)
    return pl.BlockSpec(shape, lambda b, nd=nd: (0,) * nd)


_CPARAMS = pltpu.CompilerParams(dimension_semantics=("parallel",))


# ---------------- single fused kernel: whole Encoder.forward -----------------
def _encoder_kernel(p_ref, shift_ref, scale_ref, pw_ref, pos_ref, misc_ref,
                    vec_ref, qkvw_ref, projw_ref, fc1w_ref, fc1b_ref, fc2w_ref,
                    o_ref, tok_ref, heads_ref):
    pos = pos_ref[...]                                                   # (N, D)
    misc = misc_ref[...]                                                 # (4, D)

    # --- 1. pixel norm folded into im2col columns + patch embedding ---
    patches = (p_ref[...] - shift_ref[...]) * scale_ref[...]             # (P, K)
    emb = jnp.dot(patches, pw_ref[...], preferred_element_type=jnp.float32)
    emb = emb + misc[_PATCH_B:_PATCH_B + 1, :]                           # (P, D)

    # --- 2. assemble tokens [cls | patches] + pos embed (no concatenate) ---
    tok_ref[0:1, :] = misc[_CLS:_CLS + 1, :] + pos[0:1, :]
    tok_ref[1:, :] = emb + pos[1:, :]
    x = tok_ref[...]                                                     # (N, D)

    att_scale = HD ** -0.5
    for d in range(DEPTH):                     # unrolled; weights stay in VMEM
        vec = vec_ref[d]                                                 # (NVEC, D)

        # ---- multi-head self-attention (pre-LN) ----
        h = _layernorm(x, vec[_LN1_W:_LN1_W + 1, :], vec[_LN1_B:_LN1_B + 1, :])
        qkv = jnp.dot(h, qkvw_ref[d], preferred_element_type=jnp.float32)  # (N, 3D)
        q_all = qkv[:, 0:D] + vec[_Q_B:_Q_B + 1, :]
        k_all = qkv[:, D:2 * D] + vec[_K_B:_K_B + 1, :]
        v_all = qkv[:, 2 * D:3 * D] + vec[_V_B:_V_B + 1, :]
        for hh in range(HEADS):
            s0 = hh * HD
            q = q_all[:, s0:s0 + HD]
            k = k_all[:, s0:s0 + HD]
            v = v_all[:, s0:s0 + HD]
            logits = jax.lax.dot_general(
                q, k, (((1,), (1,)), ((), ())),
                preferred_element_type=jnp.float32) * att_scale           # (N, N)
            m = jnp.max(logits, axis=-1, keepdims=True)
            e = jnp.exp(logits - m)
            ssum = jnp.sum(e, axis=-1, keepdims=True)
            pattn = e * pl.reciprocal(ssum, approx=True)
            heads_ref[:, s0:s0 + HD] = jnp.dot(
                pattn, v, preferred_element_type=jnp.float32)             # (N, HD)
        # one K=D projection matmul instead of HEADS contraction-depth-8 matmuls
        attn = jnp.dot(heads_ref[...], projw_ref[d],
                       preferred_element_type=jnp.float32)
        x = x + attn + vec[_PROJ_B:_PROJ_B + 1, :]

        # ---- MLP (pre-LN) ----
        h = _layernorm(x, vec[_LN2_W:_LN2_W + 1, :], vec[_LN2_B:_LN2_B + 1, :])
        h = jnp.dot(h, fc1w_ref[d],
                    preferred_element_type=jnp.float32) + fc1b_ref[d]
        h = _gelu(h)
        h = jnp.dot(h, fc2w_ref[d], preferred_element_type=jnp.float32)
        x = x + h + vec[_FC2_B:_FC2_B + 1, :]

    # --- 3. final LayerNorm on patch tokens only (cls prefix dropped here) ---
    o_ref[...] = _layernorm(x[1:, :],
                            misc[_NORM_W:_NORM_W + 1, :],
                            misc[_NORM_B:_NORM_B + 1, :])


# ---------------- glue: full Encoder.forward ---------------------------------
def _im2col(x):
    # NCHW -> (B, P, K) with k = c*PATCH*PATCH + kh*PATCH + kw (conv-equivalent)
    return (x.reshape(B, C_IN, GRID, PATCH, GRID, PATCH)
             .transpose(0, 2, 4, 1, 3, 5)
             .reshape(B, P, K))


@jax.jit
def encoder_forward(x, pk):
    patches = _im2col(x)
    return pl.pallas_call(
        _encoder_kernel,
        out_shape=jax.ShapeDtypeStruct((B, P, D), jnp.float32),
        grid=(B,),
        in_specs=[
            pl.BlockSpec((None, P, K), lambda b: (b, 0, 0)),   # im2col patches
            _full_spec((1, K)),                                # shift
            _full_spec((1, K)),                                # scale
            _full_spec((K, D)),                                # patch_w
            _full_spec((N, D)),                                # pos embed
            _full_spec((4, D)),                                # misc vectors
            _full_spec((DEPTH, NVEC, D)),                      # per-block vectors
            _full_spec((DEPTH, D, 3 * D)),                     # qkv_w
            _full_spec((DEPTH, D, D)),                         # proj_w
            _full_spec((DEPTH, D, HID)),                       # fc1_w
            _full_spec((DEPTH, 1, HID)),                       # fc1_b
            _full_spec((DEPTH, HID, D)),                       # fc2_w
        ],
        out_specs=pl.BlockSpec((None, P, D), lambda b: (b, 0, 0)),
        scratch_shapes=[pltpu.VMEM((N, D), jnp.float32),       # token buffer
                        pltpu.VMEM((N, D), jnp.float32)],      # per-head outputs
        compiler_params=_CPARAMS,
    )(patches, pk['shift'], pk['scale'], pk['patch_w'], pk['pos'], pk['misc'],
      pk['blk_vecs'], pk['qkv_w'], pk['proj_w'], pk['fc1_w'], pk['fc1_b'],
      pk['fc2_w'])


# ---------------- parameter packing (host-side, done once) -------------------
def pack_params(p):
    # fold per-channel (x - mean) / std into per-im2col-column shift/scale
    shift = jnp.repeat(p['pixel_mean'], PATCH * PATCH).reshape(1, K)
    scale = (1.0 / jnp.repeat(p['pixel_std'], PATCH * PATCH)).reshape(1, K)
    misc = jnp.concatenate([p['patch_b'], p['cls'],
                            p['norm_w'], p['norm_b']], axis=0)            # (4, D)
    blk_vecs = jnp.stack([
        jnp.concatenate([
            blk['ln1_w'], blk['ln1_b'],
            blk['qkv_b'][:, 0:D], blk['qkv_b'][:, D:2 * D], blk['qkv_b'][:, 2 * D:],
            blk['proj_b'], blk['ln2_w'], blk['ln2_b'], blk['fc2_b']], axis=0)
        for blk in p['blocks']])                                          # (DEPTH, 9, D)

    def stack(name):
        return jnp.stack([blk[name] for blk in p['blocks']])

    return {
        'shift': shift, 'scale': scale,
        'patch_w': p['patch_w'], 'pos': p['pos'], 'misc': misc,
        'blk_vecs': blk_vecs,
        'qkv_w': stack('qkv_w'), 'proj_w': stack('proj_w'),
        'fc1_w': stack('fc1_w'), 'fc1_b': stack('fc1_b'),
        'fc2_w': stack('fc2_w'),
    }


# ---------------- pure-JAX reference (for validation) ------------------------
def ref_forward(x, params):
    mean = params['pixel_mean'].reshape(1, C_IN, 1, 1)
    std = params['pixel_std'].reshape(1, C_IN, 1, 1)
    x = (x - mean) / std
    p = _im2col(x)
    emb = p @ params['patch_w'] + params['patch_b']
    cls = jnp.broadcast_to(params['cls'][None], (B, 1, D))
    tok = jnp.concatenate([cls, emb], axis=1) + params['pos'][None]
    for blk in params['blocks']:
        h = _layernorm(tok, blk['ln1_w'], blk['ln1_b'])
        qkv = h @ blk['qkv_w'] + blk['qkv_b']
        q, k, v = qkv[..., :D], qkv[..., D:2 * D], qkv[..., 2 * D:]
        q = q.reshape(B, N, HEADS, HD).transpose(0, 2, 1, 3)
        k = k.reshape(B, N, HEADS, HD).transpose(0, 2, 1, 3)
        v = v.reshape(B, N, HEADS, HD).transpose(0, 2, 1, 3)
        att = jax.nn.softmax((q @ k.transpose(0, 1, 3, 2)) * HD ** -0.5, axis=-1)
        o = (att @ v).transpose(0, 2, 1, 3).reshape(B, N, D)
        tok = tok + o @ blk['proj_w'] + blk['proj_b']
        h = _layernorm(tok, blk['ln2_w'], blk['ln2_b'])
        h = _gelu(h @ blk['fc1_w'] + blk['fc1_b'])
        tok = tok + h @ blk['fc2_w'] + blk['fc2_b']
    tok = _layernorm(tok, params['norm_w'], params['norm_b'])
    return tok[:, 1:]


# ---------------- deterministic synthetic parameters -------------------------
def init_params(key):
    keys = iter(jax.random.split(key, 4 + DEPTH * 8))
    s = 0.02
    f32 = jnp.float32

    def rnd(shape):
        return s * jax.random.normal(next(keys), shape, f32)

    params = {
        # default_cfg ImageNet mean/std buffers
        'pixel_mean': jnp.array([0.485, 0.456, 0.406], f32),
        'pixel_std': jnp.array([0.229, 0.224, 0.225], f32),
        'patch_w': rnd((K, D)),          # conv weight, flattened, (in, out)
        'patch_b': rnd((1, D)),
        'cls': rnd((1, D)),
        'pos': rnd((N, D)),
        'norm_w': jnp.ones((1, D), f32),
        'norm_b': jnp.zeros((1, D), f32),
        'blocks': [],
    }
    for _ in range(DEPTH):
        params['blocks'].append({
            'ln1_w': jnp.ones((1, D), f32), 'ln1_b': jnp.zeros((1, D), f32),
            'qkv_w': rnd((D, 3 * D)), 'qkv_b': rnd((1, 3 * D)),
            'proj_w': rnd((D, D)), 'proj_b': rnd((1, D)),
            'ln2_w': jnp.ones((1, D), f32), 'ln2_b': jnp.zeros((1, D), f32),
            'fc1_w': rnd((D, HID)), 'fc1_b': rnd((1, HID)),
            'fc2_w': rnd((HID, D)), 'fc2_b': rnd((1, D)),
        })
    return params


# TODO(synk): checkpoint loading, timm model construction, rel-pos / pos-embed
# resampling happen only in __init__ (not the forward pass) and are not ported.

if __name__ == "__main__":
    root = jax.random.PRNGKey(0)
    kx, kp = jax.random.split(root)
    params = init_params(kp)
    packed = pack_params(params)
    x = jax.random.uniform(kx, (B, C_IN, IMG, IMG), jnp.float32)

    out = jax.block_until_ready(encoder_forward(x, packed))

    assert out.shape == (B, P, D), out.shape
    ref = ref_forward(x, params)
    np.testing.assert_allclose(np.asarray(out), np.asarray(ref),
                               rtol=1e-2, atol=1e-2)
    print("KERNEL_OK")
</pallas_src>

<mosaic_0001>
module attributes {stable_mosaic.version = 11 : i64} {
  func.func @_encoder_kernel(%arg0: i32, %arg1: memref<1x16x48xf32, #tpu.memory_space<vmem>>, %arg2: memref<1x48xf32, #tpu.memory_space<vmem>>, %arg3: memref<1x48xf32, #tpu.memory_space<vmem>>, %arg4: memref<48x32xf32, #tpu.memory_space<vmem>>, %arg5: memref<17x32xf32, #tpu.memory_space<vmem>>, %arg6: memref<4x32xf32, #tpu.memory_space<vmem>>, %arg7: memref<2x9x32xf32, #tpu.memory_space<vmem>>, %arg8: memref<2x32x96xf32, #tpu.memory_space<vmem>>, %arg9: memref<2x32x32xf32, #tpu.memory_space<vmem>>, %arg10: memref<2x32x128xf32, #tpu.memory_space<vmem>>, %arg11: memref<2x1x128xf32, #tpu.memory_space<vmem>>, %arg12: memref<2x128x32xf32, #tpu.memory_space<vmem>>, %arg13: memref<1x16x32xf32, #tpu.memory_space<vmem>>, %arg14: memref<17x32xf32, #tpu.memory_space<vmem>>, %arg15: memref<17x32xf32, #tpu.memory_space<vmem>>) attributes {dimension_semantics = [#tpu.dimension_semantics<parallel>], iteration_bounds = array<i64: 2>, scalar_prefetch = 0 : i64, scratch_operands = 2 : i64, tpu.core_type = #tpu.core_type<tc>, window_params = [{transform_indices = @transform_0, window_bounds = array<i64: 1, 16, 48>}, {pipeline_mode = #tpu.pipeline_mode<synchronous>, transform_indices = @transform_1, window_bounds = array<i64: 1, 48>}, {pipeline_mode = #tpu.pipeline_mode<synchronous>, transform_indices = @transform_2, window_bounds = array<i64: 1, 48>}, {pipeline_mode = #tpu.pipeline_mode<synchronous>, transform_indices = @transform_3, window_bounds = array<i64: 48, 32>}, {pipeline_mode = #tpu.pipeline_mode<synchronous>, transform_indices = @transform_4, window_bounds = array<i64: 17, 32>}, {pipeline_mode = #tpu.pipeline_mode<synchronous>, transform_indices = @transform_5, window_bounds = array<i64: 4, 32>}, {pipeline_mode = #tpu.pipeline_mode<synchronous>, transform_indices = @transform_6, window_bounds = array<i64: 2, 9, 32>}, {pipeline_mode = #tpu.pipeline_mode<synchronous>, transform_indices = @transform_7, window_bounds = array<i64: 2, 32, 96>}, {pipeline_mode = #tpu.pipeline_mode<synchronous>, transform_indices = @transform_8, window_bounds = array<i64: 2, 32, 32>}, {pipeline_mode = #tpu.pipeline_mode<synchronous>, transform_indices = @transform_9, window_bounds = array<i64: 2, 32, 128>}, {pipeline_mode = #tpu.pipeline_mode<synchronous>, transform_indices = @transform_10, window_bounds = array<i64: 2, 1, 128>}, {pipeline_mode = #tpu.pipeline_mode<synchronous>, transform_indices = @transform_11, window_bounds = array<i64: 2, 128, 32>}, {transform_indices = @transform_12, window_bounds = array<i64: 1, 16, 32>}]} {
    %c0 = arith.constant 0 : index
    %c0_0 = arith.constant 0 : index
    %0 = vector.load %arg5[%c0, %c0_0] : memref<17x32xf32, #tpu.memory_space<vmem>>, vector<17x32xf32>
    %c0_1 = arith.constant 0 : index
    %c0_2 = arith.constant 0 : index
    %1 = vector.load %arg6[%c0_1, %c0_2] : memref<4x32xf32, #tpu.memory_space<vmem>>, vector<4x32xf32>
    %c0_3 = arith.constant 0 : index
    %c0_4 = arith.constant 0 : index
    %c0_5 = arith.constant 0 : index
    %2 = vector.load %arg1[%c0_3, %c0_4, %c0_5] : memref<1x16x48xf32, #tpu.memory_space<vmem>>, vector<1x16x48xf32>
    %3 = vector.shape_cast %2 : vector<1x16x48xf32> to vector<16x48xf32>
    %c0_6 = arith.constant 0 : index
    %c0_7 = arith.constant 0 : index
    %4 = vector.load %arg2[%c0_6, %c0_7] : memref<1x48xf32, #tpu.memory_space<vmem>>, vector<1x48xf32>
    %5 = vector.broadcast %4 : vector<1x48xf32> to vector<16x48xf32>
    %6 = arith.subf %3, %5 : vector<16x48xf32>
    %c0_8 = arith.constant 0 : index
    %c0_9 = arith.constant 0 : index
    %7 = vector.load %arg3[%c0_8, %c0_9] : memref<1x48xf32, #tpu.memory_space<vmem>>, vector<1x48xf32>
    %8 = vector.broadcast %7 : vector<1x48xf32> to vector<16x48xf32>
    %9 = arith.mulf %6, %8 : vector<16x48xf32>
    %c0_10 = arith.constant 0 : index
    %c0_11 = arith.constant 0 : index
    %10 = vector.load %arg4[%c0_10, %c0_11] : memref<48x32xf32, #tpu.memory_space<vmem>>, vector<48x32xf32>
    %cst = arith.constant dense<0.000000e+00> : vector<16x32xf32>
    %11 = tpu.matmul %9, %10, %cst {dimension_numbers = #tpu.dot_dimension_numbers<[1], [0], [0], [1], [0, 0, 1, 1], [], []>} : vector<16x48xf32>, vector<48x32xf32>, vector<16x32xf32> -> vector<16x32xf32>
    %12 = vector.extract_strided_slice %1 {offsets = [0, 0], sizes = [1, 32], strides = [1, 1]} : vector<4x32xf32> to vector<1x32xf32>
    %13 = vector.broadcast %12 : vector<1x32xf32> to vector<16x32xf32>
    %14 = arith.addf %11, %13 : vector<16x32xf32>
    %15 = vector.extract_strided_slice %1 {offsets = [1, 0], sizes = [1, 32], strides = [1, 1]} : vector<4x32xf32> to vector<1x32xf32>
    %16 = vector.extract_strided_slice %0 {offsets = [0, 0], sizes = [1, 32], strides = [1, 1]} : vector<17x32xf32> to vector<1x32xf32>
    %17 = arith.addf %15, %16 : vector<1x32xf32>
    %c0_12 = arith.constant 0 : index
    %c0_13 = arith.constant 0 : index
    %18 = vector.load %arg14[%c0_12, %c0_13] : memref<17x32xf32, #tpu.memory_space<vmem>>, vector<1x32xf32>
    tpu.vector_store %arg14[%c0_12, %c0_13], %17 {strides = array<i32>} : memref<17x32xf32, #tpu.memory_space<vmem>>, vector<1x32xf32>,
    %19 = vector.extract_strided_slice %0 {offsets = [1, 0], sizes = [16, 32], strides = [1, 1]} : vector<17x32xf32> to vector<16x32xf32>
    %20 = arith.addf %14, %19 : vector<16x32xf32>
    %c1 = arith.constant 1 : index
    %c0_14 = arith.constant 0 : index
    %21 = vector.load %arg14[%c1, %c0_14] : memref<17x32xf32, #tpu.memory_space<vmem>>, vector<16x32xf32>
    tpu.vector_store %arg14[%c1, %c0_14], %20 {strides = array<i32>} : memref<17x32xf32, #tpu.memory_space<vmem>>, vector<16x32xf32>,
    %c0_15 = arith.constant 0 : index
    %c0_16 = arith.constant 0 : index
    %22 = vector.load %arg14[%c0_15, %c0_16] : memref<17x32xf32, #tpu.memory_space<vmem>>, vector<17x32xf32>
    %c0_17 = arith.constant 0 : index
    %c0_18 = arith.constant 0 : index
    %c0_19 = arith.constant 0 : index
    %23 = vector.load %arg7[%c0_17, %c0_18, %c0_19] : memref<2x9x32xf32, #tpu.memory_space<vmem>>, vector<1x9x32xf32>
    %24 = vector.shape_cast %23 : vector<1x9x32xf32> to vector<9x32xf32>
    %25 = vector.extract_strided_slice %24 {offsets = [0, 0], sizes = [1, 32], strides = [1, 1]} : vector<9x32xf32> to vector<1x32xf32>
    %26 = vector.extract_strided_slice %24 {offsets = [1, 0], sizes = [1, 32], strides = [1, 1]} : vector<9x32xf32> to vector<1x32xf32>
    %cst_20 = arith.constant dense<0.000000e+00> : vector<17xf32>
    %27 = vector.multi_reduction <add>, %22, %cst_20 [1] : vector<17x32xf32> to vector<17xf32>
    %28 = vector.shape_cast %27 : vector<17xf32> to vector<17x1xf32>
    %cst_21 = arith.constant 3.200000e+01 : f32
    %29 = vector.broadcast %cst_21 : f32 to vector<17x1xf32>
    %30 = arith.divf %28, %29 : vector<17x1xf32>
    %31 = vector.broadcast %30 : vector<17x1xf32> to vector<17x32xf32>
    %32 = arith.subf %22, %31 : vector<17x32xf32>
    %33 = arith.mulf %32, %32 : vector<17x32xf32>
    %cst_22 = arith.constant dense<0.000000e+00> : vector<17xf32>
    %34 = vector.multi_reduction <add>, %33, %cst_22 [1] : vector<17x32xf32> to vector<17xf32>
    %35 = vector.shape_cast %34 : vector<17xf32> to vector<17x1xf32>
    %cst_23 = arith.constant 3.200000e+01 : f32
    %36 = vector.broadcast %cst_23 : f32 to vector<17x1xf32>
    %37 = arith.divf %35, %36 : vector<17x1xf32>
    %cst_24 = arith.constant 9.99999997E-7 : f32
    %38 = vector.broadcast %cst_24 : f32 to vector<17x1xf32>
    %39 = arith.addf %37, %38 : vector<17x1xf32>
    %40 = math.rsqrt %39 : vector<17x1xf32>
    %41 = vector.broadcast %40 : vector<17x1xf32> to vector<17x32xf32>
    %42 = arith.mulf %32, %41 : vector<17x32xf32>
    %43 = vector.broadcast %25 : vector<1x32xf32> to vector<17x32xf32>
    %44 = arith.mulf %42, %43 : vector<17x32xf32>
    %45 = vector.broadcast %26 : vector<1x32xf32> to vector<17x32xf32>
    %46 = arith.addf %44, %45 : vector<17x32xf32>
    %c0_25 = arith.constant 0 : index
    %c0_26 = arith.constant 0 : index
    %c0_27 = arith.constant 0 : index
    %47 = vector.load %arg8[%c0_25, %c0_26, %c0_27] : memref<2x32x96xf32, #tpu.memory_space<vmem>>, vector<1x32x96xf32>
    %48 = vector.shape_cast %47 : vector<1x32x96xf32> to vector<32x96xf32>
    %cst_28 = arith.constant dense<0.000000e+00> : vector<17x96xf32>
    %49 = tpu.matmul %46, %48, %cst_28 {dimension_numbers = #tpu.dot_dimension_numbers<[1], [0], [0], [1], [0, 0, 1, 1], [], []>} : vector<17x32xf32>, vector<32x96xf32>, vector<17x96xf32> -> vector<17x96xf32>
    %50 = vector.extract_strided_slice %49 {offsets = [0, 0], sizes = [17, 32], strides = [1, 1]} : vector<17x96xf32> to vector<17x32xf32>
    %51 = vector.extract_strided_slice %24 {offsets = [2, 0], sizes = [1, 32], strides = [1, 1]} : vector<9x32xf32> to vector<1x32xf32>
    %52 = vector.broadcast %51 : vector<1x32xf32> to vector<17x32xf32>
    %53 = arith.addf %50, %52 : vector<17x32xf32>
    %54 = vector.extract_strided_slice %49 {offsets = [0, 32], sizes = [17, 32], strides = [1, 1]} : vector<17x96xf32> to vector<17x32xf32>
    %55 = vector.extract_strided_slice %24 {offsets = [3, 0], sizes = [1, 32], strides = [1, 1]} : vector<9x32xf32> to vector<1x32xf32>
    %56 = vector.broadcast %55 : vector<1x32xf32> to vector<17x32xf32>
    %57 = arith.addf %54, %56 : vector<17x32xf32>
    %58 = vector.extract_strided_slice %49 {offsets = [0, 64], sizes = [17, 32], strides = [1, 1]} : vector<17x96xf32> to vector<17x32xf32>
    %59 = vector.extract_strided_slice %24 {offsets = [4, 0], sizes = [1, 32], strides = [1, 1]} : vector<9x32xf32> to vector<1x32xf32>
    %60 = vector.broadcast %59 : vector<1x32xf32> to vector<17x32xf32>
    %61 = arith.addf %58, %60 : vector<17x32xf32>
    %62 = vector.extract_strided_slice %53 {offsets = [0, 0], sizes = [17, 8], strides = [1, 1]} : vector<17x32xf32> to vector<17x8xf32>
    %63 = vector.extract_strided_slice %57 {offsets = [0, 0], sizes = [17, 8], strides = [1, 1]} : vector<17x32xf32> to vector<17x8xf32>
    %64 = vector.extract_strided_slice %61 {offsets = [0, 0], sizes = [17, 8], strides = [1, 1]} : vector<17x32xf32> to vector<17x8xf32>
    %cst_29 = arith.constant dense<0.000000e+00> : vector<17x17xf32>
    %65 = tpu.matmul %62, %63, %cst_29 {dimension_numbers = #tpu.dot_dimension_numbers<[1], [1], [0], [0], [0, 0, 1, 0], [], []>} : vector<17x8xf32>, vector<17x8xf32>, vector<17x17xf32> -> vector<17x17xf32>
    %cst_30 = arith.constant 0.353553385 : f32
    %66 = vector.broadcast %cst_30 : f32 to vector<17x17xf32>
    %67 = arith.mulf %65, %66 : vector<17x17xf32>
    %cst_31 = arith.constant dense<0xFF800000> : vector<17xf32>
    %68 = vector.multi_reduction <maximumf>, %67, %cst_31 [1] : vector<17x17xf32> to vector<17xf32>
    %69 = vector.shape_cast %68 : vector<17xf32> to vector<17x1xf32>
    %70 = vector.broadcast %69 : vector<17x1xf32> to vector<17x17xf32>
    %71 = arith.subf %67, %70 : vector<17x17xf32>
    %72 = math.exp %71 : vector<17x17xf32>
    %cst_32 = arith.constant dense<0.000000e+00> : vector<17xf32>
    %73 = vector.multi_reduction <add>, %72, %cst_32 [1] : vector<17x17xf32> to vector<17xf32>
    %74 = vector.shape_cast %73 : vector<17xf32> to vector<17x1xf32>
    %75 = tpu.reciprocal %74 {approx = true} : vector<17x1xf32> -> vector<17x1xf32>
    %76 = vector.broadcast %75 : vector<17x1xf32> to vector<17x17xf32>
    %77 = arith.mulf %72, %76 : vector<17x17xf32>
    %cst_33 = arith.constant dense<0.000000e+00> : vector<17x8xf32>
    %78 = tpu.matmul %77, %64, %cst_33 {dimension_numbers = #tpu.dot_dimension_numbers<[1], [0], [0], [1], [0, 0, 1, 1], [], []>} : vector<17x17xf32>, vector<17x8xf32>, vector<17x8xf32> -> vector<17x8xf32>
    %c0_34 = arith.constant 0 : index
    %c0_35 = arith.constant 0 : index
    %79 = vector.load %arg15[%c0_34, %c0_35] : memref<17x32xf32, #tpu.memory_space<vmem>>, vector<17x8xf32>
    tpu.vector_store %arg15[%c0_34, %c0_35], %78 {strides = array<i32>} : memref<17x32xf32, #tpu.memory_space<vmem>>, vector<17x8xf32>,
    %80 = vector.extract_strided_slice %53 {offsets = [0, 8], sizes = [17, 8], strides = [1, 1]} : vector<17x32xf32> to vector<17x8xf32>
    %81 = vector.extract_strided_slice %57 {offsets = [0, 8], sizes = [17, 8], strides = [1, 1]} : vector<17x32xf32> to vector<17x8xf32>
    %82 = vector.extract_strided_slice %61 {offsets = [0, 8], sizes = [17, 8], strides = [1, 1]} : vector<17x32xf32> to vector<17x8xf32>
    %cst_36 = arith.constant dense<0.000000e+00> : vector<17x17xf32>
    %83 = tpu.matmul %80, %81, %cst_36 {dimension_numbers = #tpu.dot_dimension_numbers<[1], [1], [0], [0], [0, 0, 1, 0], [], []>} : vector<17x8xf32>, vector<17x8xf32>, vector<17x17xf32> -> vector<17x17xf32>
    %cst_37 = arith.constant 0.353553385 : f32
    %84 = vector.broadcast %cst_37 : f32 to vector<17x17xf32>
    %85 = arith.mulf %83, %84 : vector<17x17xf32>
    %cst_38 = arith.constant dense<0xFF800000> : vector<17xf32>
    %86 = vector.multi_reduction <maximumf>, %85, %cst_38 [1] : vector<17x17xf32> to vector<17xf32>
    %87 = vector.shape_cast %86 : vector<17xf32> to vector<17x1xf32>
    %88 = vector.broadcast %87 : vector<17x1xf32> to vector<17x17xf32>
    %89 = arith.subf %85, %88 : vector<17x17xf32>
    %90 = math.exp %89 : vector<17x17xf32>
    %cst_39 = arith.constant dense<0.000000e+00> : vector<17xf32>
    %91 = vector.multi_reduction <add>, %90, %cst_39 [1] : vector<17x17xf32> to vector<17xf32>
    %92 = vector.shape_cast %91 : vector<17xf32> to vector<17x1xf32>
    %93 = tpu.reciprocal %92 {approx = true} : vector<17x1xf32> -> vector<17x1xf32>
    %94 = vector.broadcast %93 : vector<17x1xf32> to vector<17x17xf32>
    %95 = arith.mulf %90, %94 : vector<17x17xf32>
    %cst_40 = arith.constant dense<0.000000e+00> : vector<17x8xf32>
    %96 = tpu.matmul %95, %82, %cst_40 {dimension_numbers = #tpu.dot_dimension_numbers<[1], [0], [0], [1], [0, 0, 1, 1], [], []>} : vector<17x17xf32>, vector<17x8xf32>, vector<17x8xf32> -> vector<17x8xf32>
    %c0_41 = arith.constant 0 : index
    %c8 = arith.constant 8 : index
    %97 = vector.load %arg15[%c0_41, %c8] : memref<17x32xf32, #tpu.memory_space<vmem>>, vector<17x8xf32>
    tpu.vector_store %arg15[%c0_41, %c8], %96 {strides = array<i32>} : memref<17x32xf32, #tpu.memory_space<vmem>>, vector<17x8xf32>,
    %98 = vector.extract_strided_slice %53 {offsets = [0, 16], sizes = [17, 8], strides = [1, 1]} : vector<17x32xf32> to vector<17x8xf32>
    %99 = vector.extract_strided_slice %57 {offsets = [0, 16], sizes = [17, 8], strides = [1, 1]} : vector<17x32xf32> to vector<17x8xf32>
    %100 = vector.extract_strided_slice %61 {offsets = [0, 16], sizes = [17, 8], strides = [1, 1]} : vector<17x32xf32> to vector<17x8xf32>
    %cst_42 = arith.constant dense<0.000000e+00> : vector<17x17xf32>
    %101 = tpu.matmul %98, %99, %cst_42 {dimension_numbers = #tpu.dot_dimension_numbers<[1], [1], [0], [0], [0, 0, 1, 0], [], []>} : vector<17x8xf32>, vector<17x8xf32>, vector<17x17xf32> -> vector<17x17xf32>
    %cst_43 = arith.constant 0.353553385 : f32
    %102 = vector.broadcast %cst_43 : f32 to vector<17x17xf32>
    %103 = arith.mulf %101, %102 : vector<17x17xf32>
    %cst_44 = arith.constant dense<0xFF800000> : vector<17xf32>
    %104 = vector.multi_reduction <maximumf>, %103, %cst_44 [1] : vector<17x17xf32> to vector<17xf32>
    %105 = vector.shape_cast %104 : vector<17xf32> to vector<17x1xf32>
    %106 = vector.broadcast %105 : vector<17x1xf32> to vector<17x17xf32>
    %107 = arith.subf %103, %106 : vector<17x17xf32>
    %108 = math.exp %107 : vector<17x17xf32>
    %cst_45 = arith.constant dense<0.000000e+00> : vector<17xf32>
    %109 = vector.multi_reduction <add>, %108, %cst_45 [1] : vector<17x17xf32> to vector<17xf32>
    %110 = vector.shape_cast %109 : vector<17xf32> to vector<17x1xf32>
    %111 = tpu.reciprocal %110 {approx = true} : vector<17x1xf32> -> vector<17x1xf32>
    %112 = vector.broadcast %111 : vector<17x1xf32> to vector<17x17xf32>
    %113 = arith.mulf %108, %112 : vector<17x17xf32>
    %cst_46 = arith.constant dense<0.000000e+00> : vector<17x8xf32>
    %114 = tpu.matmul %113, %100, %cst_46 {dimension_numbers = #tpu.dot_dimension_numbers<[1], [0], [0], [1], [0, 0, 1, 1], [], []>} : vector<17x17xf32>, vector<17x8xf32>, vector<17x8xf32> -> vector<17x8xf32>
    %c0_47 = arith.constant 0 : index
    %c16 = arith.constant 16 : index
    %115 = vector.load %arg15[%c0_47, %c16] : memref<17x32xf32, #tpu.memory_space<vmem>>, vector<17x8xf32>
    tpu.vector_store %arg15[%c0_47, %c16], %114 {strides = array<i32>} : memref<17x32xf32, #tpu.memory_space<vmem>>, vector<17x8xf32>,
    %116 = vector.extract_strided_slice %53 {offsets = [0, 24], sizes = [17, 8], strides = [1, 1]} : vector<17x32xf32> to vector<17x8xf32>
    %117 = vector.extract_strided_slice %57 {offsets = [0, 24], sizes = [17, 8], strides = [1, 1]} : vector<17x32xf32> to vector<17x8xf32>
    %118 = vector.extract_strided_slice %61 {offsets = [0, 24], sizes = [17, 8], strides = [1, 1]} : vector<17x32xf32> to vector<17x8xf32>
    %cst_48 = arith.constant dense<0.000000e+00> : vector<17x17xf32>
    %119 = tpu.matmul %116, %117, %cst_48 {dimension_numbers = #tpu.dot_dimension_numbers<[1], [1], [0], [0], [0, 0, 1, 0], [], []>} : vector<17x8xf32>, vector<17x8xf32>, vector<17x17xf32> -> vector<17x17xf32>
    %cst_49 = arith.constant 0.353553385 : f32
    %120 = vector.broadcast %cst_49 : f32 to vector<17x17xf32>
    %121 = arith.mulf %119, %120 : vector<17x17xf32>
    %cst_50 = arith.constant dense<0xFF800000> : vector<17xf32>
    %122 = vector.multi_reduction <maximumf>, %121, %cst_50 [1] : vector<17x17xf32> to vector<17xf32>
    %123 = vector.shape_cast %122 : vector<17xf32> to vector<17x1xf32>
    %124 = vector.broadcast %123 : vector<17x1xf32> to vector<17x17xf32>
    %125 = arith.subf %121, %124 : vector<17x17xf32>
    %126 = math.exp %125 : vector<17x17xf32>
    %cst_51 = arith.constant dense<0.000000e+00> : vector<17xf32>
    %127 = vector.multi_reduction <add>, %126, %cst_51 [1] : vector<17x17xf32> to vector<17xf32>
    %128 = vector.shape_cast %127 : vector<17xf32> to vector<17x1xf32>
    %129 = tpu.reciprocal %128 {approx = true} : vector<17x1xf32> -> vector<17x1xf32>
    %130 = vector.broadcast %129 : vector<17x1xf32> to vector<17x17xf32>
    %131 = arith.mulf %126, %130 : vector<17x17xf32>
    %cst_52 = arith.constant dense<0.000000e+00> : vector<17x8xf32>
    %132 = tpu.matmul %131, %118, %cst_52 {dimension_numbers = #tpu.dot_dimension_numbers<[1], [0], [0], [1], [0, 0, 1, 1], [], []>} : vector<17x17xf32>, vector<17x8xf32>, vector<17x8xf32> -> vector<17x8xf32>
    %c0_53 = arith.constant 0 : index
    %c24 = arith.constant 24 : index
    %133 = vector.load %arg15[%c0_53, %c24] : memref<17x32xf32, #tpu.memory_space<vmem>>, vector<17x8xf32>
    tpu.vector_store %arg15[%c0_53, %c24], %132 {strides = array<i32>} : memref<17x32xf32, #tpu.memory_space<vmem>>, vector<17x8xf32>,
    %c0_54 = arith.constant 0 : index
    %c0_55 = arith.constant 0 : index
    %134 = vector.load %arg15[%c0_54, %c0_55] : memref<17x32xf32, #tpu.memory_space<vmem>>, vector<17x32xf32>
    %c0_56 = arith.constant 0 : index
    %c0_57 = arith.constant 0 : index
    %c0_58 = arith.constant 0 : index
    %135 = vector.load %arg9[%c0_56, %c0_57, %c0_58] : memref<2x32x32xf32, #tpu.memory_space<vmem>>, vector<1x32x32xf32>
    %136 = vector.shape_cast %135 : vector<1x32x32xf32> to vector<32x32xf32>
    %cst_59 = arith.constant dense<0.000000e+00> : vector<17x32xf32>
    %137 = tpu.matmul %134, %136, %cst_59 {dimension_numbers = #tpu.dot_dimension_numbers<[1], [0], [0], [1], [0, 0, 1, 1], [], []>} : vector<17x32xf32>, vector<32x32xf32>, vector<17x32xf32> -> vector<17x32xf32>
    %138 = arith.addf %22, %137 : vector<17x32xf32>
    %139 = vector.extract_strided_slice %24 {offsets = [5, 0], sizes = [1, 32], strides = [1, 1]} : vector<9x32xf32> to vector<1x32xf32>
    %140 = vector.broadcast %139 : vector<1x32xf32> to vector<17x32xf32>
    %141 = arith.addf %138, %140 : vector<17x32xf32>
    %142 = vector.extract_strided_slice %24 {offsets = [6, 0], sizes = [1, 32], strides = [1, 1]} : vector<9x32xf32> to vector<1x32xf32>
    %143 = vector.extract_strided_slice %24 {offsets = [7, 0], sizes = [1, 32], strides = [1, 1]} : vector<9x32xf32> to vector<1x32xf32>
    %cst_60 = arith.constant dense<0.000000e+00> : vector<17xf32>
    %144 = vector.multi_reduction <add>, %141, %cst_60 [1] : vector<17x32xf32> to vector<17xf32>
    %145 = vector.shape_cast %144 : vector<17xf32> to vector<17x1xf32>
    %cst_61 = arith.constant 3.200000e+01 : f32
    %146 = vector.broadcast %cst_61 : f32 to vector<17x1xf32>
    %147 = arith.divf %145, %146 : vector<17x1xf32>
    %148 = vector.broadcast %147 : vector<17x1xf32> to vector<17x32xf32>
    %149 = arith.subf %141, %148 : vector<17x32xf32>
    %150 = arith.mulf %149, %149 : vector<17x32xf32>
    %cst_62 = arith.constant dense<0.000000e+00> : vector<17xf32>
    %151 = vector.multi_reduction <add>, %150, %cst_62 [1] : vector<17x32xf32> to vector<17xf32>
    %152 = vector.shape_cast %151 : vector<17xf32> to vector<17x1xf32>
    %cst_63 = arith.constant 3.200000e+01 : f32
    %153 = vector.broadcast %cst_63 : f32 to vector<17x1xf32>
    %154 = arith.divf %152, %153 : vector<17x1xf32>
    %cst_64 = arith.constant 9.99999997E-7 : f32
    %155 = vector.broadcast %cst_64 : f32 to vector<17x1xf32>
    %156 = arith.addf %154, %155 : vector<17x1xf32>
    %157 = math.rsqrt %156 : vector<17x1xf32>
    %158 = vector.broadcast %157 : vector<17x1xf32> to vector<17x32xf32>
    %159 = arith.mulf %149, %158 : vector<17x32xf32>
    %160 = vector.broadcast %142 : vector<1x32xf32> to vector<17x32xf32>
    %161 = arith.mulf %159, %160 : vector<17x32xf32>
    %162 = vector.broadcast %143 : vector<1x32xf32> to vector<17x32xf32>
    %163 = arith.addf %161, %162 : vector<17x32xf32>
    %c0_65 = arith.constant 0 : index
    %c0_66 = arith.constant 0 : index
    %c0_67 = arith.constant 0 : index
    %164 = vector.load %arg10[%c0_65, %c0_66, %c0_67] : memref<2x32x128xf32, #tpu.memory_space<vmem>>, vector<1x32x128xf32>
    %165 = vector.shape_cast %164 : vector<1x32x128xf32> to vector<32x128xf32>
    %cst_68 = arith.constant dense<0.000000e+00> : vector<17x128xf32>
    %166 = tpu.matmul %163, %165, %cst_68 {dimension_numbers = #tpu.dot_dimension_numbers<[1], [0], [0], [1], [0, 0, 1, 1], [], []>} : vector<17x32xf32>, vector<32x128xf32>, vector<17x128xf32> -> vector<17x128xf32>
    %c0_69 = arith.constant 0 : index
    %c0_70 = arith.constant 0 : index
    %c0_71 = arith.constant 0 : index
    %167 = vector.load %arg11[%c0_69, %c0_70, %c0_71] : memref<2x1x128xf32, #tpu.memory_space<vmem>>, vector<1x1x128xf32>
    %168 = vector.shape_cast %167 : vector<1x1x128xf32> to vector<1x128xf32>
    %169 = vector.broadcast %168 : vector<1x128xf32> to vector<17x128xf32>
    %170 = arith.addf %166, %169 : vector<17x128xf32>
    %171 = arith.mulf %170, %170 : vector<17x128xf32>
    %172 = arith.mulf %170, %171 : vector<17x128xf32>
    %cst_72 = arith.constant 4.471500e-02 : f32
    %173 = vector.broadcast %cst_72 : f32 to vector<17x128xf32>
    %174 = arith.mulf %173, %172 : vector<17x128xf32>
    %175 = arith.addf %170, %174 : vector<17x128xf32>
    %cst_73 = arith.constant 0.797884583 : f32
    %176 = vector.broadcast %cst_73 : f32 to vector<17x128xf32>
    %177 = arith.mulf %176, %175 : vector<17x128xf32>
    %178 = math.tanh %177 : vector<17x128xf32>
    %cst_74 = arith.constant 1.000000e+00 : f32
    %179 = vector.broadcast %cst_74 : f32 to vector<17x128xf32>
    %180 = arith.addf %179, %178 : vector<17x128xf32>
    %cst_75 = arith.constant 5.000000e-01 : f32
    %181 = vector.broadcast %cst_75 : f32 to vector<17x128xf32>
    %182 = arith.mulf %181, %180 : vector<17x128xf32>
    %183 = arith.mulf %170, %182 : vector<17x128xf32>
    %c0_76 = arith.constant 0 : index
    %c0_77 = arith.constant 0 : index
    %c0_78 = arith.constant 0 : index
    %184 = vector.load %arg12[%c0_76, %c0_77, %c0_78] : memref<2x128x32xf32, #tpu.memory_space<vmem>>, vector<1x128x32xf32>
    %185 = vector.shape_cast %184 : vector<1x128x32xf32> to vector<128x32xf32>
    %cst_79 = arith.constant dense<0.000000e+00> : vector<17x32xf32>
    %186 = tpu.matmul %183, %185, %cst_79 {dimension_numbers = #tpu.dot_dimension_numbers<[1], [0], [0], [1], [0, 0, 1, 1], [], []>} : vector<17x128xf32>, vector<128x32xf32>, vector<17x32xf32> -> vector<17x32xf32>
    %187 = arith.addf %141, %186 : vector<17x32xf32>
    %188 = vector.extract_strided_slice %24 {offsets = [8, 0], sizes = [1, 32], strides = [1, 1]} : vector<9x32xf32> to vector<1x32xf32>
    %189 = vector.broadcast %188 : vector<1x32xf32> to vector<17x32xf32>
    %190 = arith.addf %187, %189 : vector<17x32xf32>
    %c1_80 = arith.constant 1 : index
    %c0_81 = arith.constant 0 : index
    %c0_82 = arith.constant 0 : index
    %191 = vector.load %arg7[%c1_80, %c0_81, %c0_82] : memref<2x9x32xf32, #tpu.memory_space<vmem>>, vector<1x9x32xf32>
    %192 = vector.shape_cast %191 : vector<1x9x32xf32> to vector<9x32xf32>
    %193 = vector.extract_strided_slice %192 {offsets = [0, 0], sizes = [1, 32], strides = [1, 1]} : vector<9x32xf32> to vector<1x32xf32>
    %194 = vector.extract_strided_slice %192 {offsets = [1, 0], sizes = [1, 32], strides = [1, 1]} : vector<9x32xf32> to vector<1x32xf32>
    %cst_83 = arith.constant dense<0.000000e+00> : vector<17xf32>
    %195 = vector.multi_reduction <add>, %190, %cst_83 [1] : vector<17x32xf32> to vector<17xf32>
    %196 = vector.shape_cast %195 : vector<17xf32> to vector<17x1xf32>
    %cst_84 = arith.constant 3.200000e+01 : f32
    %197 = vector.broadcast %cst_84 : f32 to vector<17x1xf32>
    %198 = arith.divf %196, %197 : vector<17x1xf32>
    %199 = vector.broadcast %198 : vector<17x1xf32> to vector<17x32xf32>
    %200 = arith.subf %190, %199 : vector<17x32xf32>
    %201 = arith.mulf %200, %200 : vector<17x32xf32>
    %cst_85 = arith.constant dense<0.000000e+00> : vector<17xf32>
    %202 = vector.multi_reduction <add>, %201, %cst_85 [1] : vector<17x32xf32> to vector<17xf32>
    %203 = vector.shape_cast %202 : vector<17xf32> to vector<17x1xf32>
    %cst_86 = arith.constant 3.200000e+01 : f32
    %204 = vector.broadcast %cst_86 : f32 to vector<17x1xf32>
    %205 = arith.divf %203, %204 : vector<17x1xf32>
    %cst_87 = arith.constant 9.99999997E-7 : f32
    %206 = vector.broadcast %cst_87 : f32 to vector<17x1xf32>
    %207 = arith.addf %205, %206 : vector<17x1xf32>
    %208 = math.rsqrt %207 : vector<17x1xf32>
    %209 = vector.broadcast %208 : vector<17x1xf32> to vector<17x32xf32>
    %210 = arith.mulf %200, %209 : vector<17x32xf32>
    %211 = vector.broadcast %193 : vector<1x32xf32> to vector<17x32xf32>
    %212 = arith.mulf %210, %211 : vector<17x32xf32>
    %213 = vector.broadcast %194 : vector<1x32xf32> to vector<17x32xf32>
    %214 = arith.addf %212, %213 : vector<17x32xf32>
    %c1_88 = arith.constant 1 : index
    %c0_89 = arith.constant 0 : index
    %c0_90 = arith.constant 0 : index
    %215 = vector.load %arg8[%c1_88, %c0_89, %c0_90] : memref<2x32x96xf32, #tpu.memory_space<vmem>>, vector<1x32x96xf32>
    %216 = vector.shape_cast %215 : vector<1x32x96xf32> to vector<32x96xf32>
    %cst_91 = arith.constant dense<0.000000e+00> : vector<17x96xf32>
    %217 = tpu.matmul %214, %216, %cst_91 {dimension_numbers = #tpu.dot_dimension_numbers<[1], [0], [0], [1], [0, 0, 1, 1], [], []>} : vector<17x32xf32>, vector<32x96xf32>, vector<17x96xf32> -> vector<17x96xf32>
    %218 = vector.extract_strided_slice %217 {offsets = [0, 0], sizes = [17, 32], strides = [1, 1]} : vector<17x96xf32> to vector<17x32xf32>
    %219 = vector.extract_strided_slice %192 {offsets = [2, 0], sizes = [1, 32], strides = [1, 1]} : vector<9x32xf32> to vector<1x32xf32>
    %220 = vector.broadcast %219 : vector<1x32xf32> to vector<17x32xf32>
    %221 = arith.addf %218, %220 : vector<17x32xf32>
    %222 = vector.extract_strided_slice %217 {offsets = [0, 32], sizes = [17, 32], strides = [1, 1]} : vector<17x96xf32> to vector<17x32xf32>
    %223 = vector.extract_strided_slice %192 {offsets = [3, 0], sizes = [1, 32], strides = [1, 1]} : vector<9x32xf32> to vector<1x32xf32>
    %224 = vector.broadcast %223 : vector<1x32xf32> to vector<17x32xf32>
    %225 = arith.addf %222, %224 : vector<17x32xf32>
    %226 = vector.extract_strided_slice %217 {offsets = [0, 64], sizes = [17, 32], strides = [1, 1]} : vector<17x96xf32> to vector<17x32xf32>
    %227 = vector.extract_strided_slice %192 {offsets = [4, 0], sizes = [1, 32], strides = [1, 1]} : vector<9x32xf32> to vector<1x32xf32>
    %228 = vector.broadcast %227 : vector<1x32xf32> to vector<17x32xf32>
    %229 = arith.addf %226, %228 : vector<17x32xf32>
    %230 = vector.extract_strided_slice %221 {offsets = [0, 0], sizes = [17, 8], strides = [1, 1]} : vector<17x32xf32> to vector<17x8xf32>
    %231 = vector.extract_strided_slice %225 {offsets = [0, 0], sizes = [17, 8], strides = [1, 1]} : vector<17x32xf32> to vector<17x8xf32>
    %232 = vector.extract_strided_slice %229 {offsets = [0, 0], sizes = [17, 8], strides = [1, 1]} : vector<17x32xf32> to vector<17x8xf32>
    %cst_92 = arith.constant dense<0.000000e+00> : vector<17x17xf32>
    %233 = tpu.matmul %230, %231, %cst_92 {dimension_numbers = #tpu.dot_dimension_numbers<[1], [1], [0], [0], [0, 0, 1, 0], [], []>} : vector<17x8xf32>, vector<17x8xf32>, vector<17x17xf32> -> vector<17x17xf32>
    %cst_93 = arith.constant 0.353553385 : f32
    %234 = vector.broadcast %cst_93 : f32 to vector<17x17xf32>
    %235 = arith.mulf %233, %234 : vector<17x17xf32>
    %cst_94 = arith.constant dense<0xFF800000> : vector<17xf32>
    %236 = vector.multi_reduction <maximumf>, %235, %cst_94 [1] : vector<17x17xf32> to vector<17xf32>
    %237 = vector.shape_cast %236 : vector<17xf32> to vector<17x1xf32>
    %238 = vector.broadcast %237 : vector<17x1xf32> to vector<17x17xf32>
    %239 = arith.subf %235, %238 : vector<17x17xf32>
    %240 = math.exp %239 : vector<17x17xf32>
    %cst_95 = arith.constant dense<0.000000e+00> : vector<17xf32>
    %241 = vector.multi_reduction <add>, %240, %cst_95 [1] : vector<17x17xf32> to vector<17xf32>
    %242 = vector.shape_cast %241 : vector<17xf32> to vector<17x1xf32>
    %243 = tpu.reciprocal %242 {approx = true} : vector<17x1xf32> -> vector<17x1xf32>
    %244 = vector.broadcast %243 : vector<17x1xf32> to vector<17x17xf32>
    %245 = arith.mulf %240, %244 : vector<17x17xf32>
    %cst_96 = arith.constant dense<0.000000e+00> : vector<17x8xf32>
    %246 = tpu.matmul %245, %232, %cst_96 {dimension_numbers = #tpu.dot_dimension_numbers<[1], [0], [0], [1], [0, 0, 1, 1], [], []>} : vector<17x17xf32>, vector<17x8xf32>, vector<17x8xf32> -> vector<17x8xf32>
    %c0_97 = arith.constant 0 : index
    %c0_98 = arith.constant 0 : index
    %247 = vector.load %arg15[%c0_97, %c0_98] : memref<17x32xf32, #tpu.memory_space<vmem>>, vector<17x8xf32>
    tpu.vector_store %arg15[%c0_97, %c0_98], %246 {strides = array<i32>} : memref<17x32xf32, #tpu.memory_space<vmem>>, vector<17x8xf32>,
    %248 = vector.extract_strided_slice %221 {offsets = [0, 8], sizes = [17, 8], strides = [1, 1]} : vector<17x32xf32> to vector<17x8xf32>
    %249 = vector.extract_strided_slice %225 {offsets = [0, 8], sizes = [17, 8], strides = [1, 1]} : vector<17x32xf32> to vector<17x8xf32>
    %250 = vector.extract_strided_slice %229 {offsets = [0, 8], sizes = [17, 8], strides = [1, 1]} : vector<17x32xf32> to vector<17x8xf32>
    %cst_99 = arith.constant dense<0.000000e+00> : vector<17x17xf32>
    %251 = tpu.matmul %248, %249, %cst_99 {dimension_numbers = #tpu.dot_dimension_numbers<[1], [1], [0], [0], [0, 0, 1, 0], [], []>} : vector<17x8xf32>, vector<17x8xf32>, vector<17x17xf32> -> vector<17x17xf32>
    %cst_100 = arith.constant 0.353553385 : f32
    %252 = vector.broadcast %cst_100 : f32 to vector<17x17xf32>
    %253 = arith.mulf %251, %252 : vector<17x17xf32>
    %cst_101 = arith.constant dense<0xFF800000> : vector<17xf32>
    %254 = vector.multi_reduction <maximumf>, %253, %cst_101 [1] : vector<17x17xf32> to vector<17xf32>
    %255 = vector.shape_cast %254 : vector<17xf32> to vector<17x1xf32>
    %256 = vector.broadcast %255 : vector<17x1xf32> to vector<17x17xf32>
    %257 = arith.subf %253, %256 : vector<17x17xf32>
    %258 = math.exp %257 : vector<17x17xf32>
    %cst_102 = arith.constant dense<0.000000e+00> : vector<17xf32>
    %259 = vector.multi_reduction <add>, %258, %cst_102 [1] : vector<17x17xf32> to vector<17xf32>
    %260 = vector.shape_cast %259 : vector<17xf32> to vector<17x1xf32>
    %261 = tpu.reciprocal %260 {approx = true} : vector<17x1xf32> -> vector<17x1xf32>
    %262 = vector.broadcast %261 : vector<17x1xf32> to vector<17x17xf32>
    %263 = arith.mulf %258, %262 : vector<17x17xf32>
    %cst_103 = arith.constant dense<0.000000e+00> : vector<17x8xf32>
    %264 = tpu.matmul %263, %250, %cst_103 {dimension_numbers = #tpu.dot_dimension_numbers<[1], [0], [0], [1], [0, 0, 1, 1], [], []>} : vector<17x17xf32>, vector<17x8xf32>, vector<17x8xf32> -> vector<17x8xf32>
    %c0_104 = arith.constant 0 : index
    %c8_105 = arith.constant 8 : index
    %265 = vector.load %arg15[%c0_104, %c8_105] : memref<17x32xf32, #tpu.memory_space<vmem>>, vector<17x8xf32>
    tpu.vector_store %arg15[%c0_104, %c8_105], %264 {strides = array<i32>} : memref<17x32xf32, #tpu.memory_space<vmem>>, vector<17x8xf32>,
    %266 = vector.extract_strided_slice %221 {offsets = [0, 16], sizes = [17, 8], strides = [1, 1]} : vector<17x32xf32> to vector<17x8xf32>
    %267 = vector.extract_strided_slice %225 {offsets = [0, 16], sizes = [17, 8], strides = [1, 1]} : vector<17x32xf32> to vector<17x8xf32>
    %268 = vector.extract_strided_slice %229 {offsets = [0, 16], sizes = [17, 8], strides = [1, 1]} : vector<17x32xf32> to vector<17x8xf32>
    %cst_106 = arith.constant dense<0.000000e+00> : vector<17x17xf32>
    %269 = tpu.matmul %266, %267, %cst_106 {dimension_numbers = #tpu.dot_dimension_numbers<[1], [1], [0], [0], [0, 0, 1, 0], [], []>} : vector<17x8xf32>, vector<17x8xf32>, vector<17x17xf32> -> vector<17x17xf32>
    %cst_107 = arith.constant 0.353553385 : f32
    %270 = vector.broadcast %cst_107 : f32 to vector<17x17xf32>
    %271 = arith.mulf %269, %270 : vector<17x17xf32>
    %cst_108 = arith.constant dense<0xFF800000> : vector<17xf32>
    %272 = vector.multi_reduction <maximumf>, %271, %cst_108 [1] : vector<17x17xf32> to vector<17xf32>
    %273 = vector.shape_cast %272 : vector<17xf32> to vector<17x1xf32>
    %274 = vector.broadcast %273 : vector<17x1xf32> to vector<17x17xf32>
    %275 = arith.subf %271, %274 : vector<17x17xf32>
    %276 = math.exp %275 : vector<17x17xf32>
    %cst_109 = arith.constant dense<0.000000e+00> : vector<17xf32>
    %277 = vector.multi_reduction <add>, %276, %cst_109 [1] : vector<17x17xf32> to vector<17xf32>
    %278 = vector.shape_cast %277 : vector<17xf32> to vector<17x1xf32>
    %279 = tpu.reciprocal %278 {approx = true} : vector<17x1xf32> -> vector<17x1xf32>
    %280 = vector.broadcast %279 : vector<17x1xf32> to vector<17x17xf32>
    %281 = arith.mulf %276, %280 : vector<17x17xf32>
    %cst_110 = arith.constant dense<0.000000e+00> : vector<17x8xf32>
    %282 = tpu.matmul %281, %268, %cst_110 {dimension_numbers = #tpu.dot_dimension_numbers<[1], [0], [0], [1], [0, 0, 1, 1], [], []>} : vector<17x17xf32>, vector<17x8xf32>, vector<17x8xf32> -> vector<17x8xf32>
    %c0_111 = arith.constant 0 : index
    %c16_112 = arith.constant 16 : index
    %283 = vector.load %arg15[%c0_111, %c16_112] : memref<17x32xf32, #tpu.memory_space<vmem>>, vector<17x8xf32>
    tpu.vector_store %arg15[%c0_111, %c16_112], %282 {strides = array<i32>} : memref<17x32xf32, #tpu.memory_space<vmem>>, vector<17x8xf32>,
    %284 = vector.extract_strided_slice %221 {offsets = [0, 24], sizes = [17, 8], strides = [1, 1]} : vector<17x32xf32> to vector<17x8xf32>
    %285 = vector.extract_strided_slice %225 {offsets = [0, 24], sizes = [17, 8], strides = [1, 1]} : vector<17x32xf32> to vector<17x8xf32>
    %286 = vector.extract_strided_slice %229 {offsets = [0, 24], sizes = [17, 8], strides = [1, 1]} : vector<17x32xf32> to vector<17x8xf32>
    %cst_113 = arith.constant dense<0.000000e+00> : vector<17x17xf32>
    %287 = tpu.matmul %284, %285, %cst_113 {dimension_numbers = #tpu.dot_dimension_numbers<[1], [1], [0], [0], [0, 0, 1, 0], [], []>} : vector<17x8xf32>, vector<17x8xf32>, vector<17x17xf32> -> vector<17x17xf32>
    %cst_114 = arith.constant 0.353553385 : f32
    %288 = vector.broadcast %cst_114 : f32 to vector<17x17xf32>
    %289 = arith.mulf %287, %288 : vector<17x17xf32>
    %cst_115 = arith.constant dense<0xFF800000> : vector<17xf32>
    %290 = vector.multi_reduction <maximumf>, %289, %cst_115 [1] : vector<17x17xf32> to vector<17xf32>
    %291 = vector.shape_cast %290 : vector<17xf32> to vector<17x1xf32>
    %292 = vector.broadcast %291 : vector<17x1xf32> to vector<17x17xf32>
    %293 = arith.subf %289, %292 : vector<17x17xf32>
    %294 = math.exp %293 : vector<17x17xf32>
    %cst_116 = arith.constant dense<0.000000e+00> : vector<17xf32>
    %295 = vector.multi_reduction <add>, %294, %cst_116 [1] : vector<17x17xf32> to vector<17xf32>
    %296 = vector.shape_cast %295 : vector<17xf32> to vector<17x1xf32>
    %297 = tpu.reciprocal %296 {approx = true} : vector<17x1xf32> -> vector<17x1xf32>
    %298 = vector.broadcast %297 : vector<17x1xf32> to vector<17x17xf32>
    %299 = arith.mulf %294, %298 : vector<17x17xf32>
    %cst_117 = arith.constant dense<0.000000e+00> : vector<17x8xf32>
    %300 = tpu.matmul %299, %286, %cst_117 {dimension_numbers = #tpu.dot_dimension_numbers<[1], [0], [0], [1], [0, 0, 1, 1], [], []>} : vector<17x17xf32>, vector<17x8xf32>, vector<17x8xf32> -> vector<17x8xf32>
    %c0_118 = arith.constant 0 : index
    %c24_119 = arith.constant 24 : index
    %301 = vector.load %arg15[%c0_118, %c24_119] : memref<17x32xf32, #tpu.memory_space<vmem>>, vector<17x8xf32>
    tpu.vector_store %arg15[%c0_118, %c24_119], %300 {strides = array<i32>} : memref<17x32xf32, #tpu.memory_space<vmem>>, vector<17x8xf32>,
    %c0_120 = arith.constant 0 : index
    %c0_121 = arith.constant 0 : index
    %302 = vector.load %arg15[%c0_120, %c0_121] : memref<17x32xf32, #tpu.memory_space<vmem>>, vector<17x32xf32>
    %c1_122 = arith.constant 1 : index
    %c0_123 = arith.constant 0 : index
    %c0_124 = arith.constant 0 : index
    %303 = vector.load %arg9[%c1_122, %c0_123, %c0_124] : memref<2x32x32xf32, #tpu.memory_space<vmem>>, vector<1x32x32xf32>
    %304 = vector.shape_cast %303 : vector<1x32x32xf32> to vector<32x32xf32>
    %cst_125 = arith.constant dense<0.000000e+00> : vector<17x32xf32>
    %305 = tpu.matmul %302, %304, %cst_125 {dimension_numbers = #tpu.dot_dimension_numbers<[1], [0], [0], [1], [0, 0, 1, 1], [], []>} : vector<17x32xf32>, vector<32x32xf32>, vector<17x32xf32> -> vector<17x32xf32>
    %306 = arith.addf %190, %305 : vector<17x32xf32>
    %307 = vector.extract_strided_slice %192 {offsets = [5, 0], sizes = [1, 32], strides = [1, 1]} : vector<9x32xf32> to vector<1x32xf32>
    %308 = vector.broadcast %307 : vector<1x32xf32> to vector<17x32xf32>
    %309 = arith.addf %306, %308 : vector<17x32xf32>
    %310 = vector.extract_strided_slice %192 {offsets = [6, 0], sizes = [1, 32], strides = [1, 1]} : vector<9x32xf32> to vector<1x32xf32>
    %311 = vector.extract_strided_slice %192 {offsets = [7, 0], sizes = [1, 32], strides = [1, 1]} : vector<9x32xf32> to vector<1x32xf32>
    %cst_126 = arith.constant dense<0.000000e+00> : vector<17xf32>
    %312 = vector.multi_reduction <add>, %309, %cst_126 [1] : vector<17x32xf32> to vector<17xf32>
    %313 = vector.shape_cast %312 : vector<17xf32> to vector<17x1xf32>
    %cst_127 = arith.constant 3.200000e+01 : f32
    %314 = vector.broadcast %cst_127 : f32 to vector<17x1xf32>
    %315 = arith.divf %313, %314 : vector<17x1xf32>
    %316 = vector.broadcast %315 : vector<17x1xf32> to vector<17x32xf32>
    %317 = arith.subf %309, %316 : vector<17x32xf32>
    %318 = arith.mulf %317, %317 : vector<17x32xf32>
    %cst_128 = arith.constant dense<0.000000e+00> : vector<17xf32>
    %319 = vector.multi_reduction <add>, %318, %cst_128 [1] : vector<17x32xf32> to vector<17xf32>
    %320 = vector.shape_cast %319 : vector<17xf32> to vector<17x1xf32>
    %cst_129 = arith.constant 3.200000e+01 : f32
    %321 = vector.broadcast %cst_129 : f32 to vector<17x1xf32>
    %322 = arith.divf %320, %321 : vector<17x1xf32>
    %cst_130 = arith.constant 9.99999997E-7 : f32
    %323 = vector.broadcast %cst_130 : f32 to vector<17x1xf32>
    %324 = arith.addf %322, %323 : vector<17x1xf32>
    %325 = math.rsqrt %324 : vector<17x1xf32>
    %326 = vector.broadcast %325 : vector<17x1xf32> to vector<17x32xf32>
    %327 = arith.mulf %317, %326 : vector<17x32xf32>
    %328 = vector.broadcast %310 : vector<1x32xf32> to vector<17x32xf32>
    %329 = arith.mulf %327, %328 : vector<17x32xf32>
    %330 = vector.broadcast %311 : vector<1x32xf32> to vector<17x32xf32>
    %331 = arith.addf %329, %330 : vector<17x32xf32>
    %c1_131 = arith.constant 1 : index
    %c0_132 = arith.constant 0 : index
    %c0_133 = arith.constant 0 : index
    %332 = vector.load %arg10[%c1_131, %c0_132, %c0_133] : memref<2x32x128xf32, #tpu.memory_space<vmem>>, vector<1x32x128xf32>
    %333 = vector.shape_cast %332 : vector<1x32x128xf32> to vector<32x128xf32>
    %cst_134 = arith.constant dense<0.000000e+00> : vector<17x128xf32>
    %334 = tpu.matmul %331, %333, %cst_134 {dimension_numbers = #tpu.dot_dimension_numbers<[1], [0], [0], [1], [0, 0, 1, 1], [], []>} : vector<17x32xf32>, vector<32x128xf32>, vector<17x128xf32> -> vector<17x128xf32>
    %c1_135 = arith.constant 1 : index
    %c0_136 = arith.constant 0 : index
    %c0_137 = arith.constant 0 : index
    %335 = vector.load %arg11[%c1_135, %c0_136, %c0_137] : memref<2x1x128xf32, #tpu.memory_space<vmem>>, vector<1x1x128xf32>
    %336 = vector.shape_cast %335 : vector<1x1x128xf32> to vector<1x128xf32>
    %337 = vector.broadcast %336 : vector<1x128xf32> to vector<17x128xf32>
    %338 = arith.addf %334, %337 : vector<17x128xf32>
    %339 = arith.mulf %338, %338 : vector<17x128xf32>
    %340 = arith.mulf %338, %339 : vector<17x128xf32>
    %cst_138 = arith.constant 4.471500e-02 : f32
    %341 = vector.broadcast %cst_138 : f32 to vector<17x128xf32>
    %342 = arith.mulf %341, %340 : vector<17x128xf32>
    %343 = arith.addf %338, %342 : vector<17x128xf32>
    %cst_139 = arith.constant 0.797884583 : f32
    %344 = vector.broadcast %cst_139 : f32 to vector<17x128xf32>
    %345 = arith.mulf %344, %343 : vector<17x128xf32>
    %346 = math.tanh %345 : vector<17x128xf32>
    %cst_140 = arith.constant 1.000000e+00 : f32
    %347 = vector.broadcast %cst_140 : f32 to vector<17x128xf32>
    %348 = arith.addf %347, %346 : vector<17x128xf32>
    %cst_141 = arith.constant 5.000000e-01 : f32
    %349 = vector.broadcast %cst_141 : f32 to vector<17x128xf32>
    %350 = arith.mulf %349, %348 : vector<17x128xf32>
    %351 = arith.mulf %338, %350 : vector<17x128xf32>
    %c1_142 = arith.constant 1 : index
    %c0_143 = arith.constant 0 : index
    %c0_144 = arith.constant 0 : index
    %352 = vector.load %arg12[%c1_142, %c0_143, %c0_144] : memref<2x128x32xf32, #tpu.memory_space<vmem>>, vector<1x128x32xf32>
    %353 = vector.shape_cast %352 : vector<1x128x32xf32> to vector<128x32xf32>
    %cst_145 = arith.constant dense<0.000000e+00> : vector<17x32xf32>
    %354 = tpu.matmul %351, %353, %cst_145 {dimension_numbers = #tpu.dot_dimension_numbers<[1], [0], [0], [1], [0, 0, 1, 1], [], []>} : vector<17x128xf32>, vector<128x32xf32>, vector<17x32xf32> -> vector<17x32xf32>
    %355 = arith.addf %309, %354 : vector<17x32xf32>
    %356 = vector.extract_strided_slice %192 {offsets = [8, 0], sizes = [1, 32], strides = [1, 1]} : vector<9x32xf32> to vector<1x32xf32>
    %357 = vector.broadcast %356 : vector<1x32xf32> to vector<17x32xf32>
    %358 = arith.addf %355, %357 : vector<17x32xf32>
    %359 = vector.extract_strided_slice %358 {offsets = [1, 0], sizes = [16, 32], strides = [1, 1]} : vector<17x32xf32> to vector<16x32xf32>
    %360 = vector.extract_strided_slice %1 {offsets = [2, 0], sizes = [1, 32], strides = [1, 1]} : vector<4x32xf32> to vector<1x32xf32>
    %361 = vector.extract_strided_slice %1 {offsets = [3, 0], sizes = [1, 32], strides = [1, 1]} : vector<4x32xf32> to vector<1x32xf32>
    %cst_146 = arith.constant dense<0.000000e+00> : vector<16xf32>
    %362 = vector.multi_reduction <add>, %359, %cst_146 [1] : vector<16x32xf32> to vector<16xf32>
    %363 = vector.shape_cast %362 : vector<16xf32> to vector<16x1xf32>
    %cst_147 = arith.constant 3.200000e+01 : f32
    %364 = vector.broadcast %cst_147 : f32 to vector<16x1xf32>
    %365 = arith.divf %363, %364 : vector<16x1xf32>
    %366 = vector.broadcast %365 : vector<16x1xf32> to vector<16x32xf32>
    %367 = arith.subf %359, %366 : vector<16x32xf32>
    %368 = arith.mulf %367, %367 : vector<16x32xf32>
    %cst_148 = arith.constant dense<0.000000e+00> : vector<16xf32>
    %369 = vector.multi_reduction <add>, %368, %cst_148 [1] : vector<16x32xf32> to vector<16xf32>
    %370 = vector.shape_cast %369 : vector<16xf32> to vector<16x1xf32>
    %cst_149 = arith.constant 3.200000e+01 : f32
    %371 = vector.broadcast %cst_149 : f32 to vector<16x1xf32>
    %372 = arith.divf %370, %371 : vector<16x1xf32>
    %cst_150 = arith.constant 9.99999997E-7 : f32
    %373 = vector.broadcast %cst_150 : f32 to vector<16x1xf32>
    %374 = arith.addf %372, %373 : vector<16x1xf32>
    %375 = math.rsqrt %374 : vector<16x1xf32>
    %376 = vector.broadcast %375 : vector<16x1xf32> to vector<16x32xf32>
    %377 = arith.mulf %367, %376 : vector<16x32xf32>
    %378 = vector.broadcast %360 : vector<1x32xf32> to vector<16x32xf32>
    %379 = arith.mulf %377, %378 : vector<16x32xf32>
    %380 = vector.broadcast %361 : vector<1x32xf32> to vector<16x32xf32>
    %381 = arith.addf %379, %380 : vector<16x32xf32>
    %c0_151 = arith.constant 0 : index
    %c0_152 = arith.constant 0 : index
    %c0_153 = arith.constant 0 : index
    %382 = vector.load %arg13[%c0_151, %c0_152, %c0_153] : memref<1x16x32xf32, #tpu.memory_space<vmem>>, vector<1x16x32xf32>
    %383 = vector.shape_cast %382 : vector<1x16x32xf32> to vector<16x32xf32>
    %384 = vector.shape_cast %381 : vector<16x32xf32> to vector<1x16x32xf32>
    tpu.vector_store %arg13[%c0_151, %c0_152, %c0_153], %384 {strides = array<i32>} : memref<1x16x32xf32, #tpu.memory_space<vmem>>, vector<1x16x32xf32>,
    return
  }
  func.func @transform_0(%arg0: i32) -> (i32, i32, i32) {
    %c0_i32 = arith.constant 0 : i32
    %c0_i32_0 = arith.constant 0 : i32
    %c0_i32_1 = arith.constant 0 : i32
    return %arg0, %c0_i32, %c0_i32_0 : i32, i32, i32
  }
  func.func @transform_1(%arg0: i32) -> (i32, i32) {
    %c0_i32 = arith.constant 0 : i32
    %c0_i32_0 = arith.constant 0 : i32
    %c0_i32_1 = arith.constant 0 : i32
    return %c0_i32, %c0_i32_0 : i32, i32
  }
  func.func @transform_2(%arg0: i32) -> (i32, i32) {
    %c0_i32 = arith.constant 0 : i32
    %c0_i32_0 = arith.constant 0 : i32
    %c0_i32_1 = arith.constant 0 : i32
    return %c0_i32, %c0_i32_0 : i32, i32
  }
  func.func @transform_3(%arg0: i32) -> (i32, i32) {
    %c0_i32 = arith.constant 0 : i32
    %c0_i32_0 = arith.constant 0 : i32
    %c0_i32_1 = arith.constant 0 : i32
    return %c0_i32, %c0_i32_0 : i32, i32
  }
  func.func @transform_4(%arg0: i32) -> (i32, i32) {
    %c0_i32 = arith.constant 0 : i32
    %c0_i32_0 = arith.constant 0 : i32
    %c0_i32_1 = arith.constant 0 : i32
    return %c0_i32, %c0_i32_0 : i32, i32
  }
  func.func @transform_5(%arg0: i32) -> (i32, i32) {
    %c0_i32 = arith.constant 0 : i32
    %c0_i32_0 = arith.constant 0 : i32
    %c0_i32_1 = arith.constant 0 : i32
    return %c0_i32, %c0_i32_0 : i32, i32
  }
  func.func @transform_6(%arg0: i32) -> (i32, i32, i32) {
    %c0_i32 = arith.constant 0 : i32
    %c0_i32_0 = arith.constant 0 : i32
    %c0_i32_1 = arith.constant 0 : i32
    %c0_i32_2 = arith.constant 0 : i32
    return %c0_i32, %c0_i32_0, %c0_i32_1 : i32, i32, i32
  }
  func.func @transform_7(%arg0: i32) -> (i32, i32, i32) {
    %c0_i32 = arith.constant 0 : i32
    %c0_i32_0 = arith.constant 0 : i32
    %c0_i32_1 = arith.constant 0 : i32
    %c0_i32_2 = arith.constant 0 : i32
    return %c0_i32, %c0_i32_0, %c0_i32_1 : i32, i32, i32
  }
  func.func @transform_8(%arg0: i32) -> (i32, i32, i32) {
    %c0_i32 = arith.constant 0 : i32
    %c0_i32_0 = arith.constant 0 : i32
    %c0_i32_1 = arith.constant 0 : i32
    %c0_i32_2 = arith.constant 0 : i32
    return %c0_i32, %c0_i32_0, %c0_i32_1 : i32, i32, i32
  }
  func.func @transform_9(%arg0: i32) -> (i32, i32, i32) {
    %c0_i32 = arith.constant 0 : i32
    %c0_i32_0 = arith.constant 0 : i32
    %c0_i32_1 = arith.constant 0 : i32
    %c0_i32_2 = arith.constant 0 : i32
    return %c0_i32, %c0_i32_0, %c0_i32_1 : i32, i32, i32
  }
  func.func @transform_10(%arg0: i32) -> (i32, i32, i32) {
    %c0_i32 = arith.constant 0 : i32
    %c0_i32_0 = arith.constant 0 : i32
    %c0_i32_1 = arith.constant 0 : i32
    %c0_i32_2 = arith.constant 0 : i32
    return %c0_i32, %c0_i32_0, %c0_i32_1 : i32, i32, i32
  }
  func.func @transform_11(%arg0: i32) -> (i32, i32, i32) {
    %c0_i32 = arith.constant 0 : i32
    %c0_i32_0 = arith.constant 0 : i32
    %c0_i32_1 = arith.constant 0 : i32
    %c0_i32_2 = arith.constant 0 : i32
    return %c0_i32, %c0_i32_0, %c0_i32_1 : i32, i32, i32
  }
  func.func @transform_12(%arg0: i32) -> (i32, i32, i32) {
    %c0_i32 = arith.constant 0 : i32
    %c0_i32_0 = arith.constant 0 : i32
    %c0_i32_1 = arith.constant 0 : i32
    return %arg0, %c0_i32, %c0_i32_0 : i32, i32, i32
  }
}

</mosaic_0001>

<llo_original>
// kernel: encoder_forward.1
$region0: #{encoder_forward.1}
  #allocation0 [shape = 'u32[]', space=smem, size = 0x4, offset = 0x4, fixed_abs, tag = 'smem constant byte address 0x4 - core index']
  #allocation1 [shape = 'u32[144,128]{1,0:T(1,128)}', space=vmem, size = 0x12000, scoped, tag = 'internal scratch']
  #allocation2 [shape = 'f32[17,32]{1,0:T(8,128)}', space=vmem, size = 0x3000, scoped, tag = 'scratch operand']
  #allocation3 [shape = 'f32[17,32]{1,0:T(8,128)}', space=vmem, size = 0x3000, scoped, tag = 'scratch operand']
  %s0 = inlined_call_operand.vmem [shape: f32[2,16,48], index: 0, kind: input, shape index: {}]
  %s1 = inlined_call_operand.vmem [shape: f32[1,48], index: 1, kind: input, shape index: {}]
  %s2 = inlined_call_operand.vmem [shape: f32[1,48], index: 2, kind: input, shape index: {}]
  %s3 = inlined_call_operand.vmem [shape: f32[48,32], index: 3, kind: input, shape index: {}]
  %s4 = inlined_call_operand.vmem [shape: f32[17,32], index: 4, kind: input, shape index: {}]
  %s5 = inlined_call_operand.vmem [shape: f32[4,32], index: 5, kind: input, shape index: {}]
  %s6 = inlined_call_operand.vmem [shape: f32[2,9,32], index: 6, kind: input, shape index: {}]
  %s7 = inlined_call_operand.vmem [shape: f32[2,32,96], index: 7, kind: input, shape index: {}]
  %s8 = inlined_call_operand.vmem [shape: f32[2,32,32], index: 8, kind: input, shape index: {}]
  %s9 = inlined_call_operand.vmem [shape: f32[2,32,128], index: 9, kind: input, shape index: {}]
  %s10 = inlined_call_operand.vmem [shape: f32[2,1,128], index: 10, kind: input, shape index: {}]
  %s11 = inlined_call_operand.vmem [shape: f32[2,128,32], index: 11, kind: input, shape index: {}]
  %s12 = inlined_call_operand.hbm [shape: f32[2,16,32], index: 12, kind: output, shape index: {}]
  %s13 = sld [smem:[#allocation0]]
  $region81: #{encoder_forward.1} parent=0
    _
  %s15 = ssub.s32 1, %s13
  %s16 = scalar_select 0, %s15, %s13
  $region1: #{encoder_forward.1} parent=0
    #allocation4 [shape = 'u8[16384]{0}', space=vmem, size = 0x4000, scoped, tag = 'output window, operand 0']
    #allocation5 [shape = 's32[2]{0}', space=sflag, size = 0x8, scoped, tag = 'scoped memory for encoder_forward.1']
    %17 = vsyncpa [#allocation5], 0
    %s18 = scalar_lea.sflag [#allocation5], 1
    %19 = vsyncpa %s18, 0
    loop: start=0, step=1, limit=4
    $region2: #{encoder_forward.1} parent=1 // loop_pre_header
      _
    $region3: #{encoder_forward.1} parent=1 // loop_header
      %s21 = sphi 0, %s25
      %p22 = scmp.ge.s32.totalorder %s21, 4
      %s31 = sphi 0, %s33
      %s34 = sphi 0, %s31
      %s35 = sphi 0, %s34
      %s51 = sphi 0, %s35
      %s55 = sphi 0, %s55
      %s57 = sphi 0, %s55
      %s58 = sphi 0, %s57
      %s72 = sphi 0, %s58
      %s76 = sphi 0, %s76
      %s78 = sphi 0, %s76
      %s79 = sphi 0, %s78
      %s93 = sphi 0, %s79
      %s97 = sphi 0, %s97
      %s99 = sphi 0, %s97
      %s100 = sphi 0, %s99
      %s114 = sphi 0, %s100
      %s118 = sphi 0, %s118
      %s120 = sphi 0, %s118
      %s121 = sphi 0, %s120
      %s135 = sphi 0, %s121
      %s139 = sphi 0, %s139
      %s141 = sphi 0, %s139
      %s142 = sphi 0, %s141
      %s156 = sphi 0, %s142
      %s160 = sphi 0, %s160
      %s162 = sphi 0, %s160
      %s163 = sphi 0, %s162
      %s177 = sphi 0, %s163
      %s181 = sphi 0, %s181
      %s183 = sphi 0, %s181
      %s184 = sphi 0, %s183
      %s198 = sphi 0, %s184
      %s202 = sphi 0, %s202
      %s204 = sphi 0, %s202
      %s205 = sphi 0, %s204
      %s219 = sphi 0, %s205
      %s223 = sphi 0, %s223
      %s225 = sphi 0, %s223
      %s226 = sphi 0, %s225
      %s240 = sphi 0, %s226
      %s244 = sphi 0, %s244
      %s246 = sphi 0, %s244
      %s247 = sphi 0, %s246
      %s261 = sphi 0, %s247
      %s265 = sphi 0, %s265
      %s267 = sphi 0, %s265
      %s268 = sphi 0, %s267
      %s282 = sphi 0, %s268
      %s288 = sphi 0, %s290
      %s291 = sphi 0, %s288
      %s292 = sphi 0, %s291
      %s308 = sphi 0, %s292
    $region4: #{encoder_forward.1} parent=1 // loop_header_branch
      %24 = sbr.rel (%p22) target = $region8
    $region5: #{encoder_forward.1} parent=1 // loop_body
      %s26 = ssub.s32 %s21, 1
      %s27 = ssub.s32 %s21, 2
      %s28 = sadd.s32 %s21, 1
      %s29 = ssub.s32 %s21, %s28
      %p30 = scmp.eq.s32.totalorder %s29, 0
      %s32 = sadd.s32 %s31, 1
      %s33 = scalar_select %p30, %s31, %s32
      %p36 = pneg %p30
      %p37 = scmp.eq.s32.totalorder %s21, 1
      %p38 = por %p36, %p37
      %p39 = scmp.ne.s32.totalorder %s31, %s34
      %p40 = scmp.eq.s32.totalorder %s21, 0
      %p41 = por %p39, %p40
      %p42 = scmp.ne.s32.totalorder %s31, %s34
      %p43 = scmp.eq.s32.totalorder %s26, 1
      %p44 = por %p42, %p43
      %p45 = scmp.ne.s32.totalorder %s34, %s35
      %p46 = scmp.eq.s32.totalorder %s26, 0
      %p47 = por %p45, %p46
      %p48 = scmp.ne.s32.totalorder %s34, %s35
      %p49 = scmp.eq.s32.totalorder %s27, 1
      %p50 = por %p48, %p49
      %p52 = scmp.ne.s32.totalorder %s35, %s51
      %p53 = scmp.eq.s32.totalorder %s27, 0
      %p54 = por %p52, %p53
      %s56 = sadd.s32 %s55, 1
      %p59 = scmp.eq.s32.totalorder %s21, 1
      %p60 = scmp.ne.s32.totalorder %s55, %s57
      %p61 = scmp.eq.s32.totalorder %s21, 0
      %p62 = por %p60, %p61
      %p63 = scmp.ne.s32.totalorder %s55, %s57
      %p64 = scmp.eq.s32.totalorder %s26, 1
      %p65 = por %p63, %p64
      %p66 = scmp.ne.s32.totalorder %s57, %s58
      %p67 = scmp.eq.s32.totalorder %s26, 0
      %p68 = por %p66, %p67
      %p69 = scmp.ne.s32.totalorder %s57, %s58
      %p70 = scmp.eq.s32.totalorder %s27, 1
      %p71 = por %p69, %p70
      %p73 = scmp.ne.s32.totalorder %s58, %s72
      %p74 = scmp.eq.s32.totalorder %s27, 0
      %p75 = por %p73, %p74
      %s77 = sadd.s32 %s76, 1
      %p80 = scmp.eq.s32.totalorder %s21, 1
      %p81 = scmp.ne.s32.totalorder %s76, %s78
      %p82 = scmp.eq.s32.totalorder %s21, 0
      %p83 = por %p81, %p82
      %p84 = scmp.ne.s32.totalorder %s76, %s78
      %p85 = scmp.eq.s32.totalorder %s26, 1
      %p86 = por %p84, %p85
      %p87 = scmp.ne.s32.totalorder %s78, %s79
      %p88 = scmp.eq.s32.totalorder %s26, 0
      %p89 = por %p87, %p88
      %p90 = scmp.ne.s32.totalorder %s78, %s79
      %p91 = scmp.eq.s32.totalorder %s27, 1
      %p92 = por %p90, %p91
      %p94 = scmp.ne.s32.totalorder %s79, %s93
      %p95 = scmp.eq.s32.totalorder %s27, 0
      %p96 = por %p94, %p95
      %s98 = sadd.s32 %s97, 1
      %p101 = scmp.eq.s32.totalorder %s21, 1
      %p102 = scmp.ne.s32.totalorder %s97, %s99
      %p103 = scmp.eq.s32.totalorder %s21, 0
      %p104 = por %p102, %p103
      %p105 = scmp.ne.s32.totalorder %s97, %s99
      %p106 = scmp.eq.s32.totalorder %s26, 1
      %p107 = por %p105, %p106
      %p108 = scmp.ne.s32.totalorder %s99, %s100
      %p109 = scmp.eq.s32.totalorder %s26, 0
      %p110 = por %p108, %p109
      %p111 = scmp.ne.s32.totalorder %s99, %s100
      %p112 = scmp.eq.s32.totalorder %s27, 1
      %p113 = por %p111, %p112
      %p115 = scmp.ne.s32.totalorder %s100, %s114
      %p116 = scmp.eq.s32.totalorder %s27, 0
      %p117 = por %p115, %p116
      %s119 = sadd.s32 %s118, 1
      %p122 = scmp.eq.s32.totalorder %s21, 1
      %p123 = scmp.ne.s32.totalorder %s118, %s120
      %p124 = scmp.eq.s32.totalorder %s21, 0
      %p125 = por %p123, %p124
      %p126 = scmp.ne.s32.totalorder %s118, %s120
      %p127 = scmp.eq.s32.totalorder %s26, 1
      %p128 = por %p126, %p127
      %p129 = scmp.ne.s32.totalorder %s120, %s121
      %p130 = scmp.eq.s32.totalorder %s26, 0
      %p131 = por %p129, %p130
      %p132 = scmp.ne.s32.totalorder %s120, %s121
      %p133 = scmp.eq.s32.totalorder %s27, 1
      %p134 = por %p132, %p133
      %p136 = scmp.ne.s32.totalorder %s121, %s135
      %p137 = scmp.eq.s32.totalorder %s27, 0
      %p138 = por %p136, %p137
      %s140 = sadd.s32 %s139, 1
      %p143 = scmp.eq.s32.totalorder %s21, 1
      %p144 = scmp.ne.s32.totalorder %s139, %s141
      %p145 = scmp.eq.s32.totalorder %s21, 0
      %p146 = por %p144, %p145
      %p147 = scmp.ne.s32.totalorder %s139, %s141
      %p148 = scmp.eq.s32.totalorder %s26, 1
      %p149 = por %p147, %p148
      %p150 = scmp.ne.s32.totalorder %s141, %s142
      %p151 = scmp.eq.s32.totalorder %s26, 0
      %p152 = por %p150, %p151
      %p153 = scmp.ne.s32.totalorder %s141, %s142
      %p154 = scmp.eq.s32.totalorder %s27, 1
      %p155 = por %p153, %p154
      %p157 = scmp.ne.s32.totalorder %s142, %s156
      %p158 = scmp.eq.s32.totalorder %s27, 0
      %p159 = por %p157, %p158
      %s161 = sadd.s32 %s160, 1
      %p164 = scmp.eq.s32.totalorder %s21, 1
      %p165 = scmp.ne.s32.totalorder %s160, %s162
      %p166 = scmp.eq.s32.totalorder %s21, 0
      %p167 = por %p165, %p166
      %p168 = scmp.ne.s32.totalorder %s160, %s162
      %p169 = scmp.eq.s32.totalorder %s26, 1
      %p170 = por %p168, %p169
      %p171 = scmp.ne.s32.totalorder %s162, %s163
      %p172 = scmp.eq.s32.totalorder %s26, 0
      %p173 = por %p171, %p172
      %p174 = scmp.ne.s32.totalorder %s162, %s163
      %p175 = scmp.eq.s32.totalorder %s27, 1
      %p176 = por %p174, %p175
      %p178 = scmp.ne.s32.totalorder %s163, %s177
      %p179 = scmp.eq.s32.totalorder %s27, 0
      %p180 = por %p178, %p179
      %s182 = sadd.s32 %s181, 1
      %p185 = scmp.eq.s32.totalorder %s21, 1
      %p186 = scmp.ne.s32.totalorder %s181, %s183
      %p187 = scmp.eq.s32.totalorder %s21, 0
      %p188 = por %p186, %p187
      %p189 = scmp.ne.s32.totalorder %s181, %s183
      %p190 = scmp.eq.s32.totalorder %s26, 1
      %p191 = por %p189, %p190
      %p192 = scmp.ne.s32.totalorder %s183, %s184
      %p193 = scmp.eq.s32.totalorder %s26, 0
      %p194 = por %p192, %p193
      %p195 = scmp.ne.s32.totalorder %s183, %s184
      %p196 = scmp.eq.s32.totalorder %s27, 1
      %p197 = por %p195, %p196
      %p199 = scmp.ne.s32.totalorder %s184, %s198
      %p200 = scmp.eq.s32.totalorder %s27, 0
      %p201 = por %p199, %p200
      %s203 = sadd.s32 %s202, 1
      %p206 = scmp.eq.s32.totalorder %s21, 1
      %p207 = scmp.ne.s32.totalorder %s202, %s204
      %p208 = scmp.eq.s32.totalorder %s21, 0
      %p209 = por %p207, %p208
      %p210 = scmp.ne.s32.totalorder %s202, %s204
      %p211 = scmp.eq.s32.totalorder %s26, 1
      %p212 = por %p210, %p211
      %p213 = scmp.ne.s32.totalorder %s204, %s205
      %p214 = scmp.eq.s32.totalorder %s26, 0
      %p215 = por %p213, %p214
      %p216 = scmp.ne.s32.totalorder %s204, %s205
      %p217 = scmp.eq.s32.totalorder %s27, 1
      %p218 = por %p216, %p217
      %p220 = scmp.ne.s32.totalorder %s205, %s219
      %p221 = scmp.eq.s32.totalorder %s27, 0
      %p222 = por %p220, %p221
      %s224 = sadd.s32 %s223, 1
      %p227 = scmp.eq.s32.totalorder %s21, 1
      %p228 = scmp.ne.s32.totalorder %s223, %s225
      %p229 = scmp.eq.s32.totalorder %s21, 0
      %p230 = por %p228, %p229
      %p231 = scmp.ne.s32.totalorder %s223, %s225
      %p232 = scmp.eq.s32.totalorder %s26, 1
      %p233 = por %p231, %p232
      %p234 = scmp.ne.s32.totalorder %s225, %s226
      %p235 = scmp.eq.s32.totalorder %s26, 0
      %p236 = por %p234, %p235
      %p237 = scmp.ne.s32.totalorder %s225, %s226
      %p238 = scmp.eq.s32.totalorder %s27, 1
      %p239 = por %p237, %p238
      %p241 = scmp.ne.s32.totalorder %s226, %s240
      %p242 = scmp.eq.s32.totalorder %s27, 0
      %p243 = por %p241, %p242
      %s245 = sadd.s32 %s244, 1
      %p248 = scmp.eq.s32.totalorder %s21, 1
      %p249 = scmp.ne.s32.totalorder %s244, %s246
      %p250 = scmp.eq.s32.totalorder %s21, 0
      %p251 = por %p249, %p250
      %p252 = scmp.ne.s32.totalorder %s244, %s246
      %p253 = scmp.eq.s32.totalorder %s26, 1
      %p254 = por %p252, %p253
      %p255 = scmp.ne.s32.totalorder %s246, %s247
      %p256 = scmp.eq.s32.totalorder %s26, 0
      %p257 = por %p255, %p256
      %p258 = scmp.ne.s32.totalorder %s246, %s247
      %p259 = scmp.eq.s32.totalorder %s27, 1
      %p260 = por %p258, %p259
      %p262 = scmp.ne.s32.totalorder %s247, %s261
      %p263 = scmp.eq.s32.totalorder %s27, 0
      %p264 = por %p262, %p263
      %s266 = sadd.s32 %s265, 1
      %p269 = scmp.eq.s32.totalorder %s21, 1
      %p270 = scmp.ne.s32.totalorder %s265, %s267
      %p271 = scmp.eq.s32.totalorder %s21, 0
      %p272 = por %p270, %p271
      %p273 = scmp.ne.s32.totalorder %s265, %s267
      %p274 = scmp.eq.s32.totalorder %s26, 1
      %p275 = por %p273, %p274
      %p276 = scmp.ne.s32.totalorder %s267, %s268
      %p277 = scmp.eq.s32.totalorder %s26, 0
      %p278 = por %p276, %p277
      %p279 = scmp.ne.s32.totalorder %s267, %s268
      %p280 = scmp.eq.s32.totalorder %s27, 1
      %p281 = por %p279, %p280
      %p283 = scmp.ne.s32.totalorder %s268, %s282
      %p284 = scmp.eq.s32.totalorder %s27, 0
      %p285 = por %p283, %p284
      %s286 = ssub.s32 %s21, %s28
      %p287 = scmp.eq.s32.totalorder %s286, 0
      %s289 = sadd.s32 %s288, 1
      %s290 = scalar_select %p287, %s288, %s289
      %p293 = pneg %p287
      %p294 = scmp.eq.s32.totalorder %s21, 1
      %p295 = por %p293, %p294
      %p296 = scmp.ne.s32.totalorder %s288, %s291
      %p297 = scmp.eq.s32.totalorder %s21, 0
      %p298 = por %p296, %p297
      %p299 = scmp.ne.s32.totalorder %s288, %s291
      %p300 = scmp.eq.s32.totalorder %s26, 1
      %p301 = por %p299, %p300
      %p302 = scmp.ne.s32.totalorder %s291, %s292
      %p303 = scmp.eq.s32.totalorder %s26, 0
      %p304 = por %p302, %p303
      %p305 = scmp.ne.s32.totalorder %s291, %s292
      %p306 = scmp.eq.s32.totalorder %s27, 1
      %p307 = por %p305, %p306
      %p309 = scmp.ne.s32.totalorder %s292, %s308
      %p310 = scmp.eq.s32.totalorder %s27, 0
      %p311 = por %p309, %p310
      %p312 = scmp.le.s32.totalorder 1, %s21
      %p313 = scmp.lt.s32.totalorder %s21, 3
      %p314 = pnand %p312, %p313
      %p315 = pneg %p314
      // Predicated region
      $region9: #{encoder_forward.1} parent=5 // pred_check
        _
      $region10: #{encoder_forward.1} parent=5 // pred_check_branch
        %317 = sbr.rel (%p314) target = $region12
      $region11: #{encoder_forward.1} parent=5 // pred_region
        %s318 = ssub.s32 %s21, 1
        // Predicated region
        $region13: #{encoder_forward.1} parent=11 // pred_check
          %p319 = pneg %p68
        $region14: #{encoder_forward.1} parent=11 // pred_check_branch
          %321 = sbr.rel (%p319) target = $region16
        $region15: #{encoder_forward.1} parent=11 // pred_region
          _
        $region16: #{encoder_forward.1} parent=11 // pred_fallthru
          _
        // Predicated region
        $region17: #{encoder_forward.1} parent=11 // pred_check
          %p322 = pneg %p89
        $region18: #{encoder_forward.1} parent=11 // pred_check_branch
          %324 = sbr.rel (%p322) target = $region20
        $region19: #{encoder_forward.1} parent=11 // pred_region
          _
        $region20: #{encoder_forward.1} parent=11 // pred_fallthru
          _
        // Predicated region
        $region21: #{encoder_forward.1} parent=11 // pred_check
          %p325 = pneg %p110
        $region22: #{encoder_forward.1} parent=11 // pred_check_branch
          %327 = sbr.rel (%p325) target = $region24
        $region23: #{encoder_forward.1} parent=11 // pred_region
          _
        $region24: #{encoder_forward.1} parent=11 // pred_fallthru
          _
        // Predicated region
        $region25: #{encoder_forward.1} parent=11 // pred_check
          %p328 = pneg %p131
        $region26: #{encoder_forward.1} parent=11 // pred_check_branch
          %330 = sbr.rel (%p328) target = $region28
        $region27: #{encoder_forward.1} parent=11 // pred_region
          _
        $region28: #{encoder_forward.1} parent=11 // pred_fallthru
          _
        // Predicated region
        $region29: #{encoder_forward.1} parent=11 // pred_check
          %p331 = pneg %p152
        $region30: #{encoder_forward.1} parent=11 // pred_check_branch
          %333 = sbr.rel (%p331) target = $region32
        $region31: #{encoder_forward.1} parent=11 // pred_region
          _
        $region32: #{encoder_forward.1} parent=11 // pred_fallthru
          _
        // Predicated region
        $region33: #{encoder_forward.1} parent=11 // pred_check
          %p334 = pneg %p173
        $region34: #{encoder_forward.1} parent=11 // pred_check_branch
          %336 = sbr.rel (%p334) target = $region36
        $region35: #{encoder_forward.1} parent=11 // pred_region
          _
        $region36: #{encoder_forward.1} parent=11 // pred_fallthru
          _
        // Predicated region
        $region37: #{encoder_forward.1} parent=11 // pred_check
          %p337 = pneg %p194
        $region38: #{encoder_forward.1} parent=11 // pred_check_branch
          %339 = sbr.rel (%p337) target = $region40
        $region39: #{encoder_forward.1} parent=11 // pred_region
          _
        $region40: #{encoder_forward.1} parent=11 // pred_fallthru
          _
        // Predicated region
        $region41: #{encoder_forward.1} parent=11 // pred_check
          %p340 = pneg %p215
        $region42: #{encoder_forward.1} parent=11 // pred_check_branch
          %342 = sbr.rel (%p340) target = $region44
        $region43: #{encoder_forward.1} parent=11 // pred_region
          _
        $region44: #{encoder_forward.1} parent=11 // pred_fallthru
          _
        // Predicated region
        $region45: #{encoder_forward.1} parent=11 // pred_check
          %p343 = pneg %p236
        $region46: #{encoder_forward.1} parent=11 // pred_check_branch
          %345 = sbr.rel (%p343) target = $region48
        $region47: #{encoder_forward.1} parent=11 // pred_region
          _
        $region48: #{encoder_forward.1} parent=11 // pred_fallthru
          _
        // Predicated region
        $region49: #{encoder_forward.1} parent=11 // pred_check
          %p346 = pneg %p257
        $region50: #{encoder_forward.1} parent=11 // pred_check_branch
          %348 = sbr.rel (%p346) target = $region52
        $region51: #{encoder_forward.1} parent=11 // pred_region
          _
        $region52: #{encoder_forward.1} parent=11 // pred_fallthru
          _
        // Predicated region
        $region53: #{encoder_forward.1} parent=11 // pred_check
          %p349 = pneg %p278
        $region54: #{encoder_forward.1} parent=11 // pred_check_branch
          %351 = sbr.rel (%p349) target = $region56
        $region55: #{encoder_forward.1} parent=11 // pred_region
          _
        $region56: #{encoder_forward.1} parent=11 // pred_fallthru
          _
      $region12: #{encoder_forward.1} parent=5 // pred_fallthru
        _
      %p352 = scmp.lt.s32.totalorder %s21, 2
      // Predicated region
      $region57: #{encoder_forward.1} parent=5 // pred_check
        %p353 = pneg %p352
      $region58: #{encoder_forward.1} parent=5 // pred_check_branch
        %355 = sbr.rel (%p353) target = $region60
      $region59: #{encoder_forward.1} parent=5 // pred_region
        // Predicated region
        $region61: #{encoder_forward.1} parent=59 // pred_check
          %p356 = pneg %p41
        $region62: #{encoder_forward.1} parent=59 // pred_check_branch
          %358 = sbr.rel (%p356) target = $region64
        $region63: #{encoder_forward.1} parent=59 // pred_region
          %p359 = scmp.lt.s32.totalorder %s21, 1
          %s360 = scalar_select %p359, %s21, 1
          %s361 = smul.addr %s360, 2
          %s362 = smul.addr %s361, 8
          %s363 = scalar_lea.vmem %s0, %s362
        $region64: #{encoder_forward.1} parent=59 // pred_fallthru
          _
      $region60: #{encoder_forward.1} parent=5 // pred_fallthru
        _
      %p364 = scmp.le.s32.totalorder 1, %s21
      %p365 = scmp.lt.s32.totalorder %s21, 3
      %p366 = pnand %p364, %p365
      %p367 = pneg %p366
      // Predicated region
      $region65: #{encoder_forward.1} parent=5 // pred_check
        _
      $region66: #{encoder_forward.1} parent=5 // pred_check_branch
        %369 = sbr.rel (%p366) target = $region68
      $region67: #{encoder_forward.1} parent=5 // pred_region
        %s370 = ssub.s32 %s21, 1
        %p371 = scmp.lt.s32.totalorder %s26, 1
        %s372 = scalar_select %p371, %s26, 1
        %s373 = smul.addr %s372, 2
        %s374 = smul.addr %s373, 8
        %s375 = scalar_lea.vmem %s0, %s374
        %p376 = pneg %p47
        %p377 = pneg %p44
        %p378 = pneg %p68
        %p379 = pneg %p65
        %p380 = pneg %p89
        %p381 = pneg %p86
        %p382 = pneg %p110
        %p383 = pneg %p107
        %p384 = pneg %p131
        %p385 = pneg %p128
        %p386 = pneg %p152
        %p387 = pneg %p149
        %p388 = pneg %p173
        %p389 = pneg %p170
        %p390 = pneg %p194
        %p391 = pneg %p191
        %p392 = pneg %p215
        %p393 = pneg %p212
        %p394 = pneg %p236
        %p395 = pneg %p233
        %p396 = pneg %p257
        %p397 = pneg %p254
        %p398 = pneg %p278
        %p399 = pneg %p275
        %p400 = pneg %p304
        %p401 = pneg %p301
        %s402 = sand.u32 %s291, 1
        %s403 = scalar_lea.sflag [#allocation5], %s402
        %s404 = sand.u32 %s291, 1
        %s405 = smul.addr %s404, 16
        %s406 = scalar_lea.vmem [#allocation4], %s405
        %p407 = scmp.lt.s32.totalorder %s26, 1
        %s408 = scalar_select %p407, %s26, 1
        %s409 = smul.addr %s408, 2
        %s410 = smul.addr %s409, 8
        %s411 = scalar_lea.vmem %s0, %s410
        %v412 = vld [vmem:[%s4] sm:$0xff]
        %v413 = vld [vmem:[%s4 + $0x8] sm:$0xff]
        %v414 = vld [vmem:[%s4 + $0x10] sm:$0x1]
        %v415 = vld [vmem:[%s5] sm:$0xf]
        %v416 = vld [vmem:[%s411] sm:$0xff]
        %v417 = vld [vmem:[%s411 + $0x8] sm:$0xff]
        %v418 = vld [vmem:[%s1] sm:$0x1]
        %v420 = vlaneseq
        %v421 = vshrl.u32 %v420, 7
        %v422 = vsub.s32 0, %v421
        %v423 = vrot.slane %v418, %v422
        %v425 = vsub.f32 %v416, %v423
        %v426 = vsub.f32 %v417, %v423
        %v427 = vld [vmem:[%s2] sm:$0x1]
        %v429 = vlaneseq
        %v430 = vshrl.u32 %v429, 7
        %v431 = vsub.s32 0, %v430
        %v432 = vrot.slane %v427, %v431
        %v434 = vmul.f32 %v425, %v432
        %v435 = vmul.f32 %v426, %v432
        %v436 = vld [vmem:[%s3] sm:$0xff]
        %v437 = vld [vmem:[%s3 + $0x8] sm:$0xff]
        %v438 = vld [vmem:[%s3 + $0x10] sm:$0xff]
        %v439 = vld [vmem:[%s3 + $0x18] sm:$0xff]
        %v440 = vld [vmem:[%s3 + $0x20] sm:$0xff]
        %v441 = vld [vmem:[%s3 + $0x28] sm:$0xff]
        %v442 = vlaneseq
        %v443 = vshrl.u32 %v442, 7
        %v444 = vsub.s32 0, %v443
        %v445 = vrot.slane %v415, %v444
        %vm446 = vcmask 392192
        %v448 = vsel %vm446, %v434, 0
        %v451 = vsel %vm446, %v435, 0
        %453 = vmatprep.subr.mxu0 0.0
        %454 = vmatpush1.msra.mxu0 0.0
        %455 = vmatprep.subr.mxu0 0.0
        %456 = vmatpush1.msra.mxu0 0.0
        %457 = vmatprep.subr.mxu0 0.0
        %458 = vmatpush1.msra.mxu0 0.0
        %459 = vmatprep.subr.mxu0 0.0
        %460 = vmatpush1.msra.mxu0 0.0
        %461 = vmatprep.subr.mxu0 0.0
        %462 = vmatpush1.msra.mxu0 0.0
        %463 = vmatprep.subr.mxu0 0.0
        %464 = vmatpush1.msra.mxu0 0.0
        %465 = vmatprep.subr.mxu0 0.0
        %466 = vmatpush1.msra.mxu0 0.0
        %467 = vmatprep.subr.mxu0 0.0
        %468 = vmatpush1.msra.mxu0 0.0
        %469 = vmatprep.subr.mxu0 0.0
        %470 = vmatpush1.msra.mxu0 0.0
        %471 = vmatprep.subr.mxu0 0.0
        %472 = vmatpush1.msra.mxu0 0.0
        %473 = vmatprep.subr.mxu0 0.0
        %474 = vmatpush1.msra.mxu0 %v441
        %475 = vmatprep.subr.mxu0 0.0
        %476 = vmatpush1.msra.mxu0 %v440
        %477 = vmatprep.subr.mxu0 0.0
        %478 = vmatpush1.msra.mxu0 %v439
        %479 = vmatprep.subr.mxu0 0.0
        %480 = vmatpush1.msra.mxu0 %v438
        %481 = vmatprep.subr.mxu0 0.0
        %482 = vmatpush1.msra.mxu0 %v437
        %483 = vmatprep.subr.mxu0 0.0
        %484 = vmatpush1.msra.mxu0 %v436
        %485 = vmatprep.subr.mxu0 0.0
        %486 = vmatpush2.msra.mxu0 0.0
        %487 = vmatprep.subr.mxu0 0.0
        %488 = vmatpush2.msra.mxu0 0.0
        %489 = vmatprep.subr.mxu0 0.0
        %490 = vmatpush2.msra.mxu0 0.0
        %491 = vmatprep.subr.mxu0 0.0
        %492 = vmatpush2.msra.mxu0 0.0
        %493 = vmatprep.subr.mxu0 0.0
        %494 = vmatpush2.msra.mxu0 0.0
        %495 = vmatprep.subr.mxu0 0.0
        %496 = vmatpush2.msra.mxu0 0.0
        %497 = vmatprep.subr.mxu0 0.0
        %498 = vmatpush2.msra.mxu0 0.0
        %499 = vmatprep.subr.mxu0 0.0
        %500 = vmatpush2.msra.mxu0 0.0
        %501 = vmatprep.subr.mxu0 0.0
        %502 = vmatpush2.msra.mxu0 0.0
        %503 = vmatprep.subr.mxu0 0.0
        %504 = vmatpush2.msra.mxu0 0.0
        %505 = vmatprep.subr.mxu0 0.0
        %506 = vmatpush2.msra.mxu0 0.0
        %507 = vmatprep.subr.mxu0 0.0
        %508 = vmatpush2.msra.mxu0 0.0
        %509 = vmatprep.subr.mxu0 0.0
        %510 = vmatpush2.msra.mxu0 0.0
        %511 = vmatprep.subr.mxu0 0.0
        %512 = vmatpush2.msra.mxu0 0.0
        %513 = vmatprep.subr.mxu0 0.0
        %514 = vmatpush2.msra.mxu0 0.0
        %515 = vmatprep.subr.mxu0 0.0
        %516 = vmatpush2.msra.mxu0 0.0
        %517 = vmatprep.mubr.f32.mxu0 0.0
        %518 = vmatmul.mubr.f32.gmra.mxu0 %v448
        %v519 = vpop.f32.mrf.mxu0
        %v520 = vadd.f32 %v445, %v519
        %v521 = vpop.f32.mrf.mxu0
        %522 = vmatprep.mubr.f32.mxu0 0.0
        %523 = vmatmul.mubr.f32.gmra.mxu0 %v451
        %v524 = vpop.f32.mrf.mxu0
        %v525 = vadd.f32 %v445, %v524
        %v526 = vpop.f32.mrf.mxu0
        %527 = vdwg.mxu0
        %v529 = vrot.slane %v412, 7
        %v531 = vadd.f32 %v415, %v529
        %vm532 = vcmask 254977
        %533 = vst.msk [vmem:[#allocation2 - $0x1] sm:$0x2] %vm532, %v531
        %vm536 = vcmask 1046528
        %v537 = vrot.slane %v412, 1
        %v538 = vrot.slane %v413, 1
        %v539 = vsel %vm536, %v537, %v538
        %v540 = vrot.slane %v414, 1
        %v541 = vsel %vm536, %v538, %v540
        %v544 = vadd.f32 %v520, %v539
        %v545 = vadd.f32 %v525, %v541
        %vm546 = vcmask 261120
        %547 = vst.msk [vmem:[#allocation2 + $0x1] sm:$0xff] %vm546, %v544
        %548 = vst.msk [vmem:[#allocation2 + $0x9] sm:$0xff] %vm546, %v545
        %v549 = vld [vmem:[#allocation2] sm:$0xff]
        %v550 = vld [vmem:[#allocation2 + $0x8] sm:$0xff]
        %v551 = vld [vmem:[#allocation2 + $0x10] sm:$0x1]
        %v552 = vld [vmem:[%s6] sm:$0xff]
        %v553 = vld [vmem:[%s6 + $0x8] sm:$0x1]
        %v554 = vsel %vm546, %v549, 0.0
        %555 = vadd.xlane.f32.xlu0 %v554
        %v556 = vpop.xlane.xlu0 %555
        %v557 = vsel %vm546, %v550, 0.0
        %558 = vadd.xlane.f32.xlu0 %v557
        %v559 = vpop.xlane.xlu0 %558
        %vm560 = vcmask 253952
        %v561 = vsel %vm560, %v551, 0.0
        %562 = vadd.xlane.f32.xlu0 %v561
        %v563 = vpop.xlane.xlu0 %562
        %v564 = vrcp.pop 32.0
        %v565 = vmul.f32 %v556, %v564
        %v566 = vmul.f32 %v559, %v564
        %v567 = vmul.f32 %v563, %v564
        %v568 = vsub.f32 %v549, %v565
        %v569 = vsub.f32 %v550, %v566
        %v570 = vsub.f32 %v551, %v567
        %v571 = vmul.f32 %v568, %v568
        %v572 = vmul.f32 %v569, %v569
        %v573 = vmul.f32 %v570, %v570
        %v574 = vsel %vm546, %v571, 0.0
        %575 = vadd.xlane.f32.xlu0 %v574
        %v576 = vpop.xlane.xlu0 %575
        %v577 = vsel %vm546, %v572, 0.0
        %578 = vadd.xlane.f32.xlu0 %v577
        %v579 = vpop.xlane.xlu0 %578
        %v580 = vsel %vm560, %v573, 0.0
        %581 = vadd.xlane.f32.xlu0 %v580
        %v582 = vpop.xlane.xlu0 %581
        %v583 = vmul.f32 %v576, %v564
        %v584 = vmul.f32 %v579, %v564
        %v585 = vmul.f32 %v582, %v564
        %v586 = vadd.f32 %v583, 1e-06
        %v587 = vadd.f32 %v584, 1e-06
        %v588 = vadd.f32 %v585, 1e-06
        %v589 = vrsqrt.pop %v586
        %v590 = vrsqrt.pop %v587
        %v591 = vrsqrt.pop %v588
        %v592 = vmul.f32 %v568, %v589
        %v593 = vmul.f32 %v569, %v590
        %v594 = vmul.f32 %v570, %v591
        %v595 = vlaneseq
        %v596 = vshrl.u32 %v595, 7
        %v597 = vsub.s32 0, %v596
        %v598 = vrot.slane %v552, %v597
        %v599 = vmul.f32 %v592, %v598
        %v600 = vmul.f32 %v593, %v598
        %v601 = vmul.f32 %v594, %v598
        %v602 = vlaneseq
        %v603 = vshrl.u32 %v602, 7
        %v604 = vsub.s32 1, %v603
        %v605 = vrot.slane %v552, %v604
        %v606 = vadd.f32 %v599, %v605
        %v607 = vadd.f32 %v600, %v605
        %v608 = vadd.f32 %v601, %v605
        %v609 = vld [vmem:[%s7] sm:$0xff]
        %v610 = vld [vmem:[%s7 + $0x8] sm:$0xff]
        %v611 = vld [vmem:[%s7 + $0x10] sm:$0xff]
        %v612 = vld [vmem:[%s7 + $0x18] sm:$0xff]
        %v614 = vsel %vm546, %v606, 0
        %v617 = vsel %vm546, %v607, 0
        %v620 = vsel %vm546, %v608, 0
        %622 = vmatprep.subr.mxu0 0.0
        %623 = vmatpush1.msra.mxu0 0.0
        %624 = vmatprep.subr.mxu0 0.0
        %625 = vmatpush1.msra.mxu0 0.0
        %626 = vmatprep.subr.mxu0 0.0
        %627 = vmatpush1.msra.mxu0 0.0
        %628 = vmatprep.subr.mxu0 0.0
        %629 = vmatpush1.msra.mxu0 0.0
        %630 = vmatprep.subr.mxu0 0.0
        %631 = vmatpush1.msra.mxu0 0.0
        %632 = vmatprep.subr.mxu0 0.0
        %633 = vmatpush1.msra.mxu0 0.0
        %634 = vmatprep.subr.mxu0 0.0
        %635 = vmatpush1.msra.mxu0 0.0
        %636 = vmatprep.subr.mxu0 0.0
        %637 = vmatpush1.msra.mxu0 0.0
        %638 = vmatprep.subr.mxu0 0.0
        %639 = vmatpush1.msra.mxu0 0.0
        %640 = vmatprep.subr.mxu0 0.0
        %641 = vmatpush1.msra.mxu0 0.0
        %642 = vmatprep.subr.mxu0 0.0
        %643 = vmatpush1.msra.mxu0 0.0
        %644 = vmatprep.subr.mxu0 0.0
        %645 = vmatpush1.msra.mxu0 0.0
        %646 = vmatprep.subr.mxu0 0.0
        %647 = vmatpush1.msra.mxu0 %v612
        %648 = vmatprep.subr.mxu0 0.0
        %649 = vmatpush1.msra.mxu0 %v611
        %650 = vmatprep.subr.mxu0 0.0
        %651 = vmatpush1.msra.mxu0 %v610
        %652 = vmatprep.subr.mxu0 0.0
        %653 = vmatpush1.msra.mxu0 %v609
        %654 = vmatprep.subr.mxu0 0.0
        %655 = vmatpush2.msra.mxu0 0.0
        %656 = vmatprep.subr.mxu0 0.0
        %657 = vmatpush2.msra.mxu0 0.0
        %658 = vmatprep.subr.mxu0 0.0
        %659 = vmatpush2.msra.mxu0 0.0
        %660 = vmatprep.subr.mxu0 0.0
        %661 = vmatpush2.msra.mxu0 0.0
        %662 = vmatprep.subr.mxu0 0.0
        %663 = vmatpush2.msra.mxu0 0.0
        %664 = vmatprep.subr.mxu0 0.0
        %665 = vmatpush2.msra.mxu0 0.0
        %666 = vmatprep.subr.mxu0 0.0
        %667 = vmatpush2.msra.mxu0 0.0
        %668 = vmatprep.subr.mxu0 0.0
        %669 = vmatpush2.msra.mxu0 0.0
        %670 = vmatprep.subr.mxu0 0.0
        %671 = vmatpush2.msra.mxu0 0.0
        %672 = vmatprep.subr.mxu0 0.0
        %673 = vmatpush2.msra.mxu0 0.0
        %674 = vmatprep.subr.mxu0 0.0
        %675 = vmatpush2.msra.mxu0 0.0
        %676 = vmatprep.subr.mxu0 0.0
        %677 = vmatpush2.msra.mxu0 0.0
        %678 = vmatprep.subr.mxu0 0.0
        %679 = vmatpush2.msra.mxu0 0.0
        %680 = vmatprep.subr.mxu0 0.0
        %681 = vmatpush2.msra.mxu0 0.0
        %682 = vmatprep.subr.mxu0 0.0
        %683 = vmatpush2.msra.mxu0 0.0
        %684 = vmatprep.subr.mxu0 0.0
        %685 = vmatpush2.msra.mxu0 0.0
        %686 = vmatprep.mubr.f32.mxu0 0.0
        %687 = vmatmul.mubr.f32.gmra.mxu0 %v614
        %v688 = vpop.f32.mrf.mxu0
        %v689 = vadd.f32 0.0, %v688
        %v690 = vpop.f32.mrf.mxu0
        %691 = vmatprep.mubr.f32.mxu0 0.0
        %692 = vmatmul.mubr.f32.gmra.mxu0 %v617
        %v693 = vpop.f32.mrf.mxu0
        %v694 = vadd.f32 0.0, %v693
        %v695 = vpop.f32.mrf.mxu0
        %696 = vmatprep.mubr.f32.mxu0 0.0
        %697 = vmatmul.mubr.f32.gmra.mxu0 %v620
        %v698 = vpop.f32.mrf.mxu0
        %v699 = vadd.f32 0.0, %v698
        %v700 = vpop.f32.mrf.mxu0
        %701 = vdwg.mxu0
        %v702 = vlaneseq
        %v703 = vshrl.u32 %v702, 7
        %v704 = vsub.s32 2, %v703
        %v705 = vrot.slane %v552, %v704
        %v706 = vadd.f32 %v689, %v705
        %v707 = vadd.f32 %v694, %v705
        %v708 = vadd.f32 %v699, %v705
        %v709 = vlaneseq
        %v710 = vshrl.u32 %v709, 7
        %v711 = vsub.s32 3, %v710
        %v712 = vrot.slane %v552, %v711
        %714 = vrot.lane.b32.xlu0 %v712, 32
        %v715 = vpop.permute.xlu0 %714
        %v717 = vadd.f32 %v689, %v715
        %v718 = vadd.f32 %v694, %v715
        %v719 = vadd.f32 %v699, %v715
        %v720 = vlaneseq
        %v721 = vshrl.u32 %v720, 7
        %v722 = vsub.s32 4, %v721
        %v723 = vrot.slane %v552, %v722
        %725 = vrot.lane.b32.xlu0 %v723, 64
        %v726 = vpop.permute.xlu0 %725
        %v728 = vadd.f32 %v689, %v726
        %v729 = vadd.f32 %v694, %v726
        %v730 = vadd.f32 %v699, %v726
        %734 = vrot.lane.b32.xlu0 %v717, 96
        %v735 = vpop.permute.xlu0 %734
        %736 = vrot.lane.b32.xlu0 %v718, 96
        %v737 = vpop.permute.xlu0 %736
        %738 = vrot.lane.b32.xlu0 %v719, 96
        %v739 = vpop.permute.xlu0 %738
        %vm740 = vcmask 64512
        %v742 = vsel %vm740, %v706, 0
        %v745 = vsel %vm740, %v707, 0
        %v748 = vsel %vm740, %v708, 0
        %v750 = vsel %vm740, %v735, 0
        %v752 = vsel %vm740, %v737, 0
        %v754 = vsel %vm740, %v739, 0
        %756 = vmatprep.subr.mxu0 0.0
        %757 = vmatpush1.xpose.msra.mxu0 0.0
        %758 = vmatprep.subr.mxu0 0.0
        %759 = vmatpush1.xpose.msra.mxu0 0.0
        %760 = vmatprep.subr.mxu0 0.0
        %761 = vmatpush1.xpose.msra.mxu0 0.0
        %762 = vmatprep.subr.mxu0 0.0
        %763 = vmatpush1.xpose.msra.mxu0 0.0
        %764 = vmatprep.subr.mxu0 0.0
        %765 = vmatpush1.xpose.msra.mxu0 0.0
        %766 = vmatprep.subr.mxu0 0.0
        %767 = vmatpush1.xpose.msra.mxu0 0.0
        %768 = vmatprep.subr.mxu0 0.0
        %769 = vmatpush1.xpose.msra.mxu0 0.0
        %770 = vmatprep.subr.mxu0 0.0
        %771 = vmatpush1.xpose.msra.mxu0 0.0
        %772 = vmatprep.subr.mxu0 0.0
        %773 = vmatpush1.xpose.msra.mxu0 0.0
        %774 = vmatprep.subr.mxu0 0.0
        %775 = vmatpush1.xpose.msra.mxu0 0.0
        %776 = vmatprep.subr.mxu0 0.0
        %777 = vmatpush1.xpose.msra.mxu0 0.0
        %778 = vmatprep.subr.mxu0 0.0
        %779 = vmatpush1.xpose.msra.mxu0 0.0
        %780 = vmatprep.subr.mxu0 0.0
        %781 = vmatpush1.xpose.msra.mxu0 0.0
        %782 = vmatprep.subr.mxu0 0.0
        %783 = vmatpush1.xpose.msra.mxu0 %v754
        %784 = vmatprep.subr.mxu0 0.0
        %785 = vmatpush1.xpose.msra.mxu0 %v752
        %786 = vmatprep.subr.mxu0 0.0
        %787 = vmatpush1.xpose.msra.mxu0 %v750
        %788 = vmatprep.subr.mxu0 0.0
        %789 = vmatpush2.xpose.msra.mxu0 0.0
        %790 = vmatprep.subr.mxu0 0.0
        %791 = vmatpush2.xpose.msra.mxu0 0.0
        %792 = vmatprep.subr.mxu0 0.0
        %793 = vmatpush2.xpose.msra.mxu0 0.0
        %794 = vmatprep.subr.mxu0 0.0
        %795 = vmatpush2.xpose.msra.mxu0 0.0
        %796 = vmatprep.subr.mxu0 0.0
        %797 = vmatpush2.xpose.msra.mxu0 0.0
        %798 = vmatprep.subr.mxu0 0.0
        %799 = vmatpush2.xpose.msra.mxu0 0.0
        %800 = vmatprep.subr.mxu0 0.0
        %801 = vmatpush2.xpose.msra.mxu0 0.0
        %802 = vmatprep.subr.mxu0 0.0
        %803 = vmatpush2.xpose.msra.mxu0 0.0
        %804 = vmatprep.subr.mxu0 0.0
        %805 = vmatpush2.xpose.msra.mxu0 0.0
        %806 = vmatprep.subr.mxu0 0.0
        %807 = vmatpush2.xpose.msra.mxu0 0.0
        %808 = vmatprep.subr.mxu0 0.0
        %809 = vmatpush2.xpose.msra.mxu0 0.0
        %810 = vmatprep.subr.mxu0 0.0
        %811 = vmatpush2.xpose.msra.mxu0 0.0
        %812 = vmatprep.subr.mxu0 0.0
        %813 = vmatpush2.xpose.msra.mxu0 0.0
        %814 = vmatprep.subr.mxu0 0.0
        %815 = vmatpush2.xpose.msra.mxu0 0.0
        %816 = vmatprep.subr.mxu0 0.0
        %817 = vmatpush2.xpose.msra.mxu0 0.0
        %818 = vmatprep.subr.mxu0 0.0
        %819 = vmatpush2.xpose.msra.mxu0 0.0
        %820 = vmatprep.mubr.f32.mxu0 0.0
        %821 = vmatmul.mubr.f32.gmra.mxu0 %v742
        %v822 = vpop.f32.mrf.mxu0
        %v823 = vadd.f32 0.0, %v822
        %v824 = vpop.f32.mrf.mxu0
        %825 = vmatprep.mubr.f32.mxu0 0.0
        %826 = vmatmul.mubr.f32.gmra.mxu0 %v745
        %v827 = vpop.f32.mrf.mxu0
        %v828 = vadd.f32 0.0, %v827
        %v829 = vpop.f32.mrf.mxu0
        %830 = vmatprep.mubr.f32.mxu0 0.0
        %831 = vmatmul.mubr.f32.gmra.mxu0 %v748
        %v832 = vpop.f32.mrf.mxu0
        %v833 = vadd.f32 0.0, %v832
        %v834 = vpop.f32.mrf.mxu0
        %835 = vdwg.mxu0
        %v836 = vmul.f32 %v823, 0.35355338
        %v837 = vmul.f32 %v828, 0.35355338
        %v838 = vmul.f32 %v833, 0.35355338
        %vm839 = vcmask 138240
        %v840 = vsel %vm839, %v836, -inf
        %841 = vmax.xlane.f32.xlu0 %v840
        %v842 = vpop.xlane.xlu0 %841
        %v843 = vsel %vm839, %v837, -inf
        %844 = vmax.xlane.f32.xlu0 %v843
        %v845 = vpop.xlane.xlu0 %844
        %vm846 = vcmask 131072
        %v847 = vsel %vm846, %v838, -inf
        %848 = vmax.xlane.f32.xlu0 %v847
        %v849 = vpop.xlane.xlu0 %848
        %v850 = vsub.f32 %v836, %v842
        %v851 = vsub.f32 %v837, %v845
        %v852 = vsub.f32 %v838, %v849
        %v853 = vmul.f32 %v850, 1.442695
        %v854 = vpow.pop %v853
        %v855 = vmul.f32 %v851, 1.442695
        %v856 = vpow.pop %v855
        %v857 = vmul.f32 %v852, 1.442695
        %v858 = vpow.pop %v857
        %v859 = vsel %vm839, %v854, 0.0
        %860 = vadd.xlane.f32.xlu0 %v859
        %v861 = vpop.xlane.xlu0 %860
        %v862 = vsel %vm839, %v856, 0.0
        %863 = vadd.xlane.f32.xlu0 %v862
        %v864 = vpop.xlane.xlu0 %863
        %v865 = vsel %vm846, %v858, 0.0
        %866 = vadd.xlane.f32.xlu0 %v865
        %v867 = vpop.xlane.xlu0 %866
        %v868 = vrcp.pop %v861
        %v869 = vrcp.pop %v864
        %v870 = vrcp.pop %v867
        %v871 = vmul.f32 %v854, %v868
        %v872 = vmul.f32 %v856, %v869
        %v873 = vmul.f32 %v858, %v870
        %877 = vrot.lane.b32.xlu0 %v728, 64
        %v878 = vpop.permute.xlu0 %877
        %879 = vrot.lane.b32.xlu0 %v729, 64
        %v880 = vpop.permute.xlu0 %879
        %881 = vrot.lane.b32.xlu0 %v730, 64
        %v882 = vpop.permute.xlu0 %881
        %v886 = vsel %vm839, %v871, 0
        %v889 = vsel %vm839, %v872, 0
        %v892 = vsel %vm839, %v873, 0
        %vm894 = vcmask 1040384
        %v895 = vsel %vm894, %v882, 0
        %897 = vmatprep.subr.mxu0 0.0
        %898 = vmatpush1.msra.mxu0 0.0
        %899 = vmatprep.subr.mxu0 0.0
        %900 = vmatpush1.msra.mxu0 0.0
        %901 = vmatprep.subr.mxu0 0.0
        %902 = vmatpush1.msra.mxu0 0.0
        %903 = vmatprep.subr.mxu0 0.0
        %904 = vmatpush1.msra.mxu0 0.0
        %905 = vmatprep.subr.mxu0 0.0
        %906 = vmatpush1.msra.mxu0 0.0
        %907 = vmatprep.subr.mxu0 0.0
        %908 = vmatpush1.msra.mxu0 0.0
        %909 = vmatprep.subr.mxu0 0.0
        %910 = vmatpush1.msra.mxu0 0.0
        %911 = vmatprep.subr.mxu0 0.0
        %912 = vmatpush1.msra.mxu0 0.0
        %913 = vmatprep.subr.mxu0 0.0
        %914 = vmatpush1.msra.mxu0 0.0
        %915 = vmatprep.subr.mxu0 0.0
        %916 = vmatpush1.msra.mxu0 0.0
        %917 = vmatprep.subr.mxu0 0.0
        %918 = vmatpush1.msra.mxu0 0.0
        %919 = vmatprep.subr.mxu0 0.0
        %920 = vmatpush1.msra.mxu0 0.0
        %921 = vmatprep.subr.mxu0 0.0
        %922 = vmatpush1.msra.mxu0 0.0
        %923 = vmatprep.subr.mxu0 0.0
        %924 = vmatpush1.msra.mxu0 %v895
        %925 = vmatprep.subr.mxu0 0.0
        %926 = vmatpush1.msra.mxu0 %v880
        %927 = vmatprep.subr.mxu0 0.0
        %928 = vmatpush1.msra.mxu0 %v878
        %929 = vmatprep.subr.mxu0 0.0
        %930 = vmatpush2.msra.mxu0 0.0
        %931 = vmatprep.subr.mxu0 0.0
        %932 = vmatpush2.msra.mxu0 0.0
        %933 = vmatprep.subr.mxu0 0.0
        %934 = vmatpush2.msra.mxu0 0.0
        %935 = vmatprep.subr.mxu0 0.0
        %936 = vmatpush2.msra.mxu0 0.0
        %937 = vmatprep.subr.mxu0 0.0
        %938 = vmatpush2.msra.mxu0 0.0
        %939 = vmatprep.subr.mxu0 0.0
        %940 = vmatpush2.msra.mxu0 0.0
        %941 = vmatprep.subr.mxu0 0.0
        %942 = vmatpush2.msra.mxu0 0.0
        %943 = vmatprep.subr.mxu0 0.0
        %944 = vmatpush2.msra.mxu0 0.0
        %945 = vmatprep.subr.mxu0 0.0
        %946 = vmatpush2.msra.mxu0 0.0
        %947 = vmatprep.subr.mxu0 0.0
        %948 = vmatpush2.msra.mxu0 0.0
        %949 = vmatprep.subr.mxu0 0.0
        %950 = vmatpush2.msra.mxu0 0.0
        %951 = vmatprep.subr.mxu0 0.0
        %952 = vmatpush2.msra.mxu0 0.0
        %953 = vmatprep.subr.mxu0 0.0
        %954 = vmatpush2.msra.mxu0 0.0
        %955 = vmatprep.subr.mxu0 0.0
        %956 = vmatpush2.msra.mxu0 0.0
        %957 = vmatprep.subr.mxu0 0.0
        %958 = vmatpush2.msra.mxu0 0.0
        %959 = vmatprep.subr.mxu0 0.0
        %960 = vmatpush2.msra.mxu0 0.0
        %961 = vmatprep.mubr.f32.mxu0 0.0
        %962 = vmatmul.mubr.f32.gmra.mxu0 %v886
        %v963 = vpop.f32.mrf.mxu0
        %v964 = vadd.f32 0.0, %v963
        %v965 = vpop.f32.mrf.mxu0
        %966 = vmatprep.mubr.f32.mxu0 0.0
        %967 = vmatmul.mubr.f32.gmra.mxu0 %v889
        %v968 = vpop.f32.mrf.mxu0
        %v969 = vadd.f32 0.0, %v968
        %v970 = vpop.f32.mrf.mxu0
        %971 = vmatprep.mubr.f32.mxu0 0.0
        %972 = vmatmul.mubr.f32.gmra.mxu0 %v892
        %v973 = vpop.f32.mrf.mxu0
        %v974 = vadd.f32 0.0, %v973
        %v975 = vpop.f32.mrf.mxu0
        %976 = vdwg.mxu0
        %977 = vst.msk [vmem:[#allocation3] sm:$0xff] %vm740, %v964
        %978 = vst.msk [vmem:[#allocation3 + $0x8] sm:$0xff] %vm740, %v969
        %vm979 = vcmask 57344
        %980 = vst.msk [vmem:[#allocation3 + $0x10] sm:$0x1] %vm979, %v974
        %981 = vrot.lane.b32.xlu0 %v706, 120
        %v982 = vpop.permute.xlu0 %981
        %983 = vrot.lane.b32.xlu0 %v707, 120
        %v984 = vpop.permute.xlu0 %983
        %985 = vrot.lane.b32.xlu0 %v708, 120
        %v986 = vpop.permute.xlu0 %985
        %987 = vrot.lane.b32.xlu0 %v717, 88
        %v988 = vpop.permute.xlu0 %987
        %989 = vrot.lane.b32.xlu0 %v718, 88
        %v990 = vpop.permute.xlu0 %989
        %991 = vrot.lane.b32.xlu0 %v719, 88
        %v992 = vpop.permute.xlu0 %991
        %v993 = vsel %vm740, %v982, 0
        %v995 = vsel %vm740, %v984, 0
        %v997 = vsel %vm740, %v986, 0
        %v999 = vsel %vm740, %v988, 0
        %v1001 = vsel %vm740, %v990, 0
        %v1003 = vsel %vm740, %v992, 0
        %1005 = vmatprep.subr.mxu0 0.0
        %1006 = vmatpush1.xpose.msra.mxu0 0.0
        %1007 = vmatprep.subr.mxu0 0.0
        %1008 = vmatpush1.xpose.msra.mxu0 0.0
        %1009 = vmatprep.subr.mxu0 0.0
        %1010 = vmatpush1.xpose.msra.mxu0 0.0
        %1011 = vmatprep.subr.mxu0 0.0
        %1012 = vmatpush1.xpose.msra.mxu0 0.0
        %1013 = vmatprep.subr.mxu0 0.0
        %1014 = vmatpush1.xpose.msra.mxu0 0.0
        %1015 = vmatprep.subr.mxu0 0.0
        %1016 = vmatpush1.xpose.msra.mxu0 0.0
        %1017 = vmatprep.subr.mxu0 0.0
        %1018 = vmatpush1.xpose.msra.mxu0 0.0
        %1019 = vmatprep.subr.mxu0 0.0
        %1020 = vmatpush1.xpose.msra.mxu0 0.0
        %1021 = vmatprep.subr.mxu0 0.0
        %1022 = vmatpush1.xpose.msra.mxu0 0.0
        %1023 = vmatprep.subr.mxu0 0.0
        %1024 = vmatpush1.xpose.msra.mxu0 0.0
        %1025 = vmatprep.subr.mxu0 0.0
        %1026 = vmatpush1.xpose.msra.mxu0 0.0
        %1027 = vmatprep.subr.mxu0 0.0
        %1028 = vmatpush1.xpose.msra.mxu0 0.0
        %1029 = vmatprep.subr.mxu0 0.0
        %1030 = vmatpush1.xpose.msra.mxu0 0.0
        %1031 = vmatprep.subr.mxu0 0.0
        %1032 = vmatpush1.xpose.msra.mxu0 %v1003
        %1033 = vmatprep.subr.mxu0 0.0
        %1034 = vmatpush1.xpose.msra.mxu0 %v1001
        %1035 = vmatprep.subr.mxu0 0.0
        %1036 = vmatpush1.xpose.msra.mxu0 %v999
        %1037 = vmatprep.subr.mxu0 0.0
        %1038 = vmatpush2.xpose.msra.mxu0 0.0
        %1039 = vmatprep.subr.mxu0 0.0
        %1040 = vmatpush2.xpose.msra.mxu0 0.0
        %1041 = vmatprep.subr.mxu0 0.0
        %1042 = vmatpush2.xpose.msra.mxu0 0.0
        %1043 = vmatprep.subr.mxu0 0.0
        %1044 = vmatpush2.xpose.msra.mxu0 0.0
        %1045 = vmatprep.subr.mxu0 0.0
        %1046 = vmatpush2.xpose.msra.mxu0 0.0
        %1047 = vmatprep.subr.mxu0 0.0
        %1048 = vmatpush2.xpose.msra.mxu0 0.0
        %1049 = vmatprep.subr.mxu0 0.0
        %1050 = vmatpush2.xpose.msra.mxu0 0.0
        %1051 = vmatprep.subr.mxu0 0.0
        %1052 = vmatpush2.xpose.msra.mxu0 0.0
        %1053 = vmatprep.subr.mxu0 0.0
        %1054 = vmatpush2.xpose.msra.mxu0 0.0
        %1055 = vmatprep.subr.mxu0 0.0
        %1056 = vmatpush2.xpose.msra.mxu0 0.0
        %1057 = vmatprep.subr.mxu0 0.0
        %1058 = vmatpush2.xpose.msra.mxu0 0.0
        %1059 = vmatprep.subr.mxu0 0.0
        %1060 = vmatpush2.xpose.msra.mxu0 0.0
        %1061 = vmatprep.subr.mxu0 0.0
        %1062 = vmatpush2.xpose.msra.mxu0 0.0
        %1063 = vmatprep.subr.mxu0 0.0
        %1064 = vmatpush2.xpose.msra.mxu0 0.0
        %1065 = vmatprep.subr.mxu0 0.0
        %1066 = vmatpush2.xpose.msra.mxu0 0.0
        %1067 = vmatprep.subr.mxu0 0.0
        %1068 = vmatpush2.xpose.msra.mxu0 0.0
        %1069 = vmatprep.mubr.f32.mxu0 0.0
        %1070 = vmatmul.mubr.f32.gmra.mxu0 %v993
        %v1071 = vpop.f32.mrf.mxu0
        %v1072 = vadd.f32 0.0, %v1071
        %v1073 = vpop.f32.mrf.mxu0
        %1074 = vmatprep.mubr.f32.mxu0 0.0
        %1075 = vmatmul.mubr.f32.gmra.mxu0 %v995
        %v1076 = vpop.f32.mrf.mxu0
        %v1077 = vadd.f32 0.0, %v1076
        %v1078 = vpop.f32.mrf.mxu0
        %1079 = vmatprep.mubr.f32.mxu0 0.0
        %1080 = vmatmul.mubr.f32.gmra.mxu0 %v997
        %v1081 = vpop.f32.mrf.mxu0
        %v1082 = vadd.f32 0.0, %v1081
        %v1083 = vpop.f32.mrf.mxu0
        %1084 = vdwg.mxu0
        %v1085 = vmul.f32 %v1072, 0.35355338
        %v1086 = vmul.f32 %v1077, 0.35355338
        %v1087 = vmul.f32 %v1082, 0.35355338
        %v1088 = vsel %vm839, %v1085, -inf
        %1089 = vmax.xlane.f32.xlu0 %v1088
        %v1090 = vpop.xlane.xlu0 %1089
        %v1091 = vsel %vm839, %v1086, -inf
        %1092 = vmax.xlane.f32.xlu0 %v1091
        %v1093 = vpop.xlane.xlu0 %1092
        %v1094 = vsel %vm846, %v1087, -inf
        %1095 = vmax.xlane.f32.xlu0 %v1094
        %v1096 = vpop.xlane.xlu0 %1095
        %v1097 = vsub.f32 %v1085, %v1090
        %v1098 = vsub.f32 %v1086, %v1093
        %v1099 = vsub.f32 %v1087, %v1096
        %v1100 = vmul.f32 %v1097, 1.442695
        %v1101 = vpow.pop %v1100
        %v1102 = vmul.f32 %v1098, 1.442695
        %v1103 = vpow.pop %v1102
        %v1104 = vmul.f32 %v1099, 1.442695
        %v1105 = vpow.pop %v1104
        %v1106 = vsel %vm839, %v1101, 0.0
        %1107 = vadd.xlane.f32.xlu0 %v1106
        %v1108 = vpop.xlane.xlu0 %1107
        %v1109 = vsel %vm839, %v1103, 0.0
        %1110 = vadd.xlane.f32.xlu0 %v1109
        %v1111 = vpop.xlane.xlu0 %1110
        %v1112 = vsel %vm846, %v1105, 0.0
        %1113 = vadd.xlane.f32.xlu0 %v1112
        %v1114 = vpop.xlane.xlu0 %1113
        %v1115 = vrcp.pop %v1108
        %v1116 = vrcp.pop %v1111
        %v1117 = vrcp.pop %v1114
        %v1118 = vmul.f32 %v1101, %v1115
        %v1119 = vmul.f32 %v1103, %v1116
        %v1120 = vmul.f32 %v1105, %v1117
        %1121 = vrot.lane.b32.xlu0 %v728, 56
        %v1122 = vpop.permute.xlu0 %1121
        %1123 = vrot.lane.b32.xlu0 %v729, 56
        %v1124 = vpop.permute.xlu0 %1123
        %1125 = vrot.lane.b32.xlu0 %v730, 56
        %v1126 = vpop.permute.xlu0 %1125
        %v1130 = vsel %vm839, %v1118, 0
        %v1133 = vsel %vm839, %v1119, 0
        %v1136 = vsel %vm839, %v1120, 0
        %v1138 = vsel %vm894, %v1126, 0
        %1140 = vmatprep.subr.mxu0 0.0
        %1141 = vmatpush1.msra.mxu0 0.0
        %1142 = vmatprep.subr.mxu0 0.0
        %1143 = vmatpush1.msra.mxu0 0.0
        %1144 = vmatprep.subr.mxu0 0.0
        %1145 = vmatpush1.msra.mxu0 0.0
        %1146 = vmatprep.subr.mxu0 0.0
        %1147 = vmatpush1.msra.mxu0 0.0
        %1148 = vmatprep.subr.mxu0 0.0
        %1149 = vmatpush1.msra.mxu0 0.0
        %1150 = vmatprep.subr.mxu0 0.0
        %1151 = vmatpush1.msra.mxu0 0.0
        %1152 = vmatprep.subr.mxu0 0.0
        %1153 = vmatpush1.msra.mxu0 0.0
        %1154 = vmatprep.subr.mxu0 0.0
        %1155 = vmatpush1.msra.mxu0 0.0
        %1156 = vmatprep.subr.mxu0 0.0
        %1157 = vmatpush1.msra.mxu0 0.0
        %1158 = vmatprep.subr.mxu0 0.0
        %1159 = vmatpush1.msra.mxu0 0.0
        %1160 = vmatprep.subr.mxu0 0.0
        %1161 = vmatpush1.msra.mxu0 0.0
        %1162 = vmatprep.subr.mxu0 0.0
        %1163 = vmatpush1.msra.mxu0 0.0
        %1164 = vmatprep.subr.mxu0 0.0
        %1165 = vmatpush1.msra.mxu0 0.0
        %1166 = vmatprep.subr.mxu0 0.0
        %1167 = vmatpush1.msra.mxu0 %v1138
        %1168 = vmatprep.subr.mxu0 0.0
        %1169 = vmatpush1.msra.mxu0 %v1124
        %1170 = vmatprep.subr.mxu0 0.0
        %1171 = vmatpush1.msra.mxu0 %v1122
        %1172 = vmatprep.subr.mxu0 0.0
        %1173 = vmatpush2.msra.mxu0 0.0
        %1174 = vmatprep.subr.mxu0 0.0
        %1175 = vmatpush2.msra.mxu0 0.0
        %1176 = vmatprep.subr.mxu0 0.0
        %1177 = vmatpush2.msra.mxu0 0.0
        %1178 = vmatprep.subr.mxu0 0.0
        %1179 = vmatpush2.msra.mxu0 0.0
        %1180 = vmatprep.subr.mxu0 0.0
        %1181 = vmatpush2.msra.mxu0 0.0
        %1182 = vmatprep.subr.mxu0 0.0
        %1183 = vmatpush2.msra.mxu0 0.0
        %1184 = vmatprep.subr.mxu0 0.0
        %1185 = vmatpush2.msra.mxu0 0.0
        %1186 = vmatprep.subr.mxu0 0.0
        %1187 = vmatpush2.msra.mxu0 0.0
        %1188 = vmatprep.subr.mxu0 0.0
        %1189 = vmatpush2.msra.mxu0 0.0
        %1190 = vmatprep.subr.mxu0 0.0
        %1191 = vmatpush2.msra.mxu0 0.0
        %1192 = vmatprep.subr.mxu0 0.0
        %1193 = vmatpush2.msra.mxu0 0.0
        %1194 = vmatprep.subr.mxu0 0.0
        %1195 = vmatpush2.msra.mxu0 0.0
        %1196 = vmatprep.subr.mxu0 0.0
        %1197 = vmatpush2.msra.mxu0 0.0
        %1198 = vmatprep.subr.mxu0 0.0
        %1199 = vmatpush2.msra.mxu0 0.0
        %1200 = vmatprep.subr.mxu0 0.0
        %1201 = vmatpush2.msra.mxu0 0.0
        %1202 = vmatprep.subr.mxu0 0.0
        %1203 = vmatpush2.msra.mxu0 0.0
        %1204 = vmatprep.mubr.f32.mxu0 0.0
        %1205 = vmatmul.mubr.f32.gmra.mxu0 %v1130
        %v1206 = vpop.f32.mrf.mxu0
        %v1207 = vadd.f32 0.0, %v1206
        %v1208 = vpop.f32.mrf.mxu0
        %1209 = vmatprep.mubr.f32.mxu0 0.0
        %1210 = vmatmul.mubr.f32.gmra.mxu0 %v1133
        %v1211 = vpop.f32.mrf.mxu0
        %v1212 = vadd.f32 0.0, %v1211
        %v1213 = vpop.f32.mrf.mxu0
        %1214 = vmatprep.mubr.f32.mxu0 0.0
        %1215 = vmatmul.mubr.f32.gmra.mxu0 %v1136
        %v1216 = vpop.f32.mrf.mxu0
        %v1217 = vadd.f32 0.0, %v1216
        %v1218 = vpop.f32.mrf.mxu0
        %1219 = vdwg.mxu0
        %1223 = vrot.lane.b32.xlu0 %v1207, 8
        %v1224 = vpop.permute.xlu0 %1223
        %1225 = vrot.lane.b32.xlu0 %v1212, 8
        %v1226 = vpop.permute.xlu0 %1225
        %1227 = vrot.lane.b32.xlu0 %v1217, 8
        %v1228 = vpop.permute.xlu0 %1227
        %vm1232 = vcmask 130112
        %1233 = vst.msk [vmem:[#allocation3] sm:$0xff] %vm1232, %v1224
        %1234 = vst.msk [vmem:[#allocation3 + $0x8] sm:$0xff] %vm1232, %v1226
        %vm1235 = vcmask 122944
        %1236 = vst.msk [vmem:[#allocation3 + $0x10] sm:$0x1] %vm1235, %v1228
        %1237 = vrot.lane.b32.xlu0 %v706, 112
        %v1238 = vpop.permute.xlu0 %1237
        %1239 = vrot.lane.b32.xlu0 %v707, 112
        %v1240 = vpop.permute.xlu0 %1239
        %1241 = vrot.lane.b32.xlu0 %v708, 112
        %v1242 = vpop.permute.xlu0 %1241
        %1243 = vrot.lane.b32.xlu0 %v717, 80
        %v1244 = vpop.permute.xlu0 %1243
        %1245 = vrot.lane.b32.xlu0 %v718, 80
        %v1246 = vpop.permute.xlu0 %1245
        %1247 = vrot.lane.b32.xlu0 %v719, 80
        %v1248 = vpop.permute.xlu0 %1247
        %v1249 = vsel %vm740, %v1238, 0
        %v1251 = vsel %vm740, %v1240, 0
        %v1253 = vsel %vm740, %v1242, 0
        %v1255 = vsel %vm740, %v1244, 0
        %v1257 = vsel %vm740, %v1246, 0
        %v1259 = vsel %vm740, %v1248, 0
        %1261 = vmatprep.subr.mxu0 0.0
        %1262 = vmatpush1.xpose.msra.mxu0 0.0
        %1263 = vmatprep.subr.mxu0 0.0
        %1264 = vmatpush1.xpose.msra.mxu0 0.0
        %1265 = vmatprep.subr.mxu0 0.0
        %1266 = vmatpush1.xpose.msra.mxu0 0.0
        %1267 = vmatprep.subr.mxu0 0.0
        %1268 = vmatpush1.xpose.msra.mxu0 0.0
        %1269 = vmatprep.subr.mxu0 0.0
        %1270 = vmatpush1.xpose.msra.mxu0 0.0
        %1271 = vmatprep.subr.mxu0 0.0
        %1272 = vmatpush1.xpose.msra.mxu0 0.0
        %1273 = vmatprep.subr.mxu0 0.0
        %1274 = vmatpush1.xpose.msra.mxu0 0.0
        %1275 = vmatprep.subr.mxu0 0.0
        %1276 = vmatpush1.xpose.msra.mxu0 0.0
        %1277 = vmatprep.subr.mxu0 0.0
        %1278 = vmatpush1.xpose.msra.mxu0 0.0
        %1279 = vmatprep.subr.mxu0 0.0
        %1280 = vmatpush1.xpose.msra.mxu0 0.0
        %1281 = vmatprep.subr.mxu0 0.0
        %1282 = vmatpush1.xpose.msra.mxu0 0.0
        %1283 = vmatprep.subr.mxu0 0.0
        %1284 = vmatpush1.xpose.msra.mxu0 0.0
        %1285 = vmatprep.subr.mxu0 0.0
        %1286 = vmatpush1.xpose.msra.mxu0 0.0
        %1287 = vmatprep.subr.mxu0 0.0
        %1288 = vmatpush1.xpose.msra.mxu0 %v1259
        %1289 = vmatprep.subr.mxu0 0.0
        %1290 = vmatpush1.xpose.msra.mxu0 %v1257
        %1291 = vmatprep.subr.mxu0 0.0
        %1292 = vmatpush1.xpose.msra.mxu0 %v1255
        %1293 = vmatprep.subr.mxu0 0.0
        %1294 = vmatpush2.xpose.msra.mxu0 0.0
        %1295 = vmatprep.subr.mxu0 0.0
        %1296 = vmatpush2.xpose.msra.mxu0 0.0
        %1297 = vmatprep.subr.mxu0 0.0
        %1298 = vmatpush2.xpose.msra.mxu0 0.0
        %1299 = vmatprep.subr.mxu0 0.0
        %1300 = vmatpush2.xpose.msra.mxu0 0.0
        %1301 = vmatprep.subr.mxu0 0.0
        %1302 = vmatpush2.xpose.msra.mxu0 0.0
        %1303 = vmatprep.subr.mxu0 0.0
        %1304 = vmatpush2.xpose.msra.mxu0 0.0
        %1305 = vmatprep.subr.mxu0 0.0
        %1306 = vmatpush2.xpose.msra.mxu0 0.0
        %1307 = vmatprep.subr.mxu0 0.0
        %1308 = vmatpush2.xpose.msra.mxu0 0.0
        %1309 = vmatprep.subr.mxu0 0.0
        %1310 = vmatpush2.xpose.msra.mxu0 0.0
        %1311 = vmatprep.subr.mxu0 0.0
        %1312 = vmatpush2.xpose.msra.mxu0 0.0
        %1313 = vmatprep.subr.mxu0 0.0
        %1314 = vmatpush2.xpose.msra.mxu0 0.0
        %1315 = vmatprep.subr.mxu0 0.0
        %1316 = vmatpush2.xpose.msra.mxu0 0.0
        %1317 = vmatprep.subr.mxu0 0.0
        %1318 = vmatpush2.xpose.msra.mxu0 0.0
        %1319 = vmatprep.subr.mxu0 0.0
        %1320 = vmatpush2.xpose.msra.mxu0 0.0
        %1321 = vmatprep.subr.mxu0 0.0
        %1322 = vmatpush2.xpose.msra.mxu0 0.0
        %1323 = vmatprep.subr.mxu0 0.0
        %1324 = vmatpush2.xpose.msra.mxu0 0.0
        %1325 = vmatprep.mubr.f32.mxu0 0.0
        %1326 = vmatmul.mubr.f32.gmra.mxu0 %v1249
        %v1327 = vpop.f32.mrf.mxu0
        %v1328 = vadd.f32 0.0, %v1327
        %v1329 = vpop.f32.mrf.mxu0
        %1330 = vmatprep.mubr.f32.mxu0 0.0
        %1331 = vmatmul.mubr.f32.gmra.mxu0 %v1251
        %v1332 = vpop.f32.mrf.mxu0
        %v1333 = vadd.f32 0.0, %v1332
        %v1334 = vpop.f32.mrf.mxu0
        %1335 = vmatprep.mubr.f32.mxu0 0.0
        %1336 = vmatmul.mubr.f32.gmra.mxu0 %v1253
        %v1337 = vpop.f32.mrf.mxu0
        %v1338 = vadd.f32 0.0, %v1337
        %v1339 = vpop.f32.mrf.mxu0
        %1340 = vdwg.mxu0
        %v1341 = vmul.f32 %v1328, 0.35355338
        %v1342 = vmul.f32 %v1333, 0.35355338
        %v1343 = vmul.f32 %v1338, 0.35355338
        %v1344 = vsel %vm839, %v1341, -inf
        %1345 = vmax.xlane.f32.xlu0 %v1344
        %v1346 = vpop.xlane.xlu0 %1345
        %v1347 = vsel %vm839, %v1342, -inf
        %1348 = vmax.xlane.f32.xlu0 %v1347
        %v1349 = vpop.xlane.xlu0 %1348
        %v1350 = vsel %vm846, %v1343, -inf
        %1351 = vmax.xlane.f32.xlu0 %v1350
        %v1352 = vpop.xlane.xlu0 %1351
        %v1353 = vsub.f32 %v1341, %v1346
        %v1354 = vsub.f32 %v1342, %v1349
        %v1355 = vsub.f32 %v1343, %v1352
        %v1356 = vmul.f32 %v1353, 1.442695
        %v1357 = vpow.pop %v1356
        %v1358 = vmul.f32 %v1354, 1.442695
        %v1359 = vpow.pop %v1358
        %v1360 = vmul.f32 %v1355, 1.442695
        %v1361 = vpow.pop %v1360
        %v1362 = vsel %vm839, %v1357, 0.0
        %1363 = vadd.xlane.f32.xlu0 %v1362
        %v1364 = vpop.xlane.xlu0 %1363
        %v1365 = vsel %vm839, %v1359, 0.0
        %1366 = vadd.xlane.f32.xlu0 %v1365
        %v1367 = vpop.xlane.xlu0 %1366
        %v1368 = vsel %vm846, %v1361, 0.0
        %1369 = vadd.xlane.f32.xlu0 %v1368
        %v1370 = vpop.xlane.xlu0 %1369
        %v1371 = vrcp.pop %v1364
        %v1372 = vrcp.pop %v1367
        %v1373 = vrcp.pop %v1370
        %v1374 = vmul.f32 %v1357, %v1371
        %v1375 = vmul.f32 %v1359, %v1372
        %v1376 = vmul.f32 %v1361, %v1373
        %1377 = vrot.lane.b32.xlu0 %v728, 48
        %v1378 = vpop.permute.xlu0 %1377
        %1379 = vrot.lane.b32.xlu0 %v729, 48
        %v1380 = vpop.permute.xlu0 %1379
        %1381 = vrot.lane.b32.xlu0 %v730, 48
        %v1382 = vpop.permute.xlu0 %1381
        %v1386 = vsel %vm839, %v1374, 0
        %v1389 = vsel %vm839, %v1375, 0
        %v1392 = vsel %vm839, %v1376, 0
        %v1394 = vsel %vm894, %v1382, 0
        %1396 = vmatprep.subr.mxu0 0.0
        %1397 = vmatpush1.msra.mxu0 0.0
        %1398 = vmatprep.subr.mxu0 0.0
        %1399 = vmatpush1.msra.mxu0 0.0
        %1400 = vmatprep.subr.mxu0 0.0
        %1401 = vmatpush1.msra.mxu0 0.0
        %1402 = vmatprep.subr.mxu0 0.0
        %1403 = vmatpush1.msra.mxu0 0.0
        %1404 = vmatprep.subr.mxu0 0.0
        %1405 = vmatpush1.msra.mxu0 0.0
        %1406 = vmatprep.subr.mxu0 0.0
        %1407 = vmatpush1.msra.mxu0 0.0
        %1408 = vmatprep.subr.mxu0 0.0
        %1409 = vmatpush1.msra.mxu0 0.0
        %1410 = vmatprep.subr.mxu0 0.0
        %1411 = vmatpush1.msra.mxu0 0.0
        %1412 = vmatprep.subr.mxu0 0.0
        %1413 = vmatpush1.msra.mxu0 0.0
        %1414 = vmatprep.subr.mxu0 0.0
        %1415 = vmatpush1.msra.mxu0 0.0
        %1416 = vmatprep.subr.mxu0 0.0
        %1417 = vmatpush1.msra.mxu0 0.0
        %1418 = vmatprep.subr.mxu0 0.0
        %1419 = vmatpush1.msra.mxu0 0.0
        %1420 = vmatprep.subr.mxu0 0.0
        %1421 = vmatpush1.msra.mxu0 0.0
        %1422 = vmatprep.subr.mxu0 0.0
        %1423 = vmatpush1.msra.mxu0 %v1394
        %1424 = vmatprep.subr.mxu0 0.0
        %1425 = vmatpush1.msra.mxu0 %v1380
        %1426 = vmatprep.subr.mxu0 0.0
        %1427 = vmatpush1.msra.mxu0 %v1378
        %1428 = vmatprep.subr.mxu0 0.0
        %1429 = vmatpush2.msra.mxu0 0.0
        %1430 = vmatprep.subr.mxu0 0.0
        %1431 = vmatpush2.msra.mxu0 0.0
        %1432 = vmatprep.subr.mxu0 0.0
        %1433 = vmatpush2.msra.mxu0 0.0
        %1434 = vmatprep.subr.mxu0 0.0
        %1435 = vmatpush2.msra.mxu0 0.0
        %1436 = vmatprep.subr.mxu0 0.0
        %1437 = vmatpush2.msra.mxu0 0.0
        %1438 = vmatprep.subr.mxu0 0.0
        %1439 = vmatpush2.msra.mxu0 0.0
        %1440 = vmatprep.subr.mxu0 0.0
        %1441 = vmatpush2.msra.mxu0 0.0
        %1442 = vmatprep.subr.mxu0 0.0
        %1443 = vmatpush2.msra.mxu0 0.0
        %1444 = vmatprep.subr.mxu0 0.0
        %1445 = vmatpush2.msra.mxu0 0.0
        %1446 = vmatprep.subr.mxu0 0.0
        %1447 = vmatpush2.msra.mxu0 0.0
        %1448 = vmatprep.subr.mxu0 0.0
        %1449 = vmatpush2.msra.mxu0 0.0
        %1450 = vmatprep.subr.mxu0 0.0
        %1451 = vmatpush2.msra.mxu0 0.0
        %1452 = vmatprep.subr.mxu0 0.0
        %1453 = vmatpush2.msra.mxu0 0.0
        %1454 = vmatprep.subr.mxu0 0.0
        %1455 = vmatpush2.msra.mxu0 0.0
        %1456 = vmatprep.subr.mxu0 0.0
        %1457 = vmatpush2.msra.mxu0 0.0
        %1458 = vmatprep.subr.mxu0 0.0
        %1459 = vmatpush2.msra.mxu0 0.0
        %1460 = vmatprep.mubr.f32.mxu0 0.0
        %1461 = vmatmul.mubr.f32.gmra.mxu0 %v1386
        %v1462 = vpop.f32.mrf.mxu0
        %v1463 = vadd.f32 0.0, %v1462
        %v1464 = vpop.f32.mrf.mxu0
        %1465 = vmatprep.mubr.f32.mxu0 0.0
        %1466 = vmatmul.mubr.f32.gmra.mxu0 %v1389
        %v1467 = vpop.f32.mrf.mxu0
        %v1468 = vadd.f32 0.0, %v1467
        %v1469 = vpop.f32.mrf.mxu0
        %1470 = vmatprep.mubr.f32.mxu0 0.0
        %1471 = vmatmul.mubr.f32.gmra.mxu0 %v1392
        %v1472 = vpop.f32.mrf.mxu0
        %v1473 = vadd.f32 0.0, %v1472
        %v1474 = vpop.f32.mrf.mxu0
        %1475 = vdwg.mxu0
        %1479 = vrot.lane.b32.xlu0 %v1463, 16
        %v1480 = vpop.permute.xlu0 %1479
        %1481 = vrot.lane.b32.xlu0 %v1468, 16
        %v1482 = vpop.permute.xlu0 %1481
        %1483 = vrot.lane.b32.xlu0 %v1473, 16
        %v1484 = vpop.permute.xlu0 %1483
        %vm1488 = vcmask 195712
        %1489 = vst.msk [vmem:[#allocation3] sm:$0xff] %vm1488, %v1480
        %1490 = vst.msk [vmem:[#allocation3 + $0x8] sm:$0xff] %vm1488, %v1482
        %vm1491 = vcmask 188544
        %1492 = vst.msk [vmem:[#allocation3 + $0x10] sm:$0x1] %vm1491, %v1484
        %1493 = vrot.lane.b32.xlu0 %v706, 104
        %v1494 = vpop.permute.xlu0 %1493
        %1495 = vrot.lane.b32.xlu0 %v707, 104
        %v1496 = vpop.permute.xlu0 %1495
        %1497 = vrot.lane.b32.xlu0 %v708, 104
        %v1498 = vpop.permute.xlu0 %1497
        %1499 = vrot.lane.b32.xlu0 %v717, 72
        %v1500 = vpop.permute.xlu0 %1499
        %1501 = vrot.lane.b32.xlu0 %v718, 72
        %v1502 = vpop.permute.xlu0 %1501
        %1503 = vrot.lane.b32.xlu0 %v719, 72
        %v1504 = vpop.permute.xlu0 %1503
        %v1505 = vsel %vm740, %v1494, 0
        %v1507 = vsel %vm740, %v1496, 0
        %v1509 = vsel %vm740, %v1498, 0
        %v1511 = vsel %vm740, %v1500, 0
        %v1513 = vsel %vm740, %v1502, 0
        %v1515 = vsel %vm740, %v1504, 0
        %1517 = vmatprep.subr.mxu0 0.0
        %1518 = vmatpush1.xpose.msra.mxu0 0.0
        %1519 = vmatprep.subr.mxu0 0.0
        %1520 = vmatpush1.xpose.msra.mxu0 0.0
        %1521 = vmatprep.subr.mxu0 0.0
        %1522 = vmatpush1.xpose.msra.mxu0 0.0
        %1523 = vmatprep.subr.mxu0 0.0
        %1524 = vmatpush1.xpose.msra.mxu0 0.0
        %1525 = vmatprep.subr.mxu0 0.0
        %1526 = vmatpush1.xpose.msra.mxu0 0.0
        %1527 = vmatprep.subr.mxu0 0.0
        %1528 = vmatpush1.xpose.msra.mxu0 0.0
        %1529 = vmatprep.subr.mxu0 0.0
        %1530 = vmatpush1.xpose.msra.mxu0 0.0
        %1531 = vmatprep.subr.mxu0 0.0
        %1532 = vmatpush1.xpose.msra.mxu0 0.0
        %1533 = vmatprep.subr.mxu0 0.0
        %1534 = vmatpush1.xpose.msra.mxu0 0.0
        %1535 = vmatprep.subr.mxu0 0.0
        %1536 = vmatpush1.xpose.msra.mxu0 0.0
        %1537 = vmatprep.subr.mxu0 0.0
        %1538 = vmatpush1.xpose.msra.mxu0 0.0
        %1539 = vmatprep.subr.mxu0 0.0
        %1540 = vmatpush1.xpose.msra.mxu0 0.0
        %1541 = vmatprep.subr.mxu0 0.0
        %1542 = vmatpush1.xpose.msra.mxu0 0.0
        %1543 = vmatprep.subr.mxu0 0.0
        %1544 = vmatpush1.xpose.msra.mxu0 %v1515
        %1545 = vmatprep.subr.mxu0 0.0
        %1546 = vmatpush1.xpose.msra.mxu0 %v1513
        %1547 = vmatprep.subr.mxu0 0.0
        %1548 = vmatpush1.xpose.msra.mxu0 %v1511
        %1549 = vmatprep.subr.mxu0 0.0
        %1550 = vmatpush2.xpose.msra.mxu0 0.0
        %1551 = vmatprep.subr.mxu0 0.0
        %1552 = vmatpush2.xpose.msra.mxu0 0.0
        %1553 = vmatprep.subr.mxu0 0.0
        %1554 = vmatpush2.xpose.msra.mxu0 0.0
        %1555 = vmatprep.subr.mxu0 0.0
        %1556 = vmatpush2.xpose.msra.mxu0 0.0
        %1557 = vmatprep.subr.mxu0 0.0
        %1558 = vmatpush2.xpose.msra.mxu0 0.0
        %1559 = vmatprep.subr.mxu0 0.0
        %1560 = vmatpush2.xpose.msra.mxu0 0.0
        %1561 = vmatprep.subr.mxu0 0.0
        %1562 = vmatpush2.xpose.msra.mxu0 0.0
        %1563 = vmatprep.subr.mxu0 0.0
        %1564 = vmatpush2.xpose.msra.mxu0 0.0
        %1565 = vmatprep.subr.mxu0 0.0
        %1566 = vmatpush2.xpose.msra.mxu0 0.0
        %1567 = vmatprep.subr.mxu0 0.0
        %1568 = vmatpush2.xpose.msra.mxu0 0.0
        %1569 = vmatprep.subr.mxu0 0.0
        %1570 = vmatpush2.xpose.msra.mxu0 0.0
        %1571 = vmatprep.subr.mxu0 0.0
        %1572 = vmatpush2.xpose.msra.mxu0 0.0
        %1573 = vmatprep.subr.mxu0 0.0
        %1574 = vmatpush2.xpose.msra.mxu0 0.0
        %1575 = vmatprep.subr.mxu0 0.0
        %1576 = vmatpush2.xpose.msra.mxu0 0.0
        %1577 = vmatprep.subr.mxu0 0.0
        %1578 = vmatpush2.xpose.msra.mxu0 0.0
        %1579 = vmatprep.subr.mxu0 0.0
        %1580 = vmatpush2.xpose.msra.mxu0 0.0
        %1581 = vmatprep.mubr.f32.mxu0 0.0
        %1582 = vmatmul.mubr.f32.gmra.mxu0 %v1505
        %v1583 = vpop.f32.mrf.mxu0
        %v1584 = vadd.f32 0.0, %v1583
        %v1585 = vpop.f32.mrf.mxu0
        %1586 = vmatprep.mubr.f32.mxu0 0.0
        %1587 = vmatmul.mubr.f32.gmra.mxu0 %v1507
        %v1588 = vpop.f32.mrf.mxu0
        %v1589 = vadd.f32 0.0, %v1588
        %v1590 = vpop.f32.mrf.mxu0
        %1591 = vmatprep.mubr.f32.mxu0 0.0
        %1592 = vmatmul.mubr.f32.gmra.mxu0 %v1509
        %v1593 = vpop.f32.mrf.mxu0
        %v1594 = vadd.f32 0.0, %v1593
        %v1595 = vpop.f32.mrf.mxu0
        %1596 = vdwg.mxu0
        %v1597 = vmul.f32 %v1584, 0.35355338
        %v1598 = vmul.f32 %v1589, 0.35355338
        %v1599 = vmul.f32 %v1594, 0.35355338
        %v1600 = vsel %vm839, %v1597, -inf
        %1601 = vmax.xlane.f32.xlu0 %v1600
        %v1602 = vpop.xlane.xlu0 %1601
        %v1603 = vsel %vm839, %v1598, -inf
        %1604 = vmax.xlane.f32.xlu0 %v1603
        %v1605 = vpop.xlane.xlu0 %1604
        %v1606 = vsel %vm846, %v1599, -inf
        %1607 = vmax.xlane.f32.xlu0 %v1606
        %v1608 = vpop.xlane.xlu0 %1607
        %v1609 = vsub.f32 %v1597, %v1602
        %v1610 = vsub.f32 %v1598, %v1605
        %v1611 = vsub.f32 %v1599, %v1608
        %v1612 = vmul.f32 %v1609, 1.442695
        %v1613 = vpow.pop %v1612
        %v1614 = vmul.f32 %v1610, 1.442695
        %v1615 = vpow.pop %v1614
        %v1616 = vmul.f32 %v1611, 1.442695
        %v1617 = vpow.pop %v1616
        %v1618 = vsel %vm839, %v1613, 0.0
        %1619 = vadd.xlane.f32.xlu0 %v1618
        %v1620 = vpop.xlane.xlu0 %1619
        %v1621 = vsel %vm839, %v1615, 0.0
        %1622 = vadd.xlane.f32.xlu0 %v1621
        %v1623 = vpop.xlane.xlu0 %1622
        %v1624 = vsel %vm846, %v1617, 0.0
        %1625 = vadd.xlane.f32.xlu0 %v1624
        %v1626 = vpop.xlane.xlu0 %1625
        %v1627 = vrcp.pop %v1620
        %v1628 = vrcp.pop %v1623
        %v1629 = vrcp.pop %v1626
        %v1630 = vmul.f32 %v1613, %v1627
        %v1631 = vmul.f32 %v1615, %v1628
        %v1632 = vmul.f32 %v1617, %v1629
        %1633 = vrot.lane.b32.xlu0 %v728, 40
        %v1634 = vpop.permute.xlu0 %1633
        %1635 = vrot.lane.b32.xlu0 %v729, 40
        %v1636 = vpop.permute.xlu0 %1635
        %1637 = vrot.lane.b32.xlu0 %v730, 40
        %v1638 = vpop.permute.xlu0 %1637
        %v1642 = vsel %vm839, %v1630, 0
        %v1645 = vsel %vm839, %v1631, 0
        %v1648 = vsel %vm839, %v1632, 0
        %v1650 = vsel %vm894, %v1638, 0
        %1652 = vmatprep.subr.mxu0 0.0
        %1653 = vmatpush1.msra.mxu0 0.0
        %1654 = vmatprep.subr.mxu0 0.0
        %1655 = vmatpush1.msra.mxu0 0.0
        %1656 = vmatprep.subr.mxu0 0.0
        %1657 = vmatpush1.msra.mxu0 0.0
        %1658 = vmatprep.subr.mxu0 0.0
        %1659 = vmatpush1.msra.mxu0 0.0
        %1660 = vmatprep.subr.mxu0 0.0
        %1661 = vmatpush1.msra.mxu0 0.0
        %1662 = vmatprep.subr.mxu0 0.0
        %1663 = vmatpush1.msra.mxu0 0.0
        %1664 = vmatprep.subr.mxu0 0.0
        %1665 = vmatpush1.msra.mxu0 0.0
        %1666 = vmatprep.subr.mxu0 0.0
        %1667 = vmatpush1.msra.mxu0 0.0
        %1668 = vmatprep.subr.mxu0 0.0
        %1669 = vmatpush1.msra.mxu0 0.0
        %1670 = vmatprep.subr.mxu0 0.0
        %1671 = vmatpush1.msra.mxu0 0.0
        %1672 = vmatprep.subr.mxu0 0.0
        %1673 = vmatpush1.msra.mxu0 0.0
        %1674 = vmatprep.subr.mxu0 0.0
        %1675 = vmatpush1.msra.mxu0 0.0
        %1676 = vmatprep.subr.mxu0 0.0
        %1677 = vmatpush1.msra.mxu0 0.0
        %1678 = vmatprep.subr.mxu0 0.0
        %1679 = vmatpush1.msra.mxu0 %v1650
        %1680 = vmatprep.subr.mxu0 0.0
        %1681 = vmatpush1.msra.mxu0 %v1636
        %1682 = vmatprep.subr.mxu0 0.0
        %1683 = vmatpush1.msra.mxu0 %v1634
        %1684 = vmatprep.subr.mxu0 0.0
        %1685 = vmatpush2.msra.mxu0 0.0
        %1686 = vmatprep.subr.mxu0 0.0
        %1687 = vmatpush2.msra.mxu0 0.0
        %1688 = vmatprep.subr.mxu0 0.0
        %1689 = vmatpush2.msra.mxu0 0.0
        %1690 = vmatprep.subr.mxu0 0.0
        %1691 = vmatpush2.msra.mxu0 0.0
        %1692 = vmatprep.subr.mxu0 0.0
        %1693 = vmatpush2.msra.mxu0 0.0
        %1694 = vmatprep.subr.mxu0 0.0
        %1695 = vmatpush2.msra.mxu0 0.0
        %1696 = vmatprep.subr.mxu0 0.0
        %1697 = vmatpush2.msra.mxu0 0.0
        %1698 = vmatprep.subr.mxu0 0.0
        %1699 = vmatpush2.msra.mxu0 0.0
        %1700 = vmatprep.subr.mxu0 0.0
        %1701 = vmatpush2.msra.mxu0 0.0
        %1702 = vmatprep.subr.mxu0 0.0
        %1703 = vmatpush2.msra.mxu0 0.0
        %1704 = vmatprep.subr.mxu0 0.0
        %1705 = vmatpush2.msra.mxu0 0.0
        %1706 = vmatprep.subr.mxu0 0.0
        %1707 = vmatpush2.msra.mxu0 0.0
        %1708 = vmatprep.subr.mxu0 0.0
        %1709 = vmatpush2.msra.mxu0 0.0
        %1710 = vmatprep.subr.mxu0 0.0
        %1711 = vmatpush2.msra.mxu0 0.0
        %1712 = vmatprep.subr.mxu0 0.0
        %1713 = vmatpush2.msra.mxu0 0.0
        %1714 = vmatprep.subr.mxu0 0.0
        %1715 = vmatpush2.msra.mxu0 0.0
        %1716 = vmatprep.mubr.f32.mxu0 0.0
        %1717 = vmatmul.mubr.f32.gmra.mxu0 %v1642
        %v1718 = vpop.f32.mrf.mxu0
        %v1719 = vadd.f32 0.0, %v1718
        %v1720 = vpop.f32.mrf.mxu0
        %1721 = vmatprep.mubr.f32.mxu0 0.0
        %1722 = vmatmul.mubr.f32.gmra.mxu0 %v1645
        %v1723 = vpop.f32.mrf.mxu0
        %v1724 = vadd.f32 0.0, %v1723
        %v1725 = vpop.f32.mrf.mxu0
        %1726 = vmatprep.mubr.f32.mxu0 0.0
        %1727 = vmatmul.mubr.f32.gmra.mxu0 %v1648
        %v1728 = vpop.f32.mrf.mxu0
        %v1729 = vadd.f32 0.0, %v1728
        %v1730 = vpop.f32.mrf.mxu0
        %1731 = vdwg.mxu0
        %1735 = vrot.lane.b32.xlu0 %v1719, 24
        %v1736 = vpop.permute.xlu0 %1735
        %1737 = vrot.lane.b32.xlu0 %v1724, 24
        %v1738 = vpop.permute.xlu0 %1737
        %1739 = vrot.lane.b32.xlu0 %v1729, 24
        %v1740 = vpop.permute.xlu0 %1739
        %vm1744 = vcmask 261312
        %1745 = vst.msk [vmem:[#allocation3] sm:$0xff] %vm1744, %v1736
        %1746 = vst.msk [vmem:[#allocation3 + $0x8] sm:$0xff] %vm1744, %v1738
        %vm1747 = vcmask 254144
        %1748 = vst.msk [vmem:[#allocation3 + $0x10] sm:$0x1] %vm1747, %v1740
        %v1749 = vld [vmem:[#allocation3] sm:$0xff]
        %v1750 = vld [vmem:[#allocation3 + $0x8] sm:$0xff]
        %v1751 = vld [vmem:[#allocation3 + $0x10] sm:$0x1]
        %v1752 = vld [vmem:[%s8] sm:$0xff]
        %v1753 = vld [vmem:[%s8 + $0x8] sm:$0xff]
        %v1754 = vld [vmem:[%s8 + $0x10] sm:$0xff]
        %v1755 = vld [vmem:[%s8 + $0x18] sm:$0xff]
        %v1757 = vsel %vm546, %v1749, 0
        %v1760 = vsel %vm546, %v1750, 0
        %v1763 = vsel %vm546, %v1751, 0
        %1765 = vmatprep.subr.mxu0 0.0
        %1766 = vmatpush1.msra.mxu0 0.0
        %1767 = vmatprep.subr.mxu0 0.0
        %1768 = vmatpush1.msra.mxu0 0.0
        %1769 = vmatprep.subr.mxu0 0.0
        %1770 = vmatpush1.msra.mxu0 0.0
        %1771 = vmatprep.subr.mxu0 0.0
        %1772 = vmatpush1.msra.mxu0 0.0
        %1773 = vmatprep.subr.mxu0 0.0
        %1774 = vmatpush1.msra.mxu0 0.0
        %1775 = vmatprep.subr.mxu0 0.0
        %1776 = vmatpush1.msra.mxu0 0.0
        %1777 = vmatprep.subr.mxu0 0.0
        %1778 = vmatpush1.msra.mxu0 0.0
        %1779 = vmatprep.subr.mxu0 0.0
        %1780 = vmatpush1.msra.mxu0 0.0
        %1781 = vmatprep.subr.mxu0 0.0
        %1782 = vmatpush1.msra.mxu0 0.0
        %1783 = vmatprep.subr.mxu0 0.0
        %1784 = vmatpush1.msra.mxu0 0.0
        %1785 = vmatprep.subr.mxu0 0.0
        %1786 = vmatpush1.msra.mxu0 0.0
        %1787 = vmatprep.subr.mxu0 0.0
        %1788 = vmatpush1.msra.mxu0 0.0
        %1789 = vmatprep.subr.mxu0 0.0
        %1790 = vmatpush1.msra.mxu0 %v1755
        %1791 = vmatprep.subr.mxu0 0.0
        %1792 = vmatpush1.msra.mxu0 %v1754
        %1793 = vmatprep.subr.mxu0 0.0
        %1794 = vmatpush1.msra.mxu0 %v1753
        %1795 = vmatprep.subr.mxu0 0.0
        %1796 = vmatpush1.msra.mxu0 %v1752
        %1797 = vmatprep.subr.mxu0 0.0
        %1798 = vmatpush2.msra.mxu0 0.0
        %1799 = vmatprep.subr.mxu0 0.0
        %1800 = vmatpush2.msra.mxu0 0.0
        %1801 = vmatprep.subr.mxu0 0.0
        %1802 = vmatpush2.msra.mxu0 0.0
        %1803 = vmatprep.subr.mxu0 0.0
        %1804 = vmatpush2.msra.mxu0 0.0
        %1805 = vmatprep.subr.mxu0 0.0
        %1806 = vmatpush2.msra.mxu0 0.0
        %1807 = vmatprep.subr.mxu0 0.0
        %1808 = vmatpush2.msra.mxu0 0.0
        %1809 = vmatprep.subr.mxu0 0.0
        %1810 = vmatpush2.msra.mxu0 0.0
        %1811 = vmatprep.subr.mxu0 0.0
        %1812 = vmatpush2.msra.mxu0 0.0
        %1813 = vmatprep.subr.mxu0 0.0
        %1814 = vmatpush2.msra.mxu0 0.0
        %1815 = vmatprep.subr.mxu0 0.0
        %1816 = vmatpush2.msra.mxu0 0.0
        %1817 = vmatprep.subr.mxu0 0.0
        %1818 = vmatpush2.msra.mxu0 0.0
        %1819 = vmatprep.subr.mxu0 0.0
        %1820 = vmatpush2.msra.mxu0 0.0
        %1821 = vmatprep.subr.mxu0 0.0
        %1822 = vmatpush2.msra.mxu0 0.0
        %1823 = vmatprep.subr.mxu0 0.0
        %1824 = vmatpush2.msra.mxu0 0.0
        %1825 = vmatprep.subr.mxu0 0.0
        %1826 = vmatpush2.msra.mxu0 0.0
        %1827 = vmatprep.subr.mxu0 0.0
        %1828 = vmatpush2.msra.mxu0 0.0
        %1829 = vmatprep.mubr.f32.mxu0 0.0
        %1830 = vmatmul.mubr.f32.gmra.mxu0 %v1757
        %v1831 = vpop.f32.mrf.mxu0
        %v1832 = vadd.f32 0.0, %v1831
        %v1833 = vpop.f32.mrf.mxu0
        %1834 = vmatprep.mubr.f32.mxu0 0.0
        %1835 = vmatmul.mubr.f32.gmra.mxu0 %v1760
        %v1836 = vpop.f32.mrf.mxu0
        %v1837 = vadd.f32 0.0, %v1836
        %v1838 = vpop.f32.mrf.mxu0
        %1839 = vmatprep.mubr.f32.mxu0 0.0
        %1840 = vmatmul.mubr.f32.gmra.mxu0 %v1763
        %v1841 = vpop.f32.mrf.mxu0
        %v1842 = vadd.f32 0.0, %v1841
        %v1843 = vpop.f32.mrf.mxu0
        %1844 = vdwg.mxu0
        %v1845 = vadd.f32 %v549, %v1832
        %v1846 = vadd.f32 %v550, %v1837
        %v1847 = vadd.f32 %v551, %v1842
        %v1848 = vlaneseq
        %v1849 = vshrl.u32 %v1848, 7
        %v1850 = vsub.s32 5, %v1849
        %v1851 = vrot.slane %v552, %v1850
        %v1852 = vadd.f32 %v1845, %v1851
        %v1853 = vadd.f32 %v1846, %v1851
        %v1854 = vadd.f32 %v1847, %v1851
        %v1855 = vsel %vm546, %v1852, 0.0
        %1856 = vadd.xlane.f32.xlu0 %v1855
        %v1857 = vpop.xlane.xlu0 %1856
        %v1858 = vsel %vm546, %v1853, 0.0
        %1859 = vadd.xlane.f32.xlu0 %v1858
        %v1860 = vpop.xlane.xlu0 %1859
        %v1861 = vsel %vm560, %v1854, 0.0
        %1862 = vadd.xlane.f32.xlu0 %v1861
        %v1863 = vpop.xlane.xlu0 %1862
        %v1864 = vmul.f32 %v1857, %v564
        %v1865 = vmul.f32 %v1860, %v564
        %v1866 = vmul.f32 %v1863, %v564
        %v1867 = vsub.f32 %v1852, %v1864
        %v1868 = vsub.f32 %v1853, %v1865
        %v1869 = vsub.f32 %v1854, %v1866
        %v1870 = vmul.f32 %v1867, %v1867
        %v1871 = vmul.f32 %v1868, %v1868
        %v1872 = vmul.f32 %v1869, %v1869
        %v1873 = vsel %vm546, %v1870, 0.0
        %1874 = vadd.xlane.f32.xlu0 %v1873
        %v1875 = vpop.xlane.xlu0 %1874
        %v1876 = vsel %vm546, %v1871, 0.0
        %1877 = vadd.xlane.f32.xlu0 %v1876
        %v1878 = vpop.xlane.xlu0 %1877
        %v1879 = vsel %vm560, %v1872, 0.0
        %1880 = vadd.xlane.f32.xlu0 %v1879
        %v1881 = vpop.xlane.xlu0 %1880
        %v1882 = vmul.f32 %v1875, %v564
        %v1883 = vmul.f32 %v1878, %v564
        %v1884 = vmul.f32 %v1881, %v564
        %v1885 = vadd.f32 %v1882, 1e-06
        %v1886 = vadd.f32 %v1883, 1e-06
        %v1887 = vadd.f32 %v1884, 1e-06
        %v1888 = vrsqrt.pop %v1885
        %v1889 = vrsqrt.pop %v1886
        %v1890 = vrsqrt.pop %v1887
        %v1891 = vmul.f32 %v1867, %v1888
        %v1892 = vmul.f32 %v1868, %v1889
        %v1893 = vmul.f32 %v1869, %v1890
        %v1894 = vlaneseq
        %v1895 = vshrl.u32 %v1894, 7
        %v1896 = vsub.s32 6, %v1895
        %v1897 = vrot.slane %v552, %v1896
        %v1898 = vmul.f32 %v1891, %v1897
        %v1899 = vmul.f32 %v1892, %v1897
        %v1900 = vmul.f32 %v1893, %v1897
        %v1901 = vlaneseq
        %v1902 = vshrl.u32 %v1901, 7
        %v1903 = vsub.s32 7, %v1902
        %v1904 = vrot.slane %v552, %v1903
        %v1905 = vadd.f32 %v1898, %v1904
        %v1906 = vadd.f32 %v1899, %v1904
        %v1907 = vadd.f32 %v1900, %v1904
        %v1908 = vld [vmem:[%s9] sm:$0xff]
        %v1909 = vld [vmem:[%s9 + $0x8] sm:$0xff]
        %v1910 = vld [vmem:[%s9 + $0x10] sm:$0xff]
        %v1911 = vld [vmem:[%s9 + $0x18] sm:$0xff]
        %v1912 = vld [vmem:[%s10] sm:$0x1]
        %v1914 = vlaneseq
        %v1915 = vshrl.u32 %v1914, 7
        %v1916 = vsub.s32 0, %v1915
        %v1917 = vrot.slane %v1912, %v1916
        %v1920 = vsel %vm546, %v1905, 0
        %v1923 = vsel %vm546, %v1906, 0
        %v1926 = vsel %vm546, %v1907, 0
        %1928 = vmatprep.subr.mxu0 0.0
        %1929 = vmatpush1.msra.mxu0 0.0
        %1930 = vmatprep.subr.mxu0 0.0
        %1931 = vmatpush1.msra.mxu0 0.0
        %1932 = vmatprep.subr.mxu0 0.0
        %1933 = vmatpush1.msra.mxu0 0.0
        %1934 = vmatprep.subr.mxu0 0.0
        %1935 = vmatpush1.msra.mxu0 0.0
        %1936 = vmatprep.subr.mxu0 0.0
        %1937 = vmatpush1.msra.mxu0 0.0
        %1938 = vmatprep.subr.mxu0 0.0
        %1939 = vmatpush1.msra.mxu0 0.0
        %1940 = vmatprep.subr.mxu0 0.0
        %1941 = vmatpush1.msra.mxu0 0.0
        %1942 = vmatprep.subr.mxu0 0.0
        %1943 = vmatpush1.msra.mxu0 0.0
        %1944 = vmatprep.subr.mxu0 0.0
        %1945 = vmatpush1.msra.mxu0 0.0
        %1946 = vmatprep.subr.mxu0 0.0
        %1947 = vmatpush1.msra.mxu0 0.0
        %1948 = vmatprep.subr.mxu0 0.0
        %1949 = vmatpush1.msra.mxu0 0.0
        %1950 = vmatprep.subr.mxu0 0.0
        %1951 = vmatpush1.msra.mxu0 0.0
        %1952 = vmatprep.subr.mxu0 0.0
        %1953 = vmatpush1.msra.mxu0 %v1911
        %1954 = vmatprep.subr.mxu0 0.0
        %1955 = vmatpush1.msra.mxu0 %v1910
        %1956 = vmatprep.subr.mxu0 0.0
        %1957 = vmatpush1.msra.mxu0 %v1909
        %1958 = vmatprep.subr.mxu0 0.0
        %1959 = vmatpush1.msra.mxu0 %v1908
        %1960 = vmatprep.subr.mxu0 0.0
        %1961 = vmatpush2.msra.mxu0 0.0
        %1962 = vmatprep.subr.mxu0 0.0
        %1963 = vmatpush2.msra.mxu0 0.0
        %1964 = vmatprep.subr.mxu0 0.0
        %1965 = vmatpush2.msra.mxu0 0.0
        %1966 = vmatprep.subr.mxu0 0.0
        %1967 = vmatpush2.msra.mxu0 0.0
        %1968 = vmatprep.subr.mxu0 0.0
        %1969 = vmatpush2.msra.mxu0 0.0
        %1970 = vmatprep.subr.mxu0 0.0
        %1971 = vmatpush2.msra.mxu0 0.0
        %1972 = vmatprep.subr.mxu0 0.0
        %1973 = vmatpush2.msra.mxu0 0.0
        %1974 = vmatprep.subr.mxu0 0.0
        %1975 = vmatpush2.msra.mxu0 0.0
        %1976 = vmatprep.subr.mxu0 0.0
        %1977 = vmatpush2.msra.mxu0 0.0
        %1978 = vmatprep.subr.mxu0 0.0
        %1979 = vmatpush2.msra.mxu0 0.0
        %1980 = vmatprep.subr.mxu0 0.0
        %1981 = vmatpush2.msra.mxu0 0.0
        %1982 = vmatprep.subr.mxu0 0.0
        %1983 = vmatpush2.msra.mxu0 0.0
        %1984 = vmatprep.subr.mxu0 0.0
        %1985 = vmatpush2.msra.mxu0 0.0
        %1986 = vmatprep.subr.mxu0 0.0
        %1987 = vmatpush2.msra.mxu0 0.0
        %1988 = vmatprep.subr.mxu0 0.0
        %1989 = vmatpush2.msra.mxu0 0.0
        %1990 = vmatprep.subr.mxu0 0.0
        %1991 = vmatpush2.msra.mxu0 0.0
        %1992 = vmatprep.mubr.f32.mxu0 0.0
        %1993 = vmatmul.mubr.f32.gmra.mxu0 %v1920
        %v1994 = vpop.f32.mrf.mxu0
        %v1995 = vadd.f32 %v1917, %v1994
        %v1996 = vpop.f32.mrf.mxu0
        %1997 = vmatprep.mubr.f32.mxu0 0.0
        %1998 = vmatmul.mubr.f32.gmra.mxu0 %v1923
        %v1999 = vpop.f32.mrf.mxu0
        %v2000 = vadd.f32 %v1917, %v1999
        %v2001 = vpop.f32.mrf.mxu0
        %2002 = vmatprep.mubr.f32.mxu0 0.0
        %2003 = vmatmul.mubr.f32.gmra.mxu0 %v1926
        %v2004 = vpop.f32.mrf.mxu0
        %v2005 = vadd.f32 %v1917, %v2004
        %v2006 = vpop.f32.mrf.mxu0
        %2007 = vdwg.mxu0
        %v2008 = vmul.f32 %v1995, %v1995
        %v2009 = vmul.f32 %v2000, %v2000
        %v2010 = vmul.f32 %v2005, %v2005
        %v2011 = vmul.f32 %v1995, %v2008
        %v2012 = vmul.f32 %v2000, %v2009
        %v2013 = vmul.f32 %v2005, %v2010
        %v2014 = vmul.f32 %v2011, 0.044715
        %v2015 = vmul.f32 %v2012, 0.044715
        %v2016 = vmul.f32 %v2013, 0.044715
        %v2017 = vadd.f32 %v1995, %v2014
        %v2018 = vadd.f32 %v2000, %v2015
        %v2019 = vadd.f32 %v2005, %v2016
        %v2020 = vmul.f32 %v2017, 0.7978846
        %v2021 = vmul.f32 %v2018, 0.7978846
        %v2022 = vmul.f32 %v2019, 0.7978846
        %v2023 = vtanh.pop %v2020
        %v2024 = vtanh.pop %v2021
        %v2025 = vtanh.pop %v2022
        %v2026 = vadd.f32 %v2023, 1.0
        %v2027 = vadd.f32 %v2024, 1.0
        %v2028 = vadd.f32 %v2025, 1.0
        %v2029 = vmul.f32 %v2026, 0.5
        %v2030 = vmul.f32 %v2027, 0.5
        %v2031 = vmul.f32 %v2028, 0.5
        %v2032 = vmul.f32 %v1995, %v2029
        %v2033 = vmul.f32 %v2000, %v2030
        %v2034 = vmul.f32 %v2005, %v2031
        %v2035 = vld [vmem:[%s11] sm:$0xff]
        %v2036 = vld [vmem:[%s11 + $0x8] sm:$0xff]
        %v2037 = vld [vmem:[%s11 + $0x10] sm:$0xff]
        %v2038 = vld [vmem:[%s11 + $0x18] sm:$0xff]
        %v2039 = vld [vmem:[%s11 + $0x20] sm:$0xff]
        %v2040 = vld [vmem:[%s11 + $0x28] sm:$0xff]
        %v2041 = vld [vmem:[%s11 + $0x30] sm:$0xff]
        %v2042 = vld [vmem:[%s11 + $0x38] sm:$0xff]
        %v2043 = vld [vmem:[%s11 + $0x40] sm:$0xff]
        %v2044 = vld [vmem:[%s11 + $0x48] sm:$0xff]
        %v2045 = vld [vmem:[%s11 + $0x50] sm:$0xff]
        %v2046 = vld [vmem:[%s11 + $0x58] sm:$0xff]
        %v2047 = vld [vmem:[%s11 + $0x60] sm:$0xff]
        %v2048 = vld [vmem:[%s11 + $0x68] sm:$0xff]
        %v2049 = vld [vmem:[%s11 + $0x70] sm:$0xff]
        %v2050 = vld [vmem:[%s11 + $0x78] sm:$0xff]
        %2051 = vmatprep.subr.mxu0 0.0
        %2052 = vmatpush1.msra.mxu0 %v2050
        %2053 = vmatprep.subr.mxu0 0.0
        %2054 = vmatpush1.msra.mxu0 %v2049
        %2055 = vmatprep.subr.mxu0 0.0
        %2056 = vmatpush1.msra.mxu0 %v2048
        %2057 = vmatprep.subr.mxu0 0.0
        %2058 = vmatpush1.msra.mxu0 %v2047
        %2059 = vmatprep.subr.mxu0 0.0
        %2060 = vmatpush1.msra.mxu0 %v2046
        %2061 = vmatprep.subr.mxu0 0.0
        %2062 = vmatpush1.msra.mxu0 %v2045
        %2063 = vmatprep.subr.mxu0 0.0
        %2064 = vmatpush1.msra.mxu0 %v2044
        %2065 = vmatprep.subr.mxu0 0.0
        %2066 = vmatpush1.msra.mxu0 %v2043
        %2067 = vmatprep.subr.mxu0 0.0
        %2068 = vmatpush1.msra.mxu0 %v2042
        %2069 = vmatprep.subr.mxu0 0.0
        %2070 = vmatpush1.msra.mxu0 %v2041
        %2071 = vmatprep.subr.mxu0 0.0
        %2072 = vmatpush1.msra.mxu0 %v2040
        %2073 = vmatprep.subr.mxu0 0.0
        %2074 = vmatpush1.msra.mxu0 %v2039
        %2075 = vmatprep.subr.mxu0 0.0
        %2076 = vmatpush1.msra.mxu0 %v2038
        %2077 = vmatprep.subr.mxu0 0.0
        %2078 = vmatpush1.msra.mxu0 %v2037
        %2079 = vmatprep.subr.mxu0 0.0
        %2080 = vmatpush1.msra.mxu0 %v2036
        %2081 = vmatprep.subr.mxu0 0.0
        %2082 = vmatpush1.msra.mxu0 %v2035
        %2083 = vmatprep.subr.mxu0 0.0
        %2084 = vmatpush2.msra.mxu0 0.0
        %2085 = vmatprep.subr.mxu0 0.0
        %2086 = vmatpush2.msra.mxu0 0.0
        %2087 = vmatprep.subr.mxu0 0.0
        %2088 = vmatpush2.msra.mxu0 0.0
        %2089 = vmatprep.subr.mxu0 0.0
        %2090 = vmatpush2.msra.mxu0 0.0
        %2091 = vmatprep.subr.mxu0 0.0
        %2092 = vmatpush2.msra.mxu0 0.0
        %2093 = vmatprep.subr.mxu0 0.0
        %2094 = vmatpush2.msra.mxu0 0.0
        %2095 = vmatprep.subr.mxu0 0.0
        %2096 = vmatpush2.msra.mxu0 0.0
        %2097 = vmatprep.subr.mxu0 0.0
        %2098 = vmatpush2.msra.mxu0 0.0
        %2099 = vmatprep.subr.mxu0 0.0
        %2100 = vmatpush2.msra.mxu0 0.0
        %2101 = vmatprep.subr.mxu0 0.0
        %2102 = vmatpush2.msra.mxu0 0.0
        %2103 = vmatprep.subr.mxu0 0.0
        %2104 = vmatpush2.msra.mxu0 0.0
        %2105 = vmatprep.subr.mxu0 0.0
        %2106 = vmatpush2.msra.mxu0 0.0
        %2107 = vmatprep.subr.mxu0 0.0
        %2108 = vmatpush2.msra.mxu0 0.0
        %2109 = vmatprep.subr.mxu0 0.0
        %2110 = vmatpush2.msra.mxu0 0.0
        %2111 = vmatprep.subr.mxu0 0.0
        %2112 = vmatpush2.msra.mxu0 0.0
        %2113 = vmatprep.subr.mxu0 0.0
        %2114 = vmatpush2.msra.mxu0 0.0
        %2115 = vmatprep.mubr.f32.mxu0 0.0
        %2116 = vmatmul.mubr.f32.gmra.mxu0 %v2032
        %v2117 = vpop.f32.mrf.mxu0
        %v2118 = vadd.f32 0.0, %v2117
        %v2119 = vpop.f32.mrf.mxu0
        %2120 = vmatprep.mubr.f32.mxu0 0.0
        %2121 = vmatmul.mubr.f32.gmra.mxu0 %v2033
        %v2122 = vpop.f32.mrf.mxu0
        %v2123 = vadd.f32 0.0, %v2122
        %v2124 = vpop.f32.mrf.mxu0
        %2125 = vmatprep.mubr.f32.mxu0 0.0
        %2126 = vmatmul.mubr.f32.gmra.mxu0 %v2034
        %v2127 = vpop.f32.mrf.mxu0
        %v2128 = vadd.f32 0.0, %v2127
        %v2129 = vpop.f32.mrf.mxu0
        %2130 = vdwg.mxu0
        %v2131 = vadd.f32 %v1852, %v2118
        %v2132 = vadd.f32 %v1853, %v2123
        %v2133 = vadd.f32 %v1854, %v2128
        %v2134 = vlaneseq
        %v2135 = vshrl.u32 %v2134, 7
        %v2136 = vsub.s32 0, %v2135
        %v2137 = vrot.slane %v553, %v2136
        %v2138 = vadd.f32 %v2131, %v2137
        %v2139 = vadd.f32 %v2132, %v2137
        %v2140 = vadd.f32 %v2133, %v2137
        %s2141 = scalar_lea.vmem %s6, 16
        %v2142 = vld [vmem:[%s2141] sm:$0xff]
        %v2143 = vld [vmem:[%s2141 + $0x8] sm:$0x1]
        %v2144 = vsel %vm546, %v2138, 0.0
        %2145 = vadd.xlane.f32.xlu0 %v2144
        %v2146 = vpop.xlane.xlu0 %2145
        %v2147 = vsel %vm546, %v2139, 0.0
        %2148 = vadd.xlane.f32.xlu0 %v2147
        %v2149 = vpop.xlane.xlu0 %2148
        %v2150 = vsel %vm560, %v2140, 0.0
        %2151 = vadd.xlane.f32.xlu0 %v2150
        %v2152 = vpop.xlane.xlu0 %2151
        %v2153 = vmul.f32 %v2146, %v564
        %v2154 = vmul.f32 %v2149, %v564
        %v2155 = vmul.f32 %v2152, %v564
        %v2156 = vsub.f32 %v2138, %v2153
        %v2157 = vsub.f32 %v2139, %v2154
        %v2158 = vsub.f32 %v2140, %v2155
        %v2159 = vmul.f32 %v2156, %v2156
        %v2160 = vmul.f32 %v2157, %v2157
        %v2161 = vmul.f32 %v2158, %v2158
        %v2162 = vsel %vm546, %v2159, 0.0
        %2163 = vadd.xlane.f32.xlu0 %v2162
        %v2164 = vpop.xlane.xlu0 %2163
        %v2165 = vsel %vm546, %v2160, 0.0
        %2166 = vadd.xlane.f32.xlu0 %v2165
        %v2167 = vpop.xlane.xlu0 %2166
        %v2168 = vsel %vm560, %v2161, 0.0
        %2169 = vadd.xlane.f32.xlu0 %v2168
        %v2170 = vpop.xlane.xlu0 %2169
        %v2171 = vmul.f32 %v2164, %v564
        %v2172 = vmul.f32 %v2167, %v564
        %v2173 = vmul.f32 %v2170, %v564
        %v2174 = vadd.f32 %v2171, 1e-06
        %v2175 = vadd.f32 %v2172, 1e-06
        %v2176 = vadd.f32 %v2173, 1e-06
        %v2177 = vrsqrt.pop %v2174
        %v2178 = vrsqrt.pop %v2175
        %v2179 = vrsqrt.pop %v2176
        %v2180 = vmul.f32 %v2156, %v2177
        %v2181 = vmul.f32 %v2157, %v2178
        %v2182 = vmul.f32 %v2158, %v2179
        %v2183 = vlaneseq
        %v2184 = vshrl.u32 %v2183, 7
        %v2185 = vsub.s32 0, %v2184
        %v2186 = vrot.slane %v2142, %v2185
        %v2187 = vmul.f32 %v2180, %v2186
        %v2188 = vmul.f32 %v2181, %v2186
        %v2189 = vmul.f32 %v2182, %v2186
        %v2190 = vlaneseq
        %v2191 = vshrl.u32 %v2190, 7
        %v2192 = vsub.s32 1, %v2191
        %v2193 = vrot.slane %v2142, %v2192
        %v2194 = vadd.f32 %v2187, %v2193
        %v2195 = vadd.f32 %v2188, %v2193
        %v2196 = vadd.f32 %v2189, %v2193
        %s2197 = scalar_lea.vmem %s7, 32
        %v2198 = vld [vmem:[%s2197] sm:$0xff]
        %v2199 = vld [vmem:[%s2197 + $0x8] sm:$0xff]
        %v2200 = vld [vmem:[%s2197 + $0x10] sm:$0xff]
        %v2201 = vld [vmem:[%s2197 + $0x18] sm:$0xff]
        %v2203 = vsel %vm546, %v2194, 0
        %v2206 = vsel %vm546, %v2195, 0
        %v2209 = vsel %vm546, %v2196, 0
        %2211 = vmatprep.subr.mxu0 0.0
        %2212 = vmatpush1.msra.mxu0 0.0
        %2213 = vmatprep.subr.mxu0 0.0
        %2214 = vmatpush1.msra.mxu0 0.0
        %2215 = vmatprep.subr.mxu0 0.0
        %2216 = vmatpush1.msra.mxu0 0.0
        %2217 = vmatprep.subr.mxu0 0.0
        %2218 = vmatpush1.msra.mxu0 0.0
        %2219 = vmatprep.subr.mxu0 0.0
        %2220 = vmatpush1.msra.mxu0 0.0
        %2221 = vmatprep.subr.mxu0 0.0
        %2222 = vmatpush1.msra.mxu0 0.0
        %2223 = vmatprep.subr.mxu0 0.0
        %2224 = vmatpush1.msra.mxu0 0.0
        %2225 = vmatprep.subr.mxu0 0.0
        %2226 = vmatpush1.msra.mxu0 0.0
        %2227 = vmatprep.subr.mxu0 0.0
        %2228 = vmatpush1.msra.mxu0 0.0
        %2229 = vmatprep.subr.mxu0 0.0
        %2230 = vmatpush1.msra.mxu0 0.0
        %2231 = vmatprep.subr.mxu0 0.0
        %2232 = vmatpush1.msra.mxu0 0.0
        %2233 = vmatprep.subr.mxu0 0.0
        %2234 = vmatpush1.msra.mxu0 0.0
        %2235 = vmatprep.subr.mxu0 0.0
        %2236 = vmatpush1.msra.mxu0 %v2201
        %2237 = vmatprep.subr.mxu0 0.0
        %2238 = vmatpush1.msra.mxu0 %v2200
        %2239 = vmatprep.subr.mxu0 0.0
        %2240 = vmatpush1.msra.mxu0 %v2199
        %2241 = vmatprep.subr.mxu0 0.0
        %2242 = vmatpush1.msra.mxu0 %v2198
        %2243 = vmatprep.subr.mxu0 0.0
        %2244 = vmatpush2.msra.mxu0 0.0
        %2245 = vmatprep.subr.mxu0 0.0
        %2246 = vmatpush2.msra.mxu0 0.0
        %2247 = vmatprep.subr.mxu0 0.0
        %2248 = vmatpush2.msra.mxu0 0.0
        %2249 = vmatprep.subr.mxu0 0.0
        %2250 = vmatpush2.msra.mxu0 0.0
        %2251 = vmatprep.subr.mxu0 0.0
        %2252 = vmatpush2.msra.mxu0 0.0
        %2253 = vmatprep.subr.mxu0 0.0
        %2254 = vmatpush2.msra.mxu0 0.0
        %2255 = vmatprep.subr.mxu0 0.0
        %2256 = vmatpush2.msra.mxu0 0.0
        %2257 = vmatprep.subr.mxu0 0.0
        %2258 = vmatpush2.msra.mxu0 0.0
        %2259 = vmatprep.subr.mxu0 0.0
        %2260 = vmatpush2.msra.mxu0 0.0
        %2261 = vmatprep.subr.mxu0 0.0
        %2262 = vmatpush2.msra.mxu0 0.0
        %2263 = vmatprep.subr.mxu0 0.0
        %2264 = vmatpush2.msra.mxu0 0.0
        %2265 = vmatprep.subr.mxu0 0.0
        %2266 = vmatpush2.msra.mxu0 0.0
        %2267 = vmatprep.subr.mxu0 0.0
        %2268 = vmatpush2.msra.mxu0 0.0
        %2269 = vmatprep.subr.mxu0 0.0
        %2270 = vmatpush2.msra.mxu0 0.0
        %2271 = vmatprep.subr.mxu0 0.0
        %2272 = vmatpush2.msra.mxu0 0.0
        %2273 = vmatprep.subr.mxu0 0.0
        %2274 = vmatpush2.msra.mxu0 0.0
        %2275 = vmatprep.mubr.f32.mxu0 0.0
        %2276 = vmatmul.mubr.f32.gmra.mxu0 %v2203
        %v2277 = vpop.f32.mrf.mxu0
        %v2278 = vadd.f32 0.0, %v2277
        %v2279 = vpop.f32.mrf.mxu0
        %2280 = vmatprep.mubr.f32.mxu0 0.0
        %2281 = vmatmul.mubr.f32.gmra.mxu0 %v2206
        %v2282 = vpop.f32.mrf.mxu0
        %v2283 = vadd.f32 0.0, %v2282
        %v2284 = vpop.f32.mrf.mxu0
        %2285 = vmatprep.mubr.f32.mxu0 0.0
        %2286 = vmatmul.mubr.f32.gmra.mxu0 %v2209
        %v2287 = vpop.f32.mrf.mxu0
        %v2288 = vadd.f32 0.0, %v2287
        %v2289 = vpop.f32.mrf.mxu0
        %2290 = vdwg.mxu0
        %v2291 = vlaneseq
        %v2292 = vshrl.u32 %v2291, 7
        %v2293 = vsub.s32 2, %v2292
        %v2294 = vrot.slane %v2142, %v2293
        %v2295 = vadd.f32 %v2278, %v2294
        %v2296 = vadd.f32 %v2283, %v2294
        %v2297 = vadd.f32 %v2288, %v2294
        %v2298 = vlaneseq
        %v2299 = vshrl.u32 %v2298, 7
        %v2300 = vsub.s32 3, %v2299
        %v2301 = vrot.slane %v2142, %v2300
        %2303 = vrot.lane.b32.xlu0 %v2301, 32
        %v2304 = vpop.permute.xlu0 %2303
        %v2306 = vadd.f32 %v2278, %v2304
        %v2307 = vadd.f32 %v2283, %v2304
        %v2308 = vadd.f32 %v2288, %v2304
        %v2309 = vlaneseq
        %v2310 = vshrl.u32 %v2309, 7
        %v2311 = vsub.s32 4, %v2310
        %v2312 = vrot.slane %v2142, %v2311
        %2314 = vrot.lane.b32.xlu0 %v2312, 64
        %v2315 = vpop.permute.xlu0 %2314
        %v2317 = vadd.f32 %v2278, %v2315
        %v2318 = vadd.f32 %v2283, %v2315
        %v2319 = vadd.f32 %v2288, %v2315
        %2323 = vrot.lane.b32.xlu0 %v2306, 96
        %v2324 = vpop.permute.xlu0 %2323
        %2325 = vrot.lane.b32.xlu0 %v2307, 96
        %v2326 = vpop.permute.xlu0 %2325
        %2327 = vrot.lane.b32.xlu0 %v2308, 96
        %v2328 = vpop.permute.xlu0 %2327
        %v2330 = vsel %vm740, %v2295, 0
        %v2333 = vsel %vm740, %v2296, 0
        %v2336 = vsel %vm740, %v2297, 0
        %v2338 = vsel %vm740, %v2324, 0
        %v2340 = vsel %vm740, %v2326, 0
        %v2342 = vsel %vm740, %v2328, 0
        %2344 = vmatprep.subr.mxu0 0.0
        %2345 = vmatpush1.xpose.msra.mxu0 0.0
        %2346 = vmatprep.subr.mxu0 0.0
        %2347 = vmatpush1.xpose.msra.mxu0 0.0
        %2348 = vmatprep.subr.mxu0 0.0
        %2349 = vmatpush1.xpose.msra.mxu0 0.0
        %2350 = vmatprep.subr.mxu0 0.0
        %2351 = vmatpush1.xpose.msra.mxu0 0.0
        %2352 = vmatprep.subr.mxu0 0.0
        %2353 = vmatpush1.xpose.msra.mxu0 0.0
        %2354 = vmatprep.subr.mxu0 0.0
        %2355 = vmatpush1.xpose.msra.mxu0 0.0
        %2356 = vmatprep.subr.mxu0 0.0
        %2357 = vmatpush1.xpose.msra.mxu0 0.0
        %2358 = vmatprep.subr.mxu0 0.0
        %2359 = vmatpush1.xpose.msra.mxu0 0.0
        %2360 = vmatprep.subr.mxu0 0.0
        %2361 = vmatpush1.xpose.msra.mxu0 0.0
        %2362 = vmatprep.subr.mxu0 0.0
        %2363 = vmatpush1.xpose.msra.mxu0 0.0
        %2364 = vmatprep.subr.mxu0 0.0
        %2365 = vmatpush1.xpose.msra.mxu0 0.0
        %2366 = vmatprep.subr.mxu0 0.0
        %2367 = vmatpush1.xpose.msra.mxu0 0.0
        %2368 = vmatprep.subr.mxu0 0.0
        %2369 = vmatpush1.xpose.msra.mxu0 0.0
        %2370 = vmatprep.subr.mxu0 0.0
        %2371 = vmatpush1.xpose.msra.mxu0 %v2342
        %2372 = vmatprep.subr.mxu0 0.0
        %2373 = vmatpush1.xpose.msra.mxu0 %v2340
        %2374 = vmatprep.subr.mxu0 0.0
        %2375 = vmatpush1.xpose.msra.mxu0 %v2338
        %2376 = vmatprep.subr.mxu0 0.0
        %2377 = vmatpush2.xpose.msra.mxu0 0.0
        %2378 = vmatprep.subr.mxu0 0.0
        %2379 = vmatpush2.xpose.msra.mxu0 0.0
        %2380 = vmatprep.subr.mxu0 0.0
        %2381 = vmatpush2.xpose.msra.mxu0 0.0
        %2382 = vmatprep.subr.mxu0 0.0
        %2383 = vmatpush2.xpose.msra.mxu0 0.0
        %2384 = vmatprep.subr.mxu0 0.0
        %2385 = vmatpush2.xpose.msra.mxu0 0.0
        %2386 = vmatprep.subr.mxu0 0.0
        %2387 = vmatpush2.xpose.msra.mxu0 0.0
        %2388 = vmatprep.subr.mxu0 0.0
        %2389 = vmatpush2.xpose.msra.mxu0 0.0
        %2390 = vmatprep.subr.mxu0 0.0
        %2391 = vmatpush2.xpose.msra.mxu0 0.0
        %2392 = vmatprep.subr.mxu0 0.0
        %2393 = vmatpush2.xpose.msra.mxu0 0.0
        %2394 = vmatprep.subr.mxu0 0.0
        %2395 = vmatpush2.xpose.msra.mxu0 0.0
        %2396 = vmatprep.subr.mxu0 0.0
        %2397 = vmatpush2.xpose.msra.mxu0 0.0
        %2398 = vmatprep.subr.mxu0 0.0
        %2399 = vmatpush2.xpose.msra.mxu0 0.0
        %2400 = vmatprep.subr.mxu0 0.0
        %2401 = vmatpush2.xpose.msra.mxu0 0.0
        %2402 = vmatprep.subr.mxu0 0.0
        %2403 = vmatpush2.xpose.msra.mxu0 0.0
        %2404 = vmatprep.subr.mxu0 0.0
        %2405 = vmatpush2.xpose.msra.mxu0 0.0
        %2406 = vmatprep.subr.mxu0 0.0
        %2407 = vmatpush2.xpose.msra.mxu0 0.0
        %2408 = vmatprep.mubr.f32.mxu0 0.0
        %2409 = vmatmul.mubr.f32.gmra.mxu0 %v2330
        %v2410 = vpop.f32.mrf.mxu0
        %v2411 = vadd.f32 0.0, %v2410
        %v2412 = vpop.f32.mrf.mxu0
        %2413 = vmatprep.mubr.f32.mxu0 0.0
        %2414 = vmatmul.mubr.f32.gmra.mxu0 %v2333
        %v2415 = vpop.f32.mrf.mxu0
        %v2416 = vadd.f32 0.0, %v2415
        %v2417 = vpop.f32.mrf.mxu0
        %2418 = vmatprep.mubr.f32.mxu0 0.0
        %2419 = vmatmul.mubr.f32.gmra.mxu0 %v2336
        %v2420 = vpop.f32.mrf.mxu0
        %v2421 = vadd.f32 0.0, %v2420
        %v2422 = vpop.f32.mrf.mxu0
        %2423 = vdwg.mxu0
        %v2424 = vmul.f32 %v2411, 0.35355338
        %v2425 = vmul.f32 %v2416, 0.35355338
        %v2426 = vmul.f32 %v2421, 0.35355338
        %v2427 = vsel %vm839, %v2424, -inf
        %2428 = vmax.xlane.f32.xlu0 %v2427
        %v2429 = vpop.xlane.xlu0 %2428
        %v2430 = vsel %vm839, %v2425, -inf
        %2431 = vmax.xlane.f32.xlu0 %v2430
        %v2432 = vpop.xlane.xlu0 %2431
        %v2433 = vsel %vm846, %v2426, -inf
        %2434 = vmax.xlane.f32.xlu0 %v2433
        %v2435 = vpop.xlane.xlu0 %2434
        %v2436 = vsub.f32 %v2424, %v2429
        %v2437 = vsub.f32 %v2425, %v2432
        %v2438 = vsub.f32 %v2426, %v2435
        %v2439 = vmul.f32 %v2436, 1.442695
        %v2440 = vpow.pop %v2439
        %v2441 = vmul.f32 %v2437, 1.442695
        %v2442 = vpow.pop %v2441
        %v2443 = vmul.f32 %v2438, 1.442695
        %v2444 = vpow.pop %v2443
        %v2445 = vsel %vm839, %v2440, 0.0
        %2446 = vadd.xlane.f32.xlu0 %v2445
        %v2447 = vpop.xlane.xlu0 %2446
        %v2448 = vsel %vm839, %v2442, 0.0
        %2449 = vadd.xlane.f32.xlu0 %v2448
        %v2450 = vpop.xlane.xlu0 %2449
        %v2451 = vsel %vm846, %v2444, 0.0
        %2452 = vadd.xlane.f32.xlu0 %v2451
        %v2453 = vpop.xlane.xlu0 %2452
        %v2454 = vrcp.pop %v2447
        %v2455 = vrcp.pop %v2450
        %v2456 = vrcp.pop %v2453
        %v2457 = vmul.f32 %v2440, %v2454
        %v2458 = vmul.f32 %v2442, %v2455
        %v2459 = vmul.f32 %v2444, %v2456
        %2463 = vrot.lane.b32.xlu0 %v2317, 64
        %v2464 = vpop.permute.xlu0 %2463
        %2465 = vrot.lane.b32.xlu0 %v2318, 64
        %v2466 = vpop.permute.xlu0 %2465
        %2467 = vrot.lane.b32.xlu0 %v2319, 64
        %v2468 = vpop.permute.xlu0 %2467
        %v2472 = vsel %vm839, %v2457, 0
        %v2475 = vsel %vm839, %v2458, 0
        %v2478 = vsel %vm839, %v2459, 0
        %v2480 = vsel %vm894, %v2468, 0
        %2482 = vmatprep.subr.mxu0 0.0
        %2483 = vmatpush1.msra.mxu0 0.0
        %2484 = vmatprep.subr.mxu0 0.0
        %2485 = vmatpush1.msra.mxu0 0.0
        %2486 = vmatprep.subr.mxu0 0.0
        %2487 = vmatpush1.msra.mxu0 0.0
        %2488 = vmatprep.subr.mxu0 0.0
        %2489 = vmatpush1.msra.mxu0 0.0
        %2490 = vmatprep.subr.mxu0 0.0
        %2491 = vmatpush1.msra.mxu0 0.0
        %2492 = vmatprep.subr.mxu0 0.0
        %2493 = vmatpush1.msra.mxu0 0.0
        %2494 = vmatprep.subr.mxu0 0.0
        %2495 = vmatpush1.msra.mxu0 0.0
        %2496 = vmatprep.subr.mxu0 0.0
        %2497 = vmatpush1.msra.mxu0 0.0
        %2498 = vmatprep.subr.mxu0 0.0
        %2499 = vmatpush1.msra.mxu0 0.0
        %2500 = vmatprep.subr.mxu0 0.0
        %2501 = vmatpush1.msra.mxu0 0.0
        %2502 = vmatprep.subr.mxu0 0.0
        %2503 = vmatpush1.msra.mxu0 0.0
        %2504 = vmatprep.subr.mxu0 0.0
        %2505 = vmatpush1.msra.mxu0 0.0
        %2506 = vmatprep.subr.mxu0 0.0
        %2507 = vmatpush1.msra.mxu0 0.0
        %2508 = vmatprep.subr.mxu0 0.0
        %2509 = vmatpush1.msra.mxu0 %v2480
        %2510 = vmatprep.subr.mxu0 0.0
        %2511 = vmatpush1.msra.mxu0 %v2466
        %2512 = vmatprep.subr.mxu0 0.0
        %2513 = vmatpush1.msra.mxu0 %v2464
        %2514 = vmatprep.subr.mxu0 0.0
        %2515 = vmatpush2.msra.mxu0 0.0
        %2516 = vmatprep.subr.mxu0 0.0
        %2517 = vmatpush2.msra.mxu0 0.0
        %2518 = vmatprep.subr.mxu0 0.0
        %2519 = vmatpush2.msra.mxu0 0.0
        %2520 = vmatprep.subr.mxu0 0.0
        %2521 = vmatpush2.msra.mxu0 0.0
        %2522 = vmatprep.subr.mxu0 0.0
        %2523 = vmatpush2.msra.mxu0 0.0
        %2524 = vmatprep.subr.mxu0 0.0
        %2525 = vmatpush2.msra.mxu0 0.0
        %2526 = vmatprep.subr.mxu0 0.0
        %2527 = vmatpush2.msra.mxu0 0.0
        %2528 = vmatprep.subr.mxu0 0.0
        %2529 = vmatpush2.msra.mxu0 0.0
        %2530 = vmatprep.subr.mxu0 0.0
        %2531 = vmatpush2.msra.mxu0 0.0
        %2532 = vmatprep.subr.mxu0 0.0
        %2533 = vmatpush2.msra.mxu0 0.0
        %2534 = vmatprep.subr.mxu0 0.0
        %2535 = vmatpush2.msra.mxu0 0.0
        %2536 = vmatprep.subr.mxu0 0.0
        %2537 = vmatpush2.msra.mxu0 0.0
        %2538 = vmatprep.subr.mxu0 0.0
        %2539 = vmatpush2.msra.mxu0 0.0
        %2540 = vmatprep.subr.mxu0 0.0
        %2541 = vmatpush2.msra.mxu0 0.0
        %2542 = vmatprep.subr.mxu0 0.0
        %2543 = vmatpush2.msra.mxu0 0.0
        %2544 = vmatprep.subr.mxu0 0.0
        %2545 = vmatpush2.msra.mxu0 0.0
        %2546 = vmatprep.mubr.f32.mxu0 0.0
        %2547 = vmatmul.mubr.f32.gmra.mxu0 %v2472
        %v2548 = vpop.f32.mrf.mxu0
        %v2549 = vadd.f32 0.0, %v2548
        %v2550 = vpop.f32.mrf.mxu0
        %2551 = vmatprep.mubr.f32.mxu0 0.0
        %2552 = vmatmul.mubr.f32.gmra.mxu0 %v2475
        %v2553 = vpop.f32.mrf.mxu0
        %v2554 = vadd.f32 0.0, %v2553
        %v2555 = vpop.f32.mrf.mxu0
        %2556 = vmatprep.mubr.f32.mxu0 0.0
        %2557 = vmatmul.mubr.f32.gmra.mxu0 %v2478
        %v2558 = vpop.f32.mrf.mxu0
        %v2559 = vadd.f32 0.0, %v2558
        %v2560 = vpop.f32.mrf.mxu0
        %2561 = vdwg.mxu0
        %2562 = vst.msk [vmem:[#allocation3] sm:$0xff] %vm740, %v2549
        %2563 = vst.msk [vmem:[#allocation3 + $0x8] sm:$0xff] %vm740, %v2554
        %2564 = vst.msk [vmem:[#allocation3 + $0x10] sm:$0x1] %vm979, %v2559
        %2565 = vrot.lane.b32.xlu0 %v2295, 120
        %v2566 = vpop.permute.xlu0 %2565
        %2567 = vrot.lane.b32.xlu0 %v2296, 120
        %v2568 = vpop.permute.xlu0 %2567
        %2569 = vrot.lane.b32.xlu0 %v2297, 120
        %v2570 = vpop.permute.xlu0 %2569
        %2571 = vrot.lane.b32.xlu0 %v2306, 88
        %v2572 = vpop.permute.xlu0 %2571
        %2573 = vrot.lane.b32.xlu0 %v2307, 88
        %v2574 = vpop.permute.xlu0 %2573
        %2575 = vrot.lane.b32.xlu0 %v2308, 88
        %v2576 = vpop.permute.xlu0 %2575
        %v2577 = vsel %vm740, %v2566, 0
        %v2579 = vsel %vm740, %v2568, 0
        %v2581 = vsel %vm740, %v2570, 0
        %v2583 = vsel %vm740, %v2572, 0
        %v2585 = vsel %vm740, %v2574, 0
        %v2587 = vsel %vm740, %v2576, 0
        %2589 = vmatprep.subr.mxu0 0.0
        %2590 = vmatpush1.xpose.msra.mxu0 0.0
        %2591 = vmatprep.subr.mxu0 0.0
        %2592 = vmatpush1.xpose.msra.mxu0 0.0
        %2593 = vmatprep.subr.mxu0 0.0
        %2594 = vmatpush1.xpose.msra.mxu0 0.0
        %2595 = vmatprep.subr.mxu0 0.0
        %2596 = vmatpush1.xpose.msra.mxu0 0.0
        %2597 = vmatprep.subr.mxu0 0.0
        %2598 = vmatpush1.xpose.msra.mxu0 0.0
        %2599 = vmatprep.subr.mxu0 0.0
        %2600 = vmatpush1.xpose.msra.mxu0 0.0
        %2601 = vmatprep.subr.mxu0 0.0
        %2602 = vmatpush1.xpose.msra.mxu0 0.0
        %2603 = vmatprep.subr.mxu0 0.0
        %2604 = vmatpush1.xpose.msra.mxu0 0.0
        %2605 = vmatprep.subr.mxu0 0.0
        %2606 = vmatpush1.xpose.msra.mxu0 0.0
        %2607 = vmatprep.subr.mxu0 0.0
        %2608 = vmatpush1.xpose.msra.mxu0 0.0
        %2609 = vmatprep.subr.mxu0 0.0
        %2610 = vmatpush1.xpose.msra.mxu0 0.0
        %2611 = vmatprep.subr.mxu0 0.0
        %2612 = vmatpush1.xpose.msra.mxu0 0.0
        %2613 = vmatprep.subr.mxu0 0.0
        %2614 = vmatpush1.xpose.msra.mxu0 0.0
        %2615 = vmatprep.subr.mxu0 0.0
        %2616 = vmatpush1.xpose.msra.mxu0 %v2587
        %2617 = vmatprep.subr.mxu0 0.0
        %2618 = vmatpush1.xpose.msra.mxu0 %v2585
        %2619 = vmatprep.subr.mxu0 0.0
        %2620 = vmatpush1.xpose.msra.mxu0 %v2583
        %2621 = vmatprep.subr.mxu0 0.0
        %2622 = vmatpush2.xpose.msra.mxu0 0.0
        %2623 = vmatprep.subr.mxu0 0.0
        %2624 = vmatpush2.xpose.msra.mxu0 0.0
        %2625 = vmatprep.subr.mxu0 0.0
        %2626 = vmatpush2.xpose.msra.mxu0 0.0
        %2627 = vmatprep.subr.mxu0 0.0
        %2628 = vmatpush2.xpose.msra.mxu0 0.0
        %2629 = vmatprep.subr.mxu0 0.0
        %2630 = vmatpush2.xpose.msra.mxu0 0.0
        %2631 = vmatprep.subr.mxu0 0.0
        %2632 = vmatpush2.xpose.msra.mxu0 0.0
        %2633 = vmatprep.subr.mxu0 0.0
        %2634 = vmatpush2.xpose.msra.mxu0 0.0
        %2635 = vmatprep.subr.mxu0 0.0
        %2636 = vmatpush2.xpose.msra.mxu0 0.0
        %2637 = vmatprep.subr.mxu0 0.0
        %2638 = vmatpush2.xpose.msra.mxu0 0.0
        %2639 = vmatprep.subr.mxu0 0.0
        %2640 = vmatpush2.xpose.msra.mxu0 0.0
        %2641 = vmatprep.subr.mxu0 0.0
        %2642 = vmatpush2.xpose.msra.mxu0 0.0
        %2643 = vmatprep.subr.mxu0 0.0
        %2644 = vmatpush2.xpose.msra.mxu0 0.0
        %2645 = vmatprep.subr.mxu0 0.0
        %2646 = vmatpush2.xpose.msra.mxu0 0.0
        %2647 = vmatprep.subr.mxu0 0.0
        %2648 = vmatpush2.xpose.msra.mxu0 0.0
        %2649 = vmatprep.subr.mxu0 0.0
        %2650 = vmatpush2.xpose.msra.mxu0 0.0
        %2651 = vmatprep.subr.mxu0 0.0
        %2652 = vmatpush2.xpose.msra.mxu0 0.0
        %2653 = vmatprep.mubr.f32.mxu0 0.0
        %2654 = vmatmul.mubr.f32.gmra.mxu0 %v2577
        %v2655 = vpop.f32.mrf.mxu0
        %v2656 = vadd.f32 0.0, %v2655
        %v2657 = vpop.f32.mrf.mxu0
        %2658 = vmatprep.mubr.f32.mxu0 0.0
        %2659 = vmatmul.mubr.f32.gmra.mxu0 %v2579
        %v2660 = vpop.f32.mrf.mxu0
        %v2661 = vadd.f32 0.0, %v2660
        %v2662 = vpop.f32.mrf.mxu0
        %2663 = vmatprep.mubr.f32.mxu0 0.0
        %2664 = vmatmul.mubr.f32.gmra.mxu0 %v2581
        %v2665 = vpop.f32.mrf.mxu0
        %v2666 = vadd.f32 0.0, %v2665
        %v2667 = vpop.f32.mrf.mxu0
        %2668 = vdwg.mxu0
        %v2669 = vmul.f32 %v2656, 0.35355338
        %v2670 = vmul.f32 %v2661, 0.35355338
        %v2671 = vmul.f32 %v2666, 0.35355338
        %v2672 = vsel %vm839, %v2669, -inf
        %2673 = vmax.xlane.f32.xlu0 %v2672
        %v2674 = vpop.xlane.xlu0 %2673
        %v2675 = vsel %vm839, %v2670, -inf
        %2676 = vmax.xlane.f32.xlu0 %v2675
        %v2677 = vpop.xlane.xlu0 %2676
        %v2678 = vsel %vm846, %v2671, -inf
        %2679 = vmax.xlane.f32.xlu0 %v2678
        %v2680 = vpop.xlane.xlu0 %2679
        %v2681 = vsub.f32 %v2669, %v2674
        %v2682 = vsub.f32 %v2670, %v2677
        %v2683 = vsub.f32 %v2671, %v2680
        %v2684 = vmul.f32 %v2681, 1.442695
        %v2685 = vpow.pop %v2684
        %v2686 = vmul.f32 %v2682, 1.442695
        %v2687 = vpow.pop %v2686
        %v2688 = vmul.f32 %v2683, 1.442695
        %v2689 = vpow.pop %v2688
        %v2690 = vsel %vm839, %v2685, 0.0
        %2691 = vadd.xlane.f32.xlu0 %v2690
        %v2692 = vpop.xlane.xlu0 %2691
        %v2693 = vsel %vm839, %v2687, 0.0
        %2694 = vadd.xlane.f32.xlu0 %v2693
        %v2695 = vpop.xlane.xlu0 %2694
        %v2696 = vsel %vm846, %v2689, 0.0
        %2697 = vadd.xlane.f32.xlu0 %v2696
        %v2698 = vpop.xlane.xlu0 %2697
        %v2699 = vrcp.pop %v2692
        %v2700 = vrcp.pop %v2695
        %v2701 = vrcp.pop %v2698
        %v2702 = vmul.f32 %v2685, %v2699
        %v2703 = vmul.f32 %v2687, %v2700
        %v2704 = vmul.f32 %v2689, %v2701
        %2705 = vrot.lane.b32.xlu0 %v2317, 56
        %v2706 = vpop.permute.xlu0 %2705
        %2707 = vrot.lane.b32.xlu0 %v2318, 56
        %v2708 = vpop.permute.xlu0 %2707
        %2709 = vrot.lane.b32.xlu0 %v2319, 56
        %v2710 = vpop.permute.xlu0 %2709
        %v2714 = vsel %vm839, %v2702, 0
        %v2717 = vsel %vm839, %v2703, 0
        %v2720 = vsel %vm839, %v2704, 0
        %v2722 = vsel %vm894, %v2710, 0
        %2724 = vmatprep.subr.mxu0 0.0
        %2725 = vmatpush1.msra.mxu0 0.0
        %2726 = vmatprep.subr.mxu0 0.0
        %2727 = vmatpush1.msra.mxu0 0.0
        %2728 = vmatprep.subr.mxu0 0.0
        %2729 = vmatpush1.msra.mxu0 0.0
        %2730 = vmatprep.subr.mxu0 0.0
        %2731 = vmatpush1.msra.mxu0 0.0
        %2732 = vmatprep.subr.mxu0 0.0
        %2733 = vmatpush1.msra.mxu0 0.0
        %2734 = vmatprep.subr.mxu0 0.0
        %2735 = vmatpush1.msra.mxu0 0.0
        %2736 = vmatprep.subr.mxu0 0.0
        %2737 = vmatpush1.msra.mxu0 0.0
        %2738 = vmatprep.subr.mxu0 0.0
        %2739 = vmatpush1.msra.mxu0 0.0
        %2740 = vmatprep.subr.mxu0 0.0
        %2741 = vmatpush1.msra.mxu0 0.0
        %2742 = vmatprep.subr.mxu0 0.0
        %2743 = vmatpush1.msra.mxu0 0.0
        %2744 = vmatprep.subr.mxu0 0.0
        %2745 = vmatpush1.msra.mxu0 0.0
        %2746 = vmatprep.subr.mxu0 0.0
        %2747 = vmatpush1.msra.mxu0 0.0
        %2748 = vmatprep.subr.mxu0 0.0
        %2749 = vmatpush1.msra.mxu0 0.0
        %2750 = vmatprep.subr.mxu0 0.0
        %2751 = vmatpush1.msra.mxu0 %v2722
        %2752 = vmatprep.subr.mxu0 0.0
        %2753 = vmatpush1.msra.mxu0 %v2708
        %2754 = vmatprep.subr.mxu0 0.0
        %2755 = vmatpush1.msra.mxu0 %v2706
        %2756 = vmatprep.subr.mxu0 0.0
        %2757 = vmatpush2.msra.mxu0 0.0
        %2758 = vmatprep.subr.mxu0 0.0
        %2759 = vmatpush2.msra.mxu0 0.0
        %2760 = vmatprep.subr.mxu0 0.0
        %2761 = vmatpush2.msra.mxu0 0.0
        %2762 = vmatprep.subr.mxu0 0.0
        %2763 = vmatpush2.msra.mxu0 0.0
        %2764 = vmatprep.subr.mxu0 0.0
        %2765 = vmatpush2.msra.mxu0 0.0
        %2766 = vmatprep.subr.mxu0 0.0
        %2767 = vmatpush2.msra.mxu0 0.0
        %2768 = vmatprep.subr.mxu0 0.0
        %2769 = vmatpush2.msra.mxu0 0.0
        %2770 = vmatprep.subr.mxu0 0.0
        %2771 = vmatpush2.msra.mxu0 0.0
        %2772 = vmatprep.subr.mxu0 0.0
        %2773 = vmatpush2.msra.mxu0 0.0
        %2774 = vmatprep.subr.mxu0 0.0
        %2775 = vmatpush2.msra.mxu0 0.0
        %2776 = vmatprep.subr.mxu0 0.0
        %2777 = vmatpush2.msra.mxu0 0.0
        %2778 = vmatprep.subr.mxu0 0.0
        %2779 = vmatpush2.msra.mxu0 0.0
        %2780 = vmatprep.subr.mxu0 0.0
        %2781 = vmatpush2.msra.mxu0 0.0
        %2782 = vmatprep.subr.mxu0 0.0
        %2783 = vmatpush2.msra.mxu0 0.0
        %2784 = vmatprep.subr.mxu0 0.0
        %2785 = vmatpush2.msra.mxu0 0.0
        %2786 = vmatprep.subr.mxu0 0.0
        %2787 = vmatpush2.msra.mxu0 0.0
        %2788 = vmatprep.mubr.f32.mxu0 0.0
        %2789 = vmatmul.mubr.f32.gmra.mxu0 %v2714
        %v2790 = vpop.f32.mrf.mxu0
        %v2791 = vadd.f32 0.0, %v2790
        %v2792 = vpop.f32.mrf.mxu0
        %2793 = vmatprep.mubr.f32.mxu0 0.0
        %2794 = vmatmul.mubr.f32.gmra.mxu0 %v2717
        %v2795 = vpop.f32.mrf.mxu0
        %v2796 = vadd.f32 0.0, %v2795
        %v2797 = vpop.f32.mrf.mxu0
        %2798 = vmatprep.mubr.f32.mxu0 0.0
        %2799 = vmatmul.mubr.f32.gmra.mxu0 %v2720
        %v2800 = vpop.f32.mrf.mxu0
        %v2801 = vadd.f32 0.0, %v2800
        %v2802 = vpop.f32.mrf.mxu0
        %2803 = vdwg.mxu0
        %2807 = vrot.lane.b32.xlu0 %v2791, 8
        %v2808 = vpop.permute.xlu0 %2807
        %2809 = vrot.lane.b32.xlu0 %v2796, 8
        %v2810 = vpop.permute.xlu0 %2809
        %2811 = vrot.lane.b32.xlu0 %v2801, 8
        %v2812 = vpop.permute.xlu0 %2811
        %2816 = vst.msk [vmem:[#allocation3] sm:$0xff] %vm1232, %v2808
        %2817 = vst.msk [vmem:[#allocation3 + $0x8] sm:$0xff] %vm1232, %v2810
        %2818 = vst.msk [vmem:[#allocation3 + $0x10] sm:$0x1] %vm1235, %v2812
        %2819 = vrot.lane.b32.xlu0 %v2295, 112
        %v2820 = vpop.permute.xlu0 %2819
        %2821 = vrot.lane.b32.xlu0 %v2296, 112
        %v2822 = vpop.permute.xlu0 %2821
        %2823 = vrot.lane.b32.xlu0 %v2297, 112
        %v2824 = vpop.permute.xlu0 %2823
        %2825 = vrot.lane.b32.xlu0 %v2306, 80
        %v2826 = vpop.permute.xlu0 %2825
        %2827 = vrot.lane.b32.xlu0 %v2307, 80
        %v2828 = vpop.permute.xlu0 %2827
        %2829 = vrot.lane.b32.xlu0 %v2308, 80
        %v2830 = vpop.permute.xlu0 %2829
        %v2831 = vsel %vm740, %v2820, 0
        %v2833 = vsel %vm740, %v2822, 0
        %v2835 = vsel %vm740, %v2824, 0
        %v2837 = vsel %vm740, %v2826, 0
        %v2839 = vsel %vm740, %v2828, 0
        %v2841 = vsel %vm740, %v2830, 0
        %2843 = vmatprep.subr.mxu0 0.0
        %2844 = vmatpush1.xpose.msra.mxu0 0.0
        %2845 = vmatprep.subr.mxu0 0.0
        %2846 = vmatpush1.xpose.msra.mxu0 0.0
        %2847 = vmatprep.subr.mxu0 0.0
        %2848 = vmatpush1.xpose.msra.mxu0 0.0
        %2849 = vmatprep.subr.mxu0 0.0
        %2850 = vmatpush1.xpose.msra.mxu0 0.0
        %2851 = vmatprep.subr.mxu0 0.0
        %2852 = vmatpush1.xpose.msra.mxu0 0.0
        %2853 = vmatprep.subr.mxu0 0.0
        %2854 = vmatpush1.xpose.msra.mxu0 0.0
        %2855 = vmatprep.subr.mxu0 0.0
        %2856 = vmatpush1.xpose.msra.mxu0 0.0
        %2857 = vmatprep.subr.mxu0 0.0
        %2858 = vmatpush1.xpose.msra.mxu0 0.0
        %2859 = vmatprep.subr.mxu0 0.0
        %2860 = vmatpush1.xpose.msra.mxu0 0.0
        %2861 = vmatprep.subr.mxu0 0.0
        %2862 = vmatpush1.xpose.msra.mxu0 0.0
        %2863 = vmatprep.subr.mxu0 0.0
        %2864 = vmatpush1.xpose.msra.mxu0 0.0
        %2865 = vmatprep.subr.mxu0 0.0
        %2866 = vmatpush1.xpose.msra.mxu0 0.0
        %2867 = vmatprep.subr.mxu0 0.0
        %2868 = vmatpush1.xpose.msra.mxu0 0.0
        %2869 = vmatprep.subr.mxu0 0.0
        %2870 = vmatpush1.xpose.msra.mxu0 %v2841
        %2871 = vmatprep.subr.mxu0 0.0
        %2872 = vmatpush1.xpose.msra.mxu0 %v2839
        %2873 = vmatprep.subr.mxu0 0.0
        %2874 = vmatpush1.xpose.msra.mxu0 %v2837
        %2875 = vmatprep.subr.mxu0 0.0
        %2876 = vmatpush2.xpose.msra.mxu0 0.0
        %2877 = vmatprep.subr.mxu0 0.0
        %2878 = vmatpush2.xpose.msra.mxu0 0.0
        %2879 = vmatprep.subr.mxu0 0.0
        %2880 = vmatpush2.xpose.msra.mxu0 0.0
        %2881 = vmatprep.subr.mxu0 0.0
        %2882 = vmatpush2.xpose.msra.mxu0 0.0
        %2883 = vmatprep.subr.mxu0 0.0
        %2884 = vmatpush2.xpose.msra.mxu0 0.0
        %2885 = vmatprep.subr.mxu0 0.0
        %2886 = vmatpush2.xpose.msra.mxu0 0.0
        %2887 = vmatprep.subr.mxu0 0.0
        %2888 = vmatpush2.xpose.msra.mxu0 0.0
        %2889 = vmatprep.subr.mxu0 0.0
        %2890 = vmatpush2.xpose.msra.mxu0 0.0
        %2891 = vmatprep.subr.mxu0 0.0
        %2892 = vmatpush2.xpose.msra.mxu0 0.0
        %2893 = vmatprep.subr.mxu0 0.0
        %2894 = vmatpush2.xpose.msra.mxu0 0.0
        %2895 = vmatprep.subr.mxu0 0.0
        %2896 = vmatpush2.xpose.msra.mxu0 0.0
        %2897 = vmatprep.subr.mxu0 0.0
        %2898 = vmatpush2.xpose.msra.mxu0 0.0
        %2899 = vmatprep.subr.mxu0 0.0
        %2900 = vmatpush2.xpose.msra.mxu0 0.0
        %2901 = vmatprep.subr.mxu0 0.0
        %2902 = vmatpush2.xpose.msra.mxu0 0.0
        %2903 = vmatprep.subr.mxu0 0.0
        %2904 = vmatpush2.xpose.msra.mxu0 0.0
        %2905 = vmatprep.subr.mxu0 0.0
        %2906 = vmatpush2.xpose.msra.mxu0 0.0
        %2907 = vmatprep.mubr.f32.mxu0 0.0
        %2908 = vmatmul.mubr.f32.gmra.mxu0 %v2831
        %v2909 = vpop.f32.mrf.mxu0
        %v2910 = vadd.f32 0.0, %v2909
        %v2911 = vpop.f32.mrf.mxu0
        %2912 = vmatprep.mubr.f32.mxu0 0.0
        %2913 = vmatmul.mubr.f32.gmra.mxu0 %v2833
        %v2914 = vpop.f32.mrf.mxu0
        %v2915 = vadd.f32 0.0, %v2914
        %v2916 = vpop.f32.mrf.mxu0
        %2917 = vmatprep.mubr.f32.mxu0 0.0
        %2918 = vmatmul.mubr.f32.gmra.mxu0 %v2835
        %v2919 = vpop.f32.mrf.mxu0
        %v2920 = vadd.f32 0.0, %v2919
        %v2921 = vpop.f32.mrf.mxu0
        %2922 = vdwg.mxu0
        %v2923 = vmul.f32 %v2910, 0.35355338
        %v2924 = vmul.f32 %v2915, 0.35355338
        %v2925 = vmul.f32 %v2920, 0.35355338
        %v2926 = vsel %vm839, %v2923, -inf
        %2927 = vmax.xlane.f32.xlu0 %v2926
        %v2928 = vpop.xlane.xlu0 %2927
        %v2929 = vsel %vm839, %v2924, -inf
        %2930 = vmax.xlane.f32.xlu0 %v2929
        %v2931 = vpop.xlane.xlu0 %2930
        %v2932 = vsel %vm846, %v2925, -inf
        %2933 = vmax.xlane.f32.xlu0 %v2932
        %v2934 = vpop.xlane.xlu0 %2933
        %v2935 = vsub.f32 %v2923, %v2928
        %v2936 = vsub.f32 %v2924, %v2931
        %v2937 = vsub.f32 %v2925, %v2934
        %v2938 = vmul.f32 %v2935, 1.442695
        %v2939 = vpow.pop %v2938
        %v2940 = vmul.f32 %v2936, 1.442695
        %v2941 = vpow.pop %v2940
        %v2942 = vmul.f32 %v2937, 1.442695
        %v2943 = vpow.pop %v2942
        %v2944 = vsel %vm839, %v2939, 0.0
        %2945 = vadd.xlane.f32.xlu0 %v2944
        %v2946 = vpop.xlane.xlu0 %2945
        %v2947 = vsel %vm839, %v2941, 0.0
        %2948 = vadd.xlane.f32.xlu0 %v2947
        %v2949 = vpop.xlane.xlu0 %2948
        %v2950 = vsel %vm846, %v2943, 0.0
        %2951 = vadd.xlane.f32.xlu0 %v2950
        %v2952 = vpop.xlane.xlu0 %2951
        %v2953 = vrcp.pop %v2946
        %v2954 = vrcp.pop %v2949
        %v2955 = vrcp.pop %v2952
        %v2956 = vmul.f32 %v2939, %v2953
        %v2957 = vmul.f32 %v2941, %v2954
        %v2958 = vmul.f32 %v2943, %v2955
        %2959 = vrot.lane.b32.xlu0 %v2317, 48
        %v2960 = vpop.permute.xlu0 %2959
        %2961 = vrot.lane.b32.xlu0 %v2318, 48
        %v2962 = vpop.permute.xlu0 %2961
        %2963 = vrot.lane.b32.xlu0 %v2319, 48
        %v2964 = vpop.permute.xlu0 %2963
        %v2968 = vsel %vm839, %v2956, 0
        %v2971 = vsel %vm839, %v2957, 0
        %v2974 = vsel %vm839, %v2958, 0
        %v2976 = vsel %vm894, %v2964, 0
        %2978 = vmatprep.subr.mxu0 0.0
        %2979 = vmatpush1.msra.mxu0 0.0
        %2980 = vmatprep.subr.mxu0 0.0
        %2981 = vmatpush1.msra.mxu0 0.0
        %2982 = vmatprep.subr.mxu0 0.0
        %2983 = vmatpush1.msra.mxu0 0.0
        %2984 = vmatprep.subr.mxu0 0.0
        %2985 = vmatpush1.msra.mxu0 0.0
        %2986 = vmatprep.subr.mxu0 0.0
        %2987 = vmatpush1.msra.mxu0 0.0
        %2988 = vmatprep.subr.mxu0 0.0
        %2989 = vmatpush1.msra.mxu0 0.0
        %2990 = vmatprep.subr.mxu0 0.0
        %2991 = vmatpush1.msra.mxu0 0.0
        %2992 = vmatprep.subr.mxu0 0.0
        %2993 = vmatpush1.msra.mxu0 0.0
        %2994 = vmatprep.subr.mxu0 0.0
        %2995 = vmatpush1.msra.mxu0 0.0
        %2996 = vmatprep.subr.mxu0 0.0
        %2997 = vmatpush1.msra.mxu0 0.0
        %2998 = vmatprep.subr.mxu0 0.0
        %2999 = vmatpush1.msra.mxu0 0.0
        %3000 = vmatprep.subr.mxu0 0.0
        %3001 = vmatpush1.msra.mxu0 0.0
        %3002 = vmatprep.subr.mxu0 0.0
        %3003 = vmatpush1.msra.mxu0 0.0
        %3004 = vmatprep.subr.mxu0 0.0
        %3005 = vmatpush1.msra.mxu0 %v2976
        %3006 = vmatprep.subr.mxu0 0.0
        %3007 = vmatpush1.msra.mxu0 %v2962
        %3008 = vmatprep.subr.mxu0 0.0
        %3009 = vmatpush1.msra.mxu0 %v2960
        %3010 = vmatprep.subr.mxu0 0.0
        %3011 = vmatpush2.msra.mxu0 0.0
        %3012 = vmatprep.subr.mxu0 0.0
        %3013 = vmatpush2.msra.mxu0 0.0
        %3014 = vmatprep.subr.mxu0 0.0
        %3015 = vmatpush2.msra.mxu0 0.0
        %3016 = vmatprep.subr.mxu0 0.0
        %3017 = vmatpush2.msra.mxu0 0.0
        %3018 = vmatprep.subr.mxu0 0.0
        %3019 = vmatpush2.msra.mxu0 0.0
        %3020 = vmatprep.subr.mxu0 0.0
        %3021 = vmatpush2.msra.mxu0 0.0
        %3022 = vmatprep.subr.mxu0 0.0
        %3023 = vmatpush2.msra.mxu0 0.0
        %3024 = vmatprep.subr.mxu0 0.0
        %3025 = vmatpush2.msra.mxu0 0.0
        %3026 = vmatprep.subr.mxu0 0.0
        %3027 = vmatpush2.msra.mxu0 0.0
        %3028 = vmatprep.subr.mxu0 0.0
        %3029 = vmatpush2.msra.mxu0 0.0
        %3030 = vmatprep.subr.mxu0 0.0
        %3031 = vmatpush2.msra.mxu0 0.0
        %3032 = vmatprep.subr.mxu0 0.0
        %3033 = vmatpush2.msra.mxu0 0.0
        %3034 = vmatprep.subr.mxu0 0.0
        %3035 = vmatpush2.msra.mxu0 0.0
        %3036 = vmatprep.subr.mxu0 0.0
        %3037 = vmatpush2.msra.mxu0 0.0
        %3038 = vmatprep.subr.mxu0 0.0
        %3039 = vmatpush2.msra.mxu0 0.0
        %3040 = vmatprep.subr.mxu0 0.0
        %3041 = vmatpush2.msra.mxu0 0.0
        %3042 = vmatprep.mubr.f32.mxu0 0.0
        %3043 = vmatmul.mubr.f32.gmra.mxu0 %v2968
        %v3044 = vpop.f32.mrf.mxu0
        %v3045 = vadd.f32 0.0, %v3044
        %v3046 = vpop.f32.mrf.mxu0
        %3047 = vmatprep.mubr.f32.mxu0 0.0
        %3048 = vmatmul.mubr.f32.gmra.mxu0 %v2971
        %v3049 = vpop.f32.mrf.mxu0
        %v3050 = vadd.f32 0.0, %v3049
        %v3051 = vpop.f32.mrf.mxu0
        %3052 = vmatprep.mubr.f32.mxu0 0.0
        %3053 = vmatmul.mubr.f32.gmra.mxu0 %v2974
        %v3054 = vpop.f32.mrf.mxu0
        %v3055 = vadd.f32 0.0, %v3054
        %v3056 = vpop.f32.mrf.mxu0
        %3057 = vdwg.mxu0
        %3061 = vrot.lane.b32.xlu0 %v3045, 16
        %v3062 = vpop.permute.xlu0 %3061
        %3063 = vrot.lane.b32.xlu0 %v3050, 16
        %v3064 = vpop.permute.xlu0 %3063
        %3065 = vrot.lane.b32.xlu0 %v3055, 16
        %v3066 = vpop.permute.xlu0 %3065
        %3070 = vst.msk [vmem:[#allocation3] sm:$0xff] %vm1488, %v3062
        %3071 = vst.msk [vmem:[#allocation3 + $0x8] sm:$0xff] %vm1488, %v3064
        %3072 = vst.msk [vmem:[#allocation3 + $0x10] sm:$0x1] %vm1491, %v3066
        %3073 = vrot.lane.b32.xlu0 %v2295, 104
        %v3074 = vpop.permute.xlu0 %3073
        %3075 = vrot.lane.b32.xlu0 %v2296, 104
        %v3076 = vpop.permute.xlu0 %3075
        %3077 = vrot.lane.b32.xlu0 %v2297, 104
        %v3078 = vpop.permute.xlu0 %3077
        %3079 = vrot.lane.b32.xlu0 %v2306, 72
        %v3080 = vpop.permute.xlu0 %3079
        %3081 = vrot.lane.b32.xlu0 %v2307, 72
        %v3082 = vpop.permute.xlu0 %3081
        %3083 = vrot.lane.b32.xlu0 %v2308, 72
        %v3084 = vpop.permute.xlu0 %3083
        %v3085 = vsel %vm740, %v3074, 0
        %v3087 = vsel %vm740, %v3076, 0
        %v3089 = vsel %vm740, %v3078, 0
        %v3091 = vsel %vm740, %v3080, 0
        %v3093 = vsel %vm740, %v3082, 0
        %v3095 = vsel %vm740, %v3084, 0
        %3097 = vmatprep.subr.mxu0 0.0
        %3098 = vmatpush1.xpose.msra.mxu0 0.0
        %3099 = vmatprep.subr.mxu0 0.0
        %3100 = vmatpush1.xpose.msra.mxu0 0.0
        %3101 = vmatprep.subr.mxu0 0.0
        %3102 = vmatpush1.xpose.msra.mxu0 0.0
        %3103 = vmatprep.subr.mxu0 0.0
        %3104 = vmatpush1.xpose.msra.mxu0 0.0
        %3105 = vmatprep.subr.mxu0 0.0
        %3106 = vmatpush1.xpose.msra.mxu0 0.0
        %3107 = vmatprep.subr.mxu0 0.0
        %3108 = vmatpush1.xpose.msra.mxu0 0.0
        %3109 = vmatprep.subr.mxu0 0.0
        %3110 = vmatpush1.xpose.msra.mxu0 0.0
        %3111 = vmatprep.subr.mxu0 0.0
        %3112 = vmatpush1.xpose.msra.mxu0 0.0
        %3113 = vmatprep.subr.mxu0 0.0
        %3114 = vmatpush1.xpose.msra.mxu0 0.0
        %3115 = vmatprep.subr.mxu0 0.0
        %3116 = vmatpush1.xpose.msra.mxu0 0.0
        %3117 = vmatprep.subr.mxu0 0.0
        %3118 = vmatpush1.xpose.msra.mxu0 0.0
        %3119 = vmatprep.subr.mxu0 0.0
        %3120 = vmatpush1.xpose.msra.mxu0 0.0
        %3121 = vmatprep.subr.mxu0 0.0
        %3122 = vmatpush1.xpose.msra.mxu0 0.0
        %3123 = vmatprep.subr.mxu0 0.0
        %3124 = vmatpush1.xpose.msra.mxu0 %v3095
        %3125 = vmatprep.subr.mxu0 0.0
        %3126 = vmatpush1.xpose.msra.mxu0 %v3093
        %3127 = vmatprep.subr.mxu0 0.0
        %3128 = vmatpush1.xpose.msra.mxu0 %v3091
        %3129 = vmatprep.subr.mxu0 0.0
        %3130 = vmatpush2.xpose.msra.mxu0 0.0
        %3131 = vmatprep.subr.mxu0 0.0
        %3132 = vmatpush2.xpose.msra.mxu0 0.0
        %3133 = vmatprep.subr.mxu0 0.0
        %3134 = vmatpush2.xpose.msra.mxu0 0.0
        %3135 = vmatprep.subr.mxu0 0.0
        %3136 = vmatpush2.xpose.msra.mxu0 0.0
        %3137 = vmatprep.subr.mxu0 0.0
        %3138 = vmatpush2.xpose.msra.mxu0 0.0
        %3139 = vmatprep.subr.mxu0 0.0
        %3140 = vmatpush2.xpose.msra.mxu0 0.0
        %3141 = vmatprep.subr.mxu0 0.0
        %3142 = vmatpush2.xpose.msra.mxu0 0.0
        %3143 = vmatprep.subr.mxu0 0.0
        %3144 = vmatpush2.xpose.msra.mxu0 0.0
        %3145 = vmatprep.subr.mxu0 0.0
        %3146 = vmatpush2.xpose.msra.mxu0 0.0
        %3147 = vmatprep.subr.mxu0 0.0
        %3148 = vmatpush2.xpose.msra.mxu0 0.0
        %3149 = vmatprep.subr.mxu0 0.0
        %3150 = vmatpush2.xpose.msra.mxu0 0.0
        %3151 = vmatprep.subr.mxu0 0.0
        %3152 = vmatpush2.xpose.msra.mxu0 0.0
        %3153 = vmatprep.subr.mxu0 0.0
        %3154 = vmatpush2.xpose.msra.mxu0 0.0
        %3155 = vmatprep.subr.mxu0 0.0
        %3156 = vmatpush2.xpose.msra.mxu0 0.0
        %3157 = vmatprep.subr.mxu0 0.0
        %3158 = vmatpush2.xpose.msra.mxu0 0.0
        %3159 = vmatprep.subr.mxu0 0.0
        %3160 = vmatpush2.xpose.msra.mxu0 0.0
        %3161 = vmatprep.mubr.f32.mxu0 0.0
        %3162 = vmatmul.mubr.f32.gmra.mxu0 %v3085
        %v3163 = vpop.f32.mrf.mxu0
        %v3164 = vadd.f32 0.0, %v3163
        %v3165 = vpop.f32.mrf.mxu0
        %3166 = vmatprep.mubr.f32.mxu0 0.0
        %3167 = vmatmul.mubr.f32.gmra.mxu0 %v3087
        %v3168 = vpop.f32.mrf.mxu0
        %v3169 = vadd.f32 0.0, %v3168
        %v3170 = vpop.f32.mrf.mxu0
        %3171 = vmatprep.mubr.f32.mxu0 0.0
        %3172 = vmatmul.mubr.f32.gmra.mxu0 %v3089
        %v3173 = vpop.f32.mrf.mxu0
        %v3174 = vadd.f32 0.0, %v3173
        %v3175 = vpop.f32.mrf.mxu0
        %3176 = vdwg.mxu0
        %v3177 = vmul.f32 %v3164, 0.35355338
        %v3178 = vmul.f32 %v3169, 0.35355338
        %v3179 = vmul.f32 %v3174, 0.35355338
        %v3180 = vsel %vm839, %v3177, -inf
        %3181 = vmax.xlane.f32.xlu0 %v3180
        %v3182 = vpop.xlane.xlu0 %3181
        %v3183 = vsel %vm839, %v3178, -inf
        %3184 = vmax.xlane.f32.xlu0 %v3183
        %v3185 = vpop.xlane.xlu0 %3184
        %v3186 = vsel %vm846, %v3179, -inf
        %3187 = vmax.xlane.f32.xlu0 %v3186
        %v3188 = vpop.xlane.xlu0 %3187
        %v3189 = vsub.f32 %v3177, %v3182
        %v3190 = vsub.f32 %v3178, %v3185
        %v3191 = vsub.f32 %v3179, %v3188
        %v3192 = vmul.f32 %v3189, 1.442695
        %v3193 = vpow.pop %v3192
        %v3194 = vmul.f32 %v3190, 1.442695
        %v3195 = vpow.pop %v3194
        %v3196 = vmul.f32 %v3191, 1.442695
        %v3197 = vpow.pop %v3196
        %v3198 = vsel %vm839, %v3193, 0.0
        %3199 = vadd.xlane.f32.xlu0 %v3198
        %v3200 = vpop.xlane.xlu0 %3199
        %v3201 = vsel %vm839, %v3195, 0.0
        %3202 = vadd.xlane.f32.xlu0 %v3201
        %v3203 = vpop.xlane.xlu0 %3202
        %v3204 = vsel %vm846, %v3197, 0.0
        %3205 = vadd.xlane.f32.xlu0 %v3204
        %v3206 = vpop.xlane.xlu0 %3205
        %v3207 = vrcp.pop %v3200
        %v3208 = vrcp.pop %v3203
        %v3209 = vrcp.pop %v3206
        %v3210 = vmul.f32 %v3193, %v3207
        %v3211 = vmul.f32 %v3195, %v3208
        %v3212 = vmul.f32 %v3197, %v3209
        %3213 = vrot.lane.b32.xlu0 %v2317, 40
        %v3214 = vpop.permute.xlu0 %3213
        %3215 = vrot.lane.b32.xlu0 %v2318, 40
        %v3216 = vpop.permute.xlu0 %3215
        %3217 = vrot.lane.b32.xlu0 %v2319, 40
        %v3218 = vpop.permute.xlu0 %3217
        %v3222 = vsel %vm839, %v3210, 0
        %v3225 = vsel %vm839, %v3211, 0
        %v3228 = vsel %vm839, %v3212, 0
        %v3230 = vsel %vm894, %v3218, 0
        %3232 = vmatprep.subr.mxu0 0.0
        %3233 = vmatpush1.msra.mxu0 0.0
        %3234 = vmatprep.subr.mxu0 0.0
        %3235 = vmatpush1.msra.mxu0 0.0
        %3236 = vmatprep.subr.mxu0 0.0
        %3237 = vmatpush1.msra.mxu0 0.0
        %3238 = vmatprep.subr.mxu0 0.0
        %3239 = vmatpush1.msra.mxu0 0.0
        %3240 = vmatprep.subr.mxu0 0.0
        %3241 = vmatpush1.msra.mxu0 0.0
        %3242 = vmatprep.subr.mxu0 0.0
        %3243 = vmatpush1.msra.mxu0 0.0
        %3244 = vmatprep.subr.mxu0 0.0
        %3245 = vmatpush1.msra.mxu0 0.0
        %3246 = vmatprep.subr.mxu0 0.0
        %3247 = vmatpush1.msra.mxu0 0.0
        %3248 = vmatprep.subr.mxu0 0.0
        %3249 = vmatpush1.msra.mxu0 0.0
        %3250 = vmatprep.subr.mxu0 0.0
        %3251 = vmatpush1.msra.mxu0 0.0
        %3252 = vmatprep.subr.mxu0 0.0
        %3253 = vmatpush1.msra.mxu0 0.0
        %3254 = vmatprep.subr.mxu0 0.0
        %3255 = vmatpush1.msra.mxu0 0.0
        %3256 = vmatprep.subr.mxu0 0.0
        %3257 = vmatpush1.msra.mxu0 0.0
        %3258 = vmatprep.subr.mxu0 0.0
        %3259 = vmatpush1.msra.mxu0 %v3230
        %3260 = vmatprep.subr.mxu0 0.0
        %3261 = vmatpush1.msra.mxu0 %v3216
        %3262 = vmatprep.subr.mxu0 0.0
        %3263 = vmatpush1.msra.mxu0 %v3214
        %3264 = vmatprep.subr.mxu0 0.0
        %3265 = vmatpush2.msra.mxu0 0.0
        %3266 = vmatprep.subr.mxu0 0.0
        %3267 = vmatpush2.msra.mxu0 0.0
        %3268 = vmatprep.subr.mxu0 0.0
        %3269 = vmatpush2.msra.mxu0 0.0
        %3270 = vmatprep.subr.mxu0 0.0
        %3271 = vmatpush2.msra.mxu0 0.0
        %3272 = vmatprep.subr.mxu0 0.0
        %3273 = vmatpush2.msra.mxu0 0.0
        %3274 = vmatprep.subr.mxu0 0.0
        %3275 = vmatpush2.msra.mxu0 0.0
        %3276 = vmatprep.subr.mxu0 0.0
        %3277 = vmatpush2.msra.mxu0 0.0
        %3278 = vmatprep.subr.mxu0 0.0
        %3279 = vmatpush2.msra.mxu0 0.0
        %3280 = vmatprep.subr.mxu0 0.0
        %3281 = vmatpush2.msra.mxu0 0.0
        %3282 = vmatprep.subr.mxu0 0.0
        %3283 = vmatpush2.msra.mxu0 0.0
        %3284 = vmatprep.subr.mxu0 0.0
        %3285 = vmatpush2.msra.mxu0 0.0
        %3286 = vmatprep.subr.mxu0 0.0
        %3287 = vmatpush2.msra.mxu0 0.0
        %3288 = vmatprep.subr.mxu0 0.0
        %3289 = vmatpush2.msra.mxu0 0.0
        %3290 = vmatprep.subr.mxu0 0.0
        %3291 = vmatpush2.msra.mxu0 0.0
        %3292 = vmatprep.subr.mxu0 0.0
        %3293 = vmatpush2.msra.mxu0 0.0
        %3294 = vmatprep.subr.mxu0 0.0
        %3295 = vmatpush2.msra.mxu0 0.0
        %3296 = vmatprep.mubr.f32.mxu0 0.0
        %3297 = vmatmul.mubr.f32.gmra.mxu0 %v3222
        %v3298 = vpop.f32.mrf.mxu0
        %v3299 = vadd.f32 0.0, %v3298
        %v3300 = vpop.f32.mrf.mxu0
        %3301 = vmatprep.mubr.f32.mxu0 0.0
        %3302 = vmatmul.mubr.f32.gmra.mxu0 %v3225
        %v3303 = vpop.f32.mrf.mxu0
        %v3304 = vadd.f32 0.0, %v3303
        %v3305 = vpop.f32.mrf.mxu0
        %3306 = vmatprep.mubr.f32.mxu0 0.0
        %3307 = vmatmul.mubr.f32.gmra.mxu0 %v3228
        %v3308 = vpop.f32.mrf.mxu0
        %v3309 = vadd.f32 0.0, %v3308
        %v3310 = vpop.f32.mrf.mxu0
        %3311 = vdwg.mxu0
        %3315 = vrot.lane.b32.xlu0 %v3299, 24
        %v3316 = vpop.permute.xlu0 %3315
        %3317 = vrot.lane.b32.xlu0 %v3304, 24
        %v3318 = vpop.permute.xlu0 %3317
        %3319 = vrot.lane.b32.xlu0 %v3309, 24
        %v3320 = vpop.permute.xlu0 %3319
        %3324 = vst.msk [vmem:[#allocation3] sm:$0xff] %vm1744, %v3316
        %3325 = vst.msk [vmem:[#allocation3 + $0x8] sm:$0xff] %vm1744, %v3318
        %3326 = vst.msk [vmem:[#allocation3 + $0x10] sm:$0x1] %vm1747, %v3320
        %v3327 = vld [vmem:[#allocation3] sm:$0xff]
        %v3328 = vld [vmem:[#allocation3 + $0x8] sm:$0xff]
        %v3329 = vld [vmem:[#allocation3 + $0x10] sm:$0x1]
        %s3330 = scalar_lea.vmem %s8, 32
        %v3331 = vld [vmem:[%s3330] sm:$0xff]
        %v3332 = vld [vmem:[%s3330 + $0x8] sm:$0xff]
        %v3333 = vld [vmem:[%s3330 + $0x10] sm:$0xff]
        %v3334 = vld [vmem:[%s3330 + $0x18] sm:$0xff]
        %v3336 = vsel %vm546, %v3327, 0
        %v3339 = vsel %vm546, %v3328, 0
        %v3342 = vsel %vm546, %v3329, 0
        %3344 = vmatprep.subr.mxu0 0.0
        %3345 = vmatpush1.msra.mxu0 0.0
        %3346 = vmatprep.subr.mxu0 0.0
        %3347 = vmatpush1.msra.mxu0 0.0
        %3348 = vmatprep.subr.mxu0 0.0
        %3349 = vmatpush1.msra.mxu0 0.0
        %3350 = vmatprep.subr.mxu0 0.0
        %3351 = vmatpush1.msra.mxu0 0.0
        %3352 = vmatprep.subr.mxu0 0.0
        %3353 = vmatpush1.msra.mxu0 0.0
        %3354 = vmatprep.subr.mxu0 0.0
        %3355 = vmatpush1.msra.mxu0 0.0
        %3356 = vmatprep.subr.mxu0 0.0
        %3357 = vmatpush1.msra.mxu0 0.0
        %3358 = vmatprep.subr.mxu0 0.0
        %3359 = vmatpush1.msra.mxu0 0.0
        %3360 = vmatprep.subr.mxu0 0.0
        %3361 = vmatpush1.msra.mxu0 0.0
        %3362 = vmatprep.subr.mxu0 0.0
        %3363 = vmatpush1.msra.mxu0 0.0
        %3364 = vmatprep.subr.mxu0 0.0
        %3365 = vmatpush1.msra.mxu0 0.0
        %3366 = vmatprep.subr.mxu0 0.0
        %3367 = vmatpush1.msra.mxu0 0.0
        %3368 = vmatprep.subr.mxu0 0.0
        %3369 = vmatpush1.msra.mxu0 %v3334
        %3370 = vmatprep.subr.mxu0 0.0
        %3371 = vmatpush1.msra.mxu0 %v3333
        %3372 = vmatprep.subr.mxu0 0.0
        %3373 = vmatpush1.msra.mxu0 %v3332
        %3374 = vmatprep.subr.mxu0 0.0
        %3375 = vmatpush1.msra.mxu0 %v3331
        %3376 = vmatprep.subr.mxu0 0.0
        %3377 = vmatpush2.msra.mxu0 0.0
        %3378 = vmatprep.subr.mxu0 0.0
        %3379 = vmatpush2.msra.mxu0 0.0
        %3380 = vmatprep.subr.mxu0 0.0
        %3381 = vmatpush2.msra.mxu0 0.0
        %3382 = vmatprep.subr.mxu0 0.0
        %3383 = vmatpush2.msra.mxu0 0.0
        %3384 = vmatprep.subr.mxu0 0.0
        %3385 = vmatpush2.msra.mxu0 0.0
        %3386 = vmatprep.subr.mxu0 0.0
        %3387 = vmatpush2.msra.mxu0 0.0
        %3388 = vmatprep.subr.mxu0 0.0
        %3389 = vmatpush2.msra.mxu0 0.0
        %3390 = vmatprep.subr.mxu0 0.0
        %3391 = vmatpush2.msra.mxu0 0.0
        %3392 = vmatprep.subr.mxu0 0.0
        %3393 = vmatpush2.msra.mxu0 0.0
        %3394 = vmatprep.subr.mxu0 0.0
        %3395 = vmatpush2.msra.mxu0 0.0
        %3396 = vmatprep.subr.mxu0 0.0
        %3397 = vmatpush2.msra.mxu0 0.0
        %3398 = vmatprep.subr.mxu0 0.0
        %3399 = vmatpush2.msra.mxu0 0.0
        %3400 = vmatprep.subr.mxu0 0.0
        %3401 = vmatpush2.msra.mxu0 0.0
        %3402 = vmatprep.subr.mxu0 0.0
        %3403 = vmatpush2.msra.mxu0 0.0
        %3404 = vmatprep.subr.mxu0 0.0
        %3405 = vmatpush2.msra.mxu0 0.0
        %3406 = vmatprep.subr.mxu0 0.0
        %3407 = vmatpush2.msra.mxu0 0.0
        %3408 = vmatprep.mubr.f32.mxu0 0.0
        %3409 = vmatmul.mubr.f32.gmra.mxu0 %v3336
        %v3410 = vpop.f32.mrf.mxu0
        %v3411 = vadd.f32 0.0, %v3410
        %v3412 = vpop.f32.mrf.mxu0
        %3413 = vmatprep.mubr.f32.mxu0 0.0
        %3414 = vmatmul.mubr.f32.gmra.mxu0 %v3339
        %v3415 = vpop.f32.mrf.mxu0
        %v3416 = vadd.f32 0.0, %v3415
        %v3417 = vpop.f32.mrf.mxu0
        %3418 = vmatprep.mubr.f32.mxu0 0.0
        %3419 = vmatmul.mubr.f32.gmra.mxu0 %v3342
        %v3420 = vpop.f32.mrf.mxu0
        %v3421 = vadd.f32 0.0, %v3420
        %v3422 = vpop.f32.mrf.mxu0
        %3423 = vdwg.mxu0
        %v3424 = vadd.f32 %v2138, %v3411
        %v3425 = vadd.f32 %v2139, %v3416
        %v3426 = vadd.f32 %v2140, %v3421
        %v3427 = vlaneseq
        %v3428 = vshrl.u32 %v3427, 7
        %v3429 = vsub.s32 5, %v3428
        %v3430 = vrot.slane %v2142, %v3429
        %v3431 = vadd.f32 %v3424, %v3430
        %v3432 = vadd.f32 %v3425, %v3430
        %v3433 = vadd.f32 %v3426, %v3430
        %v3434 = vsel %vm546, %v3431, 0.0
        %3435 = vadd.xlane.f32.xlu0 %v3434
        %v3436 = vpop.xlane.xlu0 %3435
        %v3437 = vsel %vm546, %v3432, 0.0
        %3438 = vadd.xlane.f32.xlu0 %v3437
        %v3439 = vpop.xlane.xlu0 %3438
        %v3440 = vsel %vm560, %v3433, 0.0
        %3441 = vadd.xlane.f32.xlu0 %v3440
        %v3442 = vpop.xlane.xlu0 %3441
        %v3443 = vmul.f32 %v3436, %v564
        %v3444 = vmul.f32 %v3439, %v564
        %v3445 = vmul.f32 %v3442, %v564
        %v3446 = vsub.f32 %v3431, %v3443
        %v3447 = vsub.f32 %v3432, %v3444
        %v3448 = vsub.f32 %v3433, %v3445
        %v3449 = vmul.f32 %v3446, %v3446
        %v3450 = vmul.f32 %v3447, %v3447
        %v3451 = vmul.f32 %v3448, %v3448
        %v3452 = vsel %vm546, %v3449, 0.0
        %3453 = vadd.xlane.f32.xlu0 %v3452
        %v3454 = vpop.xlane.xlu0 %3453
        %v3455 = vsel %vm546, %v3450, 0.0
        %3456 = vadd.xlane.f32.xlu0 %v3455
        %v3457 = vpop.xlane.xlu0 %3456
        %v3458 = vsel %vm560, %v3451, 0.0
        %3459 = vadd.xlane.f32.xlu0 %v3458
        %v3460 = vpop.xlane.xlu0 %3459
        %v3461 = vmul.f32 %v3454, %v564
        %v3462 = vmul.f32 %v3457, %v564
        %v3463 = vmul.f32 %v3460, %v564
        %v3464 = vadd.f32 %v3461, 1e-06
        %v3465 = vadd.f32 %v3462, 1e-06
        %v3466 = vadd.f32 %v3463, 1e-06
        %v3467 = vrsqrt.pop %v3464
        %v3468 = vrsqrt.pop %v3465
        %v3469 = vrsqrt.pop %v3466
        %v3470 = vmul.f32 %v3446, %v3467
        %v3471 = vmul.f32 %v3447, %v3468
        %v3472 = vmul.f32 %v3448, %v3469
        %v3473 = vlaneseq
        %v3474 = vshrl.u32 %v3473, 7
        %v3475 = vsub.s32 6, %v3474
        %v3476 = vrot.slane %v2142, %v3475
        %v3477 = vmul.f32 %v3470, %v3476
        %v3478 = vmul.f32 %v3471, %v3476
        %v3479 = vmul.f32 %v3472, %v3476
        %v3480 = vlaneseq
        %v3481 = vshrl.u32 %v3480, 7
        %v3482 = vsub.s32 7, %v3481
        %v3483 = vrot.slane %v2142, %v3482
        %v3484 = vadd.f32 %v3477, %v3483
        %v3485 = vadd.f32 %v3478, %v3483
        %v3486 = vadd.f32 %v3479, %v3483
        %s3487 = scalar_lea.vmem %s9, 32
        %v3488 = vld [vmem:[%s3487] sm:$0xff]
        %v3489 = vld [vmem:[%s3487 + $0x8] sm:$0xff]
        %v3490 = vld [vmem:[%s3487 + $0x10] sm:$0xff]
        %v3491 = vld [vmem:[%s3487 + $0x18] sm:$0xff]
        %s3492 = scalar_lea.vmem %s10, 1
        %v3493 = vld [vmem:[%s3492] sm:$0x1]
        %v3495 = vlaneseq
        %v3496 = vshrl.u32 %v3495, 7
        %v3497 = vsub.s32 0, %v3496
        %v3498 = vrot.slane %v3493, %v3497
        %v3501 = vsel %vm546, %v3484, 0
        %v3504 = vsel %vm546, %v3485, 0
        %v3507 = vsel %vm546, %v3486, 0
        %3509 = vmatprep.subr.mxu0 0.0
        %3510 = vmatpush1.msra.mxu0 0.0
        %3511 = vmatprep.subr.mxu0 0.0
        %3512 = vmatpush1.msra.mxu0 0.0
        %3513 = vmatprep.subr.mxu0 0.0
        %3514 = vmatpush1.msra.mxu0 0.0
        %3515 = vmatprep.subr.mxu0 0.0
        %3516 = vmatpush1.msra.mxu0 0.0
        %3517 = vmatprep.subr.mxu0 0.0
        %3518 = vmatpush1.msra.mxu0 0.0
        %3519 = vmatprep.subr.mxu0 0.0
        %3520 = vmatpush1.msra.mxu0 0.0
        %3521 = vmatprep.subr.mxu0 0.0
        %3522 = vmatpush1.msra.mxu0 0.0
        %3523 = vmatprep.subr.mxu0 0.0
        %3524 = vmatpush1.msra.mxu0 0.0
        %3525 = vmatprep.subr.mxu0 0.0
        %3526 = vmatpush1.msra.mxu0 0.0
        %3527 = vmatprep.subr.mxu0 0.0
        %3528 = vmatpush1.msra.mxu0 0.0
        %3529 = vmatprep.subr.mxu0 0.0
        %3530 = vmatpush1.msra.mxu0 0.0
        %3531 = vmatprep.subr.mxu0 0.0
        %3532 = vmatpush1.msra.mxu0 0.0
        %3533 = vmatprep.subr.mxu0 0.0
        %3534 = vmatpush1.msra.mxu0 %v3491
        %3535 = vmatprep.subr.mxu0 0.0
        %3536 = vmatpush1.msra.mxu0 %v3490
        %3537 = vmatprep.subr.mxu0 0.0
        %3538 = vmatpush1.msra.mxu0 %v3489
        %3539 = vmatprep.subr.mxu0 0.0
        %3540 = vmatpush1.msra.mxu0 %v3488
        %3541 = vmatprep.subr.mxu0 0.0
        %3542 = vmatpush2.msra.mxu0 0.0
        %3543 = vmatprep.subr.mxu0 0.0
        %3544 = vmatpush2.msra.mxu0 0.0
        %3545 = vmatprep.subr.mxu0 0.0
        %3546 = vmatpush2.msra.mxu0 0.0
        %3547 = vmatprep.subr.mxu0 0.0
        %3548 = vmatpush2.msra.mxu0 0.0
        %3549 = vmatprep.subr.mxu0 0.0
        %3550 = vmatpush2.msra.mxu0 0.0
        %3551 = vmatprep.subr.mxu0 0.0
        %3552 = vmatpush2.msra.mxu0 0.0
        %3553 = vmatprep.subr.mxu0 0.0
        %3554 = vmatpush2.msra.mxu0 0.0
        %3555 = vmatprep.subr.mxu0 0.0
        %3556 = vmatpush2.msra.mxu0 0.0
        %3557 = vmatprep.subr.mxu0 0.0
        %3558 = vmatpush2.msra.mxu0 0.0
        %3559 = vmatprep.subr.mxu0 0.0
        %3560 = vmatpush2.msra.mxu0 0.0
        %3561 = vmatprep.subr.mxu0 0.0
        %3562 = vmatpush2.msra.mxu0 0.0
        %3563 = vmatprep.subr.mxu0 0.0
        %3564 = vmatpush2.msra.mxu0 0.0
        %3565 = vmatprep.subr.mxu0 0.0
        %3566 = vmatpush2.msra.mxu0 0.0
        %3567 = vmatprep.subr.mxu0 0.0
        %3568 = vmatpush2.msra.mxu0 0.0
        %3569 = vmatprep.subr.mxu0 0.0
        %3570 = vmatpush2.msra.mxu0 0.0
        %3571 = vmatprep.subr.mxu0 0.0
        %3572 = vmatpush2.msra.mxu0 0.0
        %3573 = vmatprep.mubr.f32.mxu0 0.0
        %3574 = vmatmul.mubr.f32.gmra.mxu0 %v3501
        %v3575 = vpop.f32.mrf.mxu0
        %v3576 = vadd.f32 %v3498, %v3575
        %v3577 = vpop.f32.mrf.mxu0
        %3578 = vmatprep.mubr.f32.mxu0 0.0
        %3579 = vmatmul.mubr.f32.gmra.mxu0 %v3504
        %v3580 = vpop.f32.mrf.mxu0
        %v3581 = vadd.f32 %v3498, %v3580
        %v3582 = vpop.f32.mrf.mxu0
        %3583 = vmatprep.mubr.f32.mxu0 0.0
        %3584 = vmatmul.mubr.f32.gmra.mxu0 %v3507
        %v3585 = vpop.f32.mrf.mxu0
        %v3586 = vadd.f32 %v3498, %v3585
        %v3587 = vpop.f32.mrf.mxu0
        %3588 = vdwg.mxu0
        %v3589 = vmul.f32 %v3576, %v3576
        %v3590 = vmul.f32 %v3581, %v3581
        %v3591 = vmul.f32 %v3586, %v3586
        %v3592 = vmul.f32 %v3576, %v3589
        %v3593 = vmul.f32 %v3581, %v3590
        %v3594 = vmul.f32 %v3586, %v3591
        %v3595 = vmul.f32 %v3592, 0.044715
        %v3596 = vmul.f32 %v3593, 0.044715
        %v3597 = vmul.f32 %v3594, 0.044715
        %v3598 = vadd.f32 %v3576, %v3595
        %v3599 = vadd.f32 %v3581, %v3596
        %v3600 = vadd.f32 %v3586, %v3597
        %v3601 = vmul.f32 %v3598, 0.7978846
        %v3602 = vmul.f32 %v3599, 0.7978846
        %v3603 = vmul.f32 %v3600, 0.7978846
        %v3604 = vtanh.pop %v3601
        %v3605 = vtanh.pop %v3602
        %v3606 = vtanh.pop %v3603
        %v3607 = vadd.f32 %v3604, 1.0
        %v3608 = vadd.f32 %v3605, 1.0
        %v3609 = vadd.f32 %v3606, 1.0
        %v3610 = vmul.f32 %v3607, 0.5
        %v3611 = vmul.f32 %v3608, 0.5
        %v3612 = vmul.f32 %v3609, 0.5
        %v3613 = vmul.f32 %v3576, %v3610
        %v3614 = vmul.f32 %v3581, %v3611
        %v3615 = vmul.f32 %v3586, %v3612
        %s3616 = scalar_lea.vmem %s11, 128
        %v3617 = vld [vmem:[%s3616] sm:$0xff]
        %v3618 = vld [vmem:[%s3616 + $0x8] sm:$0xff]
        %v3619 = vld [vmem:[%s3616 + $0x10] sm:$0xff]
        %v3620 = vld [vmem:[%s3616 + $0x18] sm:$0xff]
        %v3621 = vld [vmem:[%s3616 + $0x20] sm:$0xff]
        %v3622 = vld [vmem:[%s3616 + $0x28] sm:$0xff]
        %v3623 = vld [vmem:[%s3616 + $0x30] sm:$0xff]
        %v3624 = vld [vmem:[%s3616 + $0x38] sm:$0xff]
        %v3625 = vld [vmem:[%s3616 + $0x40] sm:$0xff]
        %v3626 = vld [vmem:[%s3616 + $0x48] sm:$0xff]
        %v3627 = vld [vmem:[%s3616 + $0x50] sm:$0xff]
        %v3628 = vld [vmem:[%s3616 + $0x58] sm:$0xff]
        %v3629 = vld [vmem:[%s3616 + $0x60] sm:$0xff]
        %v3630 = vld [vmem:[%s3616 + $0x68] sm:$0xff]
        %v3631 = vld [vmem:[%s3616 + $0x70] sm:$0xff]
        %v3632 = vld [vmem:[%s3616 + $0x78] sm:$0xff]
        %3633 = vmatprep.subr.mxu0 0.0
        %3634 = vmatpush1.msra.mxu0 %v3632
        %3635 = vmatprep.subr.mxu0 0.0
        %3636 = vmatpush1.msra.mxu0 %v3631
        %3637 = vmatprep.subr.mxu0 0.0
        %3638 = vmatpush1.msra.mxu0 %v3630
        %3639 = vmatprep.subr.mxu0 0.0
        %3640 = vmatpush1.msra.mxu0 %v3629
        %3641 = vmatprep.subr.mxu0 0.0
        %3642 = vmatpush1.msra.mxu0 %v3628
        %3643 = vmatprep.subr.mxu0 0.0
        %3644 = vmatpush1.msra.mxu0 %v3627
        %3645 = vmatprep.subr.mxu0 0.0
        %3646 = vmatpush1.msra.mxu0 %v3626
        %3647 = vmatprep.subr.mxu0 0.0
        %3648 = vmatpush1.msra.mxu0 %v3625
        %3649 = vmatprep.subr.mxu0 0.0
        %3650 = vmatpush1.msra.mxu0 %v3624
        %3651 = vmatprep.subr.mxu0 0.0
        %3652 = vmatpush1.msra.mxu0 %v3623
        %3653 = vmatprep.subr.mxu0 0.0
        %3654 = vmatpush1.msra.mxu0 %v3622
        %3655 = vmatprep.subr.mxu0 0.0
        %3656 = vmatpush1.msra.mxu0 %v3621
        %3657 = vmatprep.subr.mxu0 0.0
        %3658 = vmatpush1.msra.mxu0 %v3620
        %3659 = vmatprep.subr.mxu0 0.0
        %3660 = vmatpush1.msra.mxu0 %v3619
        %3661 = vmatprep.subr.mxu0 0.0
        %3662 = vmatpush1.msra.mxu0 %v3618
        %3663 = vmatprep.subr.mxu0 0.0
        %3664 = vmatpush1.msra.mxu0 %v3617
        %3665 = vmatprep.subr.mxu0 0.0
        %3666 = vmatpush2.msra.mxu0 0.0
        %3667 = vmatprep.subr.mxu0 0.0
        %3668 = vmatpush2.msra.mxu0 0.0
        %3669 = vmatprep.subr.mxu0 0.0
        %3670 = vmatpush2.msra.mxu0 0.0
        %3671 = vmatprep.subr.mxu0 0.0
        %3672 = vmatpush2.msra.mxu0 0.0
        %3673 = vmatprep.subr.mxu0 0.0
        %3674 = vmatpush2.msra.mxu0 0.0
        %3675 = vmatprep.subr.mxu0 0.0
        %3676 = vmatpush2.msra.mxu0 0.0
        %3677 = vmatprep.subr.mxu0 0.0
        %3678 = vmatpush2.msra.mxu0 0.0
        %3679 = vmatprep.subr.mxu0 0.0
        %3680 = vmatpush2.msra.mxu0 0.0
        %3681 = vmatprep.subr.mxu0 0.0
        %3682 = vmatpush2.msra.mxu0 0.0
        %3683 = vmatprep.subr.mxu0 0.0
        %3684 = vmatpush2.msra.mxu0 0.0
        %3685 = vmatprep.subr.mxu0 0.0
        %3686 = vmatpush2.msra.mxu0 0.0
        %3687 = vmatprep.subr.mxu0 0.0
        %3688 = vmatpush2.msra.mxu0 0.0
        %3689 = vmatprep.subr.mxu0 0.0
        %3690 = vmatpush2.msra.mxu0 0.0
        %3691 = vmatprep.subr.mxu0 0.0
        %3692 = vmatpush2.msra.mxu0 0.0
        %3693 = vmatprep.subr.mxu0 0.0
        %3694 = vmatpush2.msra.mxu0 0.0
        %3695 = vmatprep.subr.mxu0 0.0
        %3696 = vmatpush2.msra.mxu0 0.0
        %3697 = vmatprep.mubr.f32.mxu0 0.0
        %3698 = vmatmul.mubr.f32.gmra.mxu0 %v3613
        %v3699 = vpop.f32.mrf.mxu0
        %v3700 = vadd.f32 0.0, %v3699
        %v3701 = vpop.f32.mrf.mxu0
        %3702 = vmatprep.mubr.f32.mxu0 0.0
        %3703 = vmatmul.mubr.f32.gmra.mxu0 %v3614
        %v3704 = vpop.f32.mrf.mxu0
        %v3705 = vadd.f32 0.0, %v3704
        %v3706 = vpop.f32.mrf.mxu0
        %3707 = vmatprep.mubr.f32.mxu0 0.0
        %3708 = vmatmul.mubr.f32.gmra.mxu0 %v3615
        %v3709 = vpop.f32.mrf.mxu0
        %v3710 = vadd.f32 0.0, %v3709
        %v3711 = vpop.f32.mrf.mxu0
        %3712 = vdwg.mxu0
        %v3713 = vadd.f32 %v3431, %v3700
        %v3714 = vadd.f32 %v3432, %v3705
        %v3715 = vadd.f32 %v3433, %v3710
        %v3716 = vlaneseq
        %v3717 = vshrl.u32 %v3716, 7
        %v3718 = vsub.s32 0, %v3717
        %v3719 = vrot.slane %v2143, %v3718
        %v3720 = vadd.f32 %v3713, %v3719
        %v3721 = vadd.f32 %v3714, %v3719
        %v3722 = vadd.f32 %v3715, %v3719
        %vm3723 = vcmask 261121
        %v3724 = vsel %vm3723, %v3720, 0.0
        %3725 = vadd.xlane.f32.xlu0 %v3724
        %v3726 = vpop.xlane.xlu0 %3725
        %v3727 = vsel %vm546, %v3721, 0.0
        %3728 = vadd.xlane.f32.xlu0 %v3727
        %v3729 = vpop.xlane.xlu0 %3728
        %v3730 = vsel %vm560, %v3722, 0.0
        %3731 = vadd.xlane.f32.xlu0 %v3730
        %v3732 = vpop.xlane.xlu0 %3731
        %v3733 = vmul.f32 %v3726, %v564
        %v3734 = vmul.f32 %v3729, %v564
        %v3735 = vmul.f32 %v3732, %v564
        %v3736 = vsub.f32 %v3720, %v3733
        %v3737 = vsub.f32 %v3721, %v3734
        %v3738 = vsub.f32 %v3722, %v3735
        %v3739 = vmul.f32 %v3736, %v3736
        %v3740 = vmul.f32 %v3737, %v3737
        %v3741 = vmul.f32 %v3738, %v3738
        %v3742 = vsel %vm3723, %v3739, 0.0
        %3743 = vadd.xlane.f32.xlu0 %v3742
        %v3744 = vpop.xlane.xlu0 %3743
        %v3745 = vsel %vm546, %v3740, 0.0
        %3746 = vadd.xlane.f32.xlu0 %v3745
        %v3747 = vpop.xlane.xlu0 %3746
        %v3748 = vsel %vm560, %v3741, 0.0
        %3749 = vadd.xlane.f32.xlu0 %v3748
        %v3750 = vpop.xlane.xlu0 %3749
        %v3751 = vmul.f32 %v3744, %v564
        %v3752 = vmul.f32 %v3747, %v564
        %v3753 = vmul.f32 %v3750, %v564
        %v3754 = vadd.f32 %v3751, 1e-06
        %v3755 = vadd.f32 %v3752, 1e-06
        %v3756 = vadd.f32 %v3753, 1e-06
        %v3757 = vrsqrt.pop %v3754
        %v3758 = vrsqrt.pop %v3755
        %v3759 = vrsqrt.pop %v3756
        %v3760 = vmul.f32 %v3736, %v3757
        %v3761 = vmul.f32 %v3737, %v3758
        %v3762 = vmul.f32 %v3738, %v3759
        %v3763 = vlaneseq
        %v3764 = vshrl.u32 %v3763, 7
        %v3765 = vsub.s32 2, %v3764
        %v3766 = vrot.slane %v415, %v3765
        %v3767 = vmul.f32 %v3760, %v3766
        %v3768 = vmul.f32 %v3761, %v3766
        %v3769 = vmul.f32 %v3762, %v3766
        %v3770 = vlaneseq
        %v3771 = vshrl.u32 %v3770, 7
        %v3772 = vsub.s32 3, %v3771
        %v3773 = vrot.slane %v415, %v3772
        %v3774 = vadd.f32 %v3767, %v3773
        %v3775 = vadd.f32 %v3768, %v3773
        %v3776 = vadd.f32 %v3769, %v3773
        %3777 = vst.msk [vmem:[%s406 - $0x1] sm:$0xfe] %vm3723, %v3774
        %3778 = vst.msk [vmem:[%s406 + $0x7] sm:$0xff] %vm546, %v3775
        %3779 = vst.msk [vmem:[%s406 + $0xf] sm:$0x1] %vm560, %v3776
        %s3780 = sand.u32 %s291, 1
        %s3781 = scalar_lea.sflag [#allocation5], %s3780
        %s3782 = sand.u32 %s291, 1
        %s3783 = smul.addr %s3782, 16
        %s3784 = scalar_lea.vmem [#allocation4], %s3783
        // Predicated region
        $region69: #{encoder_forward.1} parent=67 // pred_check
          %p3785 = pneg %p301
        $region70: #{encoder_forward.1} parent=67 // pred_check_branch
          %3787 = sbr.rel (%p3785) target = $region72
        $region71: #{encoder_forward.1} parent=67 // pred_region
          %s3789 = ssub.s32 256, 256
          %3790 = vsyncadd %s3781, %s3789
          %s3791 = smul.addr %s26, 2
          %s3792 = smul.addr %s3791, 128
          %s3793 = scalar_lea.hbm %s12, %s3792
          %s3794 = sshll.u32 %s3784, 4
          %s3795 = int_to_ptr.vmem [resolvable:$true] %s3794
          %3800 = dma.vmem_to_hbm [thread:$0]  %s3795, 256, %s3793, %s3781, 128, 128, 8
        $region72: #{encoder_forward.1} parent=67 // pred_fallthru
          _
      $region68: #{encoder_forward.1} parent=5 // pred_fallthru
        _
      %p3801 = scmp.le.s32.totalorder 2, %s21
      // Predicated region
      $region73: #{encoder_forward.1} parent=5 // pred_check
        %p3802 = pneg %p3801
      $region74: #{encoder_forward.1} parent=5 // pred_check_branch
        %3804 = sbr.rel (%p3802) target = $region76
      $region75: #{encoder_forward.1} parent=5 // pred_region
        %s3805 = ssub.s32 %s21, 2
        // Predicated region
        $region77: #{encoder_forward.1} parent=75 // pred_check
          %p3806 = pneg %p307
        $region78: #{encoder_forward.1} parent=75 // pred_check_branch
          %3808 = sbr.rel (%p3806) target = $region80
        $region79: #{encoder_forward.1} parent=75 // pred_region
          %s3809 = sand.u32 %s292, 1
          %s3810 = scalar_lea.sflag [#allocation5], %s3809
          %s3811 = sand.u32 %s292, 1
          %s3812 = smul.addr %s3811, 16
          %s3813 = scalar_lea.vmem [#allocation4], %s3812
          %3814 = dma.done %s3810, 256
        $region80: #{encoder_forward.1} parent=75 // pred_fallthru
          _
      $region76: #{encoder_forward.1} parent=5 // pred_fallthru
        _
    $region6: #{encoder_forward.1} parent=1 // loop_footer
      %s25 = sadd.s32 1, %s21
    $region7: #{encoder_forward.1} parent=1 // loop_footer_branch
      %20 = sbr.rel target = $region3
    $region8: #{encoder_forward.1} parent=1 // loop_exit
      _
    %3815 = vsyncpa [#allocation5], 1
    %s3816 = scalar_lea.sflag [#allocation5], 1
    %3817 = vsyncpa %s3816, 1

</llo_original>
